<compile_context>
chip_gen: v5e
topology: v5e:2x2
jax: 0.10.0
libtpu: 0.0.40
codegen_flags: <defaults>
</compile_context>

<pallas_src>
import jax
import jax.numpy as jnp
import numpy as np
from jax.experimental import pallas as pl
from jax.experimental.pallas import tpu as pltpu

LN_EPS = 1e-5


def _attention_kernel(xq_ref, xkv_ref, lnw_ref, lnb_ref,
                      wq_ref, wk_ref, wv_ref, wout_ref, bout_ref, o_ref):
    f32 = jnp.float32
    heads, _, _ = wq_ref.shape
    tq = xq_ref.shape[0]
    n_kv = xkv_ref.shape[0]
    cdt = wq_ref.dtype                     # bf16 compute dtype for the MXU

    ln_w = lnw_ref[...]                    # (1, D)
    ln_b = lnb_ref[...]                    # (1, D)

    def layernorm(x):
        x = x.astype(f32)
        mean = jnp.mean(x, axis=-1, keepdims=True)
        var = jnp.mean((x - mean) ** 2, axis=-1, keepdims=True)
        return (x - mean) * jax.lax.rsqrt(var + LN_EPS) * ln_w + ln_b

    # LayerNorm in f32, then cast once to bf16 and broadcast across heads so
    # every projection is a single batched (over heads) MXU matmul.
    xq = layernorm(xq_ref[...]).astype(cdt)            # (TQ, D)
    xkv = layernorm(xkv_ref[...]).astype(cdt)          # (N,  D)
    xq_b = jnp.broadcast_to(xq, (heads,) + xq.shape)   # (H, TQ, D)
    xkv_b = jnp.broadcast_to(xkv, (heads,) + xkv.shape)  # (H, N, D)

    # Per-head projections (softmax scale is pre-folded into Wq).
    q = jnp.einsum('hqD,hDd->hqd', xq_b, wq_ref[...],
                   preferred_element_type=f32)         # (H, TQ, d)
    k = jnp.einsum('hkD,hDd->hkd', xkv_b, wk_ref[...],
                   preferred_element_type=f32)         # (H, N,  d)
    v = jnp.einsum('hkD,hDd->hkd', xkv_b, wv_ref[...],
                   preferred_element_type=f32)         # (H, N,  d)

    # Scaled dot-product attention, batched over heads.
    dots = jnp.einsum('hqd,hkd->hqk', q.astype(cdt), k.astype(cdt),
                      preferred_element_type=f32)      # (H, TQ, N)
    dots = dots - jnp.max(dots, axis=-1, keepdims=True)
    e = jnp.exp(dots)
    p = e * pl.reciprocal(jnp.sum(e, axis=-1, keepdims=True), approx=True)

    ctx = jnp.einsum('hqk,hkd->hqd', p.astype(cdt), v.astype(cdt),
                     preferred_element_type=f32)       # (H, TQ, d)

    # Fused head-merge + output projection: sum_h ctx_h @ W_out[h].
    proj = jnp.einsum('hqd,hdD->hqD', ctx.astype(cdt), wout_ref[...],
                      preferred_element_type=f32)      # (H, TQ, D)
    out = jnp.sum(proj, axis=0) + bout_ref[...]        # (TQ, D)

    o_ref[...] = out.astype(o_ref.dtype)               # dropout p=0 => identity


def attention_forward(x, ln_w, ln_b, w_qkv, w_out, b_out, *, heads, dim_head,
                      q_block=128, compute_dtype=jnp.bfloat16):
    """x: (B, N, D) float32.  Weights stored input-dim x output-dim."""
    B, N, D = x.shape
    inner = heads * dim_head
    assert w_qkv.shape == (D, 3 * inner) and w_out.shape == (inner, D)
    scale = dim_head ** -0.5

    tq = min(q_block, N)
    assert N % tq == 0, "sequence length must be divisible by the query tile"
    n_q = N // tq

    # One-time host-side weight re-layout: head-major blocks, bf16, scale folded.
    wq, wk, wv = jnp.split(w_qkv, 3, axis=-1)                       # (D, inner)
    def to_heads(w):
        return w.reshape(D, heads, dim_head).transpose(1, 0, 2)     # (H, D, d)
    wq_h = (to_heads(wq) * scale).astype(compute_dtype)
    wk_h = to_heads(wk).astype(compute_dtype)
    wv_h = to_heads(wv).astype(compute_dtype)
    wout_h = w_out.reshape(heads, dim_head, D).astype(compute_dtype)  # (H, d, D)

    const3 = lambda b, qi: (0, 0, 0)
    const2 = lambda b, qi: (0, 0)

    return pl.pallas_call(
        _attention_kernel,
        out_shape=jax.ShapeDtypeStruct((B, N, D), x.dtype),
        grid_spec=pltpu.PrefetchScalarGridSpec(
            num_scalar_prefetch=0,
            grid=(B, n_q),
            in_specs=[
                pl.BlockSpec((None, tq, D), lambda b, qi: (b, qi, 0)),  # x (q rows)
                pl.BlockSpec((None, N, D), lambda b, qi: (b, 0, 0)),    # x (k/v rows)
                pl.BlockSpec((1, D), const2),                           # LN weight
                pl.BlockSpec((1, D), const2),                           # LN bias
                pl.BlockSpec((heads, D, dim_head), const3),             # Wq (scaled)
                pl.BlockSpec((heads, D, dim_head), const3),             # Wk
                pl.BlockSpec((heads, D, dim_head), const3),             # Wv
                pl.BlockSpec((heads, dim_head, D), const3),             # W_out
                pl.BlockSpec((1, D), const2),                           # b_out
            ],
            out_specs=pl.BlockSpec((None, tq, D), lambda b, qi: (b, qi, 0)),
        ),
        compiler_params=pltpu.CompilerParams(
            dimension_semantics=("parallel", "parallel"),
            vmem_limit_bytes=48 * 1024 * 1024,   # headroom within v7x's 64 MiB/TC
        ),
    )(x, x, ln_w, ln_b, wq_h, wk_h, wv_h, wout_h, b_out)


def attention_reference(x, ln_w, ln_b, w_qkv, w_out, b_out, *, heads, dim_head):
    """Pure-JAX f32 reference (mirrors the PyTorch forward)."""
    B, N, D = x.shape
    inner = heads * dim_head
    scale = dim_head ** -0.5

    mean = jnp.mean(x, axis=-1, keepdims=True)
    var = jnp.mean((x - mean) ** 2, axis=-1, keepdims=True)
    xn = (x - mean) / jnp.sqrt(var + LN_EPS) * ln_w[0] + ln_b[0]

    qkv = xn @ w_qkv                                   # (B, N, 3*inner)
    q, k, v = jnp.split(qkv, 3, axis=-1)
    def to_heads(t):
        return t.reshape(B, N, heads, dim_head).transpose(0, 2, 1, 3)
    q, k, v = map(to_heads, (q, k, v))                 # (B, H, N, d)
    dots = jnp.einsum("bhnd,bhmd->bhnm", q, k) * scale
    attn = jax.nn.softmax(dots, axis=-1)
    out = jnp.einsum("bhnm,bhmd->bhnd", attn, v)
    out = out.transpose(0, 2, 1, 3).reshape(B, N, inner)
    return out @ w_out + b_out[0]


if __name__ == "__main__":
    # Small but MXU/lane-friendly shapes (D multiple of 128, N multiple of 8).
    B, N, D = 2, 64, 128
    HEADS, DIM_HEAD = 4, 64
    INNER = HEADS * DIM_HEAD

    key = jax.random.PRNGKey(0)
    kx, kqkv, kout, kb = jax.random.split(key, 4)

    x = jax.random.normal(kx, (B, N, D), dtype=jnp.float32)

    # LayerNorm params (PyTorch defaults: weight=1, bias=0).
    ln_w = jnp.ones((1, D), dtype=jnp.float32)
    ln_b = jnp.zeros((1, D), dtype=jnp.float32)

    # Linear weights (input-dim x output-dim), deterministic init.
    w_qkv = jax.random.normal(kqkv, (D, 3 * INNER), dtype=jnp.float32) * (D ** -0.5)
    w_out = jax.random.normal(kout, (INNER, D), dtype=jnp.float32) * (INNER ** -0.5)
    b_out = jax.random.normal(kb, (1, D), dtype=jnp.float32) * 0.02

    out = attention_forward(x, ln_w, ln_b, w_qkv, w_out, b_out,
                            heads=HEADS, dim_head=DIM_HEAD)
    out = jax.block_until_ready(out)

    ref = attention_reference(x, ln_w, ln_b, w_qkv, w_out, b_out,
                              heads=HEADS, dim_head=DIM_HEAD)
    # Tolerance reflects bf16 MXU operands (f32 accumulation) vs the f32 reference.
    np.testing.assert_allclose(np.asarray(out), np.asarray(ref),
                               rtol=2e-2, atol=2e-2)
    print("KERNEL_OK")
</pallas_src>

<mosaic_0001>
module attributes {stable_mosaic.version = 11 : i64} {
  func.func @_attention_kernel(%arg0: i32, %arg1: i32, %arg2: memref<1x64x128xf32, #tpu.memory_space<vmem>>, %arg3: memref<1x64x128xf32, #tpu.memory_space<vmem>>, %arg4: memref<1x128xf32, #tpu.memory_space<vmem>>, %arg5: memref<1x128xf32, #tpu.memory_space<vmem>>, %arg6: memref<4x128x64xbf16, #tpu.memory_space<vmem>>, %arg7: memref<4x128x64xbf16, #tpu.memory_space<vmem>>, %arg8: memref<4x128x64xbf16, #tpu.memory_space<vmem>>, %arg9: memref<4x64x128xbf16, #tpu.memory_space<vmem>>, %arg10: memref<1x128xf32, #tpu.memory_space<vmem>>, %arg11: memref<1x64x128xf32, #tpu.memory_space<vmem>>) attributes {dimension_semantics = [#tpu.dimension_semantics<parallel>, #tpu.dimension_semantics<parallel>], iteration_bounds = array<i64: 2, 1>, scalar_prefetch = 0 : i64, scratch_operands = 0 : i64, tpu.core_type = #tpu.core_type<tc>, window_params = [{transform_indices = @transform_0, window_bounds = array<i64: 1, 64, 128>}, {transform_indices = @transform_1, window_bounds = array<i64: 1, 64, 128>}, {pipeline_mode = #tpu.pipeline_mode<synchronous>, transform_indices = @transform_2, window_bounds = array<i64: 1, 128>}, {pipeline_mode = #tpu.pipeline_mode<synchronous>, transform_indices = @transform_3, window_bounds = array<i64: 1, 128>}, {pipeline_mode = #tpu.pipeline_mode<synchronous>, transform_indices = @transform_4, window_bounds = array<i64: 4, 128, 64>}, {pipeline_mode = #tpu.pipeline_mode<synchronous>, transform_indices = @transform_5, window_bounds = array<i64: 4, 128, 64>}, {pipeline_mode = #tpu.pipeline_mode<synchronous>, transform_indices = @transform_6, window_bounds = array<i64: 4, 128, 64>}, {pipeline_mode = #tpu.pipeline_mode<synchronous>, transform_indices = @transform_7, window_bounds = array<i64: 4, 64, 128>}, {pipeline_mode = #tpu.pipeline_mode<synchronous>, transform_indices = @transform_8, window_bounds = array<i64: 1, 128>}, {transform_indices = @transform_9, window_bounds = array<i64: 1, 64, 128>}]} {
    %c0 = arith.constant 0 : index
    %c0_0 = arith.constant 0 : index
    %0 = vector.load %arg4[%c0, %c0_0] : memref<1x128xf32, #tpu.memory_space<vmem>>, vector<1x128xf32>
    %c0_1 = arith.constant 0 : index
    %c0_2 = arith.constant 0 : index
    %1 = vector.load %arg5[%c0_1, %c0_2] : memref<1x128xf32, #tpu.memory_space<vmem>>, vector<1x128xf32>
    %c0_3 = arith.constant 0 : index
    %c0_4 = arith.constant 0 : index
    %c0_5 = arith.constant 0 : index
    %2 = vector.load %arg2[%c0_3, %c0_4, %c0_5] : memref<1x64x128xf32, #tpu.memory_space<vmem>>, vector<1x64x128xf32>
    %3 = vector.shape_cast %2 : vector<1x64x128xf32> to vector<64x128xf32>
    %cst = arith.constant dense<0.000000e+00> : vector<64xf32>
    %4 = vector.multi_reduction <add>, %3, %cst [1] : vector<64x128xf32> to vector<64xf32>
    %5 = vector.shape_cast %4 : vector<64xf32> to vector<64x1xf32>
    %cst_6 = arith.constant 1.280000e+02 : f32
    %6 = vector.broadcast %cst_6 : f32 to vector<64x1xf32>
    %7 = arith.divf %5, %6 : vector<64x1xf32>
    %8 = vector.broadcast %7 : vector<64x1xf32> to vector<64x128xf32>
    %9 = arith.subf %3, %8 : vector<64x128xf32>
    %10 = arith.mulf %9, %9 : vector<64x128xf32>
    %cst_7 = arith.constant dense<0.000000e+00> : vector<64xf32>
    %11 = vector.multi_reduction <add>, %10, %cst_7 [1] : vector<64x128xf32> to vector<64xf32>
    %12 = vector.shape_cast %11 : vector<64xf32> to vector<64x1xf32>
    %cst_8 = arith.constant 1.280000e+02 : f32
    %13 = vector.broadcast %cst_8 : f32 to vector<64x1xf32>
    %14 = arith.divf %12, %13 : vector<64x1xf32>
    %15 = vector.broadcast %7 : vector<64x1xf32> to vector<64x128xf32>
    %16 = arith.subf %3, %15 : vector<64x128xf32>
    %cst_9 = arith.constant 9.99999974E-6 : f32
    %17 = vector.broadcast %cst_9 : f32 to vector<64x1xf32>
    %18 = arith.addf %14, %17 : vector<64x1xf32>
    %19 = math.rsqrt %18 : vector<64x1xf32>
    %20 = vector.broadcast %19 : vector<64x1xf32> to vector<64x128xf32>
    %21 = arith.mulf %16, %20 : vector<64x128xf32>
    %22 = vector.broadcast %0 : vector<1x128xf32> to vector<64x128xf32>
    %23 = arith.mulf %21, %22 : vector<64x128xf32>
    %24 = vector.broadcast %1 : vector<1x128xf32> to vector<64x128xf32>
    %25 = arith.addf %23, %24 : vector<64x128xf32>
    %26 = arith.truncf %25 : vector<64x128xf32> to vector<64x128xbf16>
    %c0_10 = arith.constant 0 : index
    %c0_11 = arith.constant 0 : index
    %c0_12 = arith.constant 0 : index
    %27 = vector.load %arg3[%c0_10, %c0_11, %c0_12] : memref<1x64x128xf32, #tpu.memory_space<vmem>>, vector<1x64x128xf32>
    %28 = vector.shape_cast %27 : vector<1x64x128xf32> to vector<64x128xf32>
    %cst_13 = arith.constant dense<0.000000e+00> : vector<64xf32>
    %29 = vector.multi_reduction <add>, %28, %cst_13 [1] : vector<64x128xf32> to vector<64xf32>
    %30 = vector.shape_cast %29 : vector<64xf32> to vector<64x1xf32>
    %cst_14 = arith.constant 1.280000e+02 : f32
    %31 = vector.broadcast %cst_14 : f32 to vector<64x1xf32>
    %32 = arith.divf %30, %31 : vector<64x1xf32>
    %33 = vector.broadcast %32 : vector<64x1xf32> to vector<64x128xf32>
    %34 = arith.subf %28, %33 : vector<64x128xf32>
    %35 = arith.mulf %34, %34 : vector<64x128xf32>
    %cst_15 = arith.constant dense<0.000000e+00> : vector<64xf32>
    %36 = vector.multi_reduction <add>, %35, %cst_15 [1] : vector<64x128xf32> to vector<64xf32>
    %37 = vector.shape_cast %36 : vector<64xf32> to vector<64x1xf32>
    %cst_16 = arith.constant 1.280000e+02 : f32
    %38 = vector.broadcast %cst_16 : f32 to vector<64x1xf32>
    %39 = arith.divf %37, %38 : vector<64x1xf32>
    %40 = vector.broadcast %32 : vector<64x1xf32> to vector<64x128xf32>
    %41 = arith.subf %28, %40 : vector<64x128xf32>
    %cst_17 = arith.constant 9.99999974E-6 : f32
    %42 = vector.broadcast %cst_17 : f32 to vector<64x1xf32>
    %43 = arith.addf %39, %42 : vector<64x1xf32>
    %44 = math.rsqrt %43 : vector<64x1xf32>
    %45 = vector.broadcast %44 : vector<64x1xf32> to vector<64x128xf32>
    %46 = arith.mulf %41, %45 : vector<64x128xf32>
    %47 = vector.broadcast %0 : vector<1x128xf32> to vector<64x128xf32>
    %48 = arith.mulf %46, %47 : vector<64x128xf32>
    %49 = vector.broadcast %1 : vector<1x128xf32> to vector<64x128xf32>
    %50 = arith.addf %48, %49 : vector<64x128xf32>
    %51 = arith.truncf %50 : vector<64x128xf32> to vector<64x128xbf16>
    %52 = vector.shape_cast %26 : vector<64x128xbf16> to vector<1x64x128xbf16>
    %53 = vector.broadcast %52 : vector<1x64x128xbf16> to vector<4x64x128xbf16>
    %54 = vector.shape_cast %51 : vector<64x128xbf16> to vector<1x64x128xbf16>
    %55 = vector.broadcast %54 : vector<1x64x128xbf16> to vector<4x64x128xbf16>
    %c0_18 = arith.constant 0 : index
    %c0_19 = arith.constant 0 : index
    %c0_20 = arith.constant 0 : index
    %56 = vector.load %arg6[%c0_18, %c0_19, %c0_20] : memref<4x128x64xbf16, #tpu.memory_space<vmem>>, vector<4x128x64xbf16>
    "tpu.trace_start"() <{level = 10 : i32, message = "hqD,hDd->hqd"}> : () -> ()
    %cst_21 = arith.constant dense<0.000000e+00> : vector<4x64x64xf32>
    %57 = tpu.matmul %53, %56, %cst_21 {dimension_numbers = #tpu.dot_dimension_numbers<[2], [1], [1], [2], [0, 0, 0, 1, 1, 2], [0], [0]>} : vector<4x64x128xbf16>, vector<4x128x64xbf16>, vector<4x64x64xf32> -> vector<4x64x64xf32>
    "tpu.trace_stop"() : () -> ()
    %c0_22 = arith.constant 0 : index
    %c0_23 = arith.constant 0 : index
    %c0_24 = arith.constant 0 : index
    %58 = vector.load %arg7[%c0_22, %c0_23, %c0_24] : memref<4x128x64xbf16, #tpu.memory_space<vmem>>, vector<4x128x64xbf16>
    "tpu.trace_start"() <{level = 10 : i32, message = "hkD,hDd->hkd"}> : () -> ()
    %cst_25 = arith.constant dense<0.000000e+00> : vector<4x64x64xf32>
    %59 = tpu.matmul %55, %58, %cst_25 {dimension_numbers = #tpu.dot_dimension_numbers<[2], [1], [1], [2], [0, 0, 0, 1, 1, 2], [0], [0]>} : vector<4x64x128xbf16>, vector<4x128x64xbf16>, vector<4x64x64xf32> -> vector<4x64x64xf32>
    "tpu.trace_stop"() : () -> ()
    %c0_26 = arith.constant 0 : index
    %c0_27 = arith.constant 0 : index
    %c0_28 = arith.constant 0 : index
    %60 = vector.load %arg8[%c0_26, %c0_27, %c0_28] : memref<4x128x64xbf16, #tpu.memory_space<vmem>>, vector<4x128x64xbf16>
    "tpu.trace_start"() <{level = 10 : i32, message = "hkD,hDd->hkd"}> : () -> ()
    %cst_29 = arith.constant dense<0.000000e+00> : vector<4x64x64xf32>
    %61 = tpu.matmul %55, %60, %cst_29 {dimension_numbers = #tpu.dot_dimension_numbers<[2], [1], [1], [2], [0, 0, 0, 1, 1, 2], [0], [0]>} : vector<4x64x128xbf16>, vector<4x128x64xbf16>, vector<4x64x64xf32> -> vector<4x64x64xf32>
    "tpu.trace_stop"() : () -> ()
    %62 = arith.truncf %57 : vector<4x64x64xf32> to vector<4x64x64xbf16>
    %63 = arith.truncf %59 : vector<4x64x64xf32> to vector<4x64x64xbf16>
    "tpu.trace_start"() <{level = 10 : i32, message = "hqd,hkd->hqk"}> : () -> ()
    %cst_30 = arith.constant dense<0.000000e+00> : vector<4x64x64xf32>
    %64 = tpu.matmul %62, %63, %cst_30 {dimension_numbers = #tpu.dot_dimension_numbers<[2], [2], [1], [1], [0, 0, 0, 1, 1, 1], [0], [0]>} : vector<4x64x64xbf16>, vector<4x64x64xbf16>, vector<4x64x64xf32> -> vector<4x64x64xf32>
    "tpu.trace_stop"() : () -> ()
    %cst_31 = arith.constant dense<0xFF800000> : vector<4x64xf32>
    %65 = vector.multi_reduction <maximumf>, %64, %cst_31 [2] : vector<4x64x64xf32> to vector<4x64xf32>
    %66 = vector.shape_cast %65 : vector<4x64xf32> to vector<4x64x1xf32>
    %67 = vector.broadcast %66 : vector<4x64x1xf32> to vector<4x64x64xf32>
    %68 = arith.subf %64, %67 : vector<4x64x64xf32>
    %69 = math.exp %68 : vector<4x64x64xf32>
    %cst_32 = arith.constant dense<0.000000e+00> : vector<4x64xf32>
    %70 = vector.multi_reduction <add>, %69, %cst_32 [2] : vector<4x64x64xf32> to vector<4x64xf32>
    %71 = vector.shape_cast %70 : vector<4x64xf32> to vector<4x64x1xf32>
    %72 = tpu.reciprocal %71 {approx = true} : vector<4x64x1xf32> -> vector<4x64x1xf32>
    %73 = vector.broadcast %72 : vector<4x64x1xf32> to vector<4x64x64xf32>
    %74 = arith.mulf %69, %73 : vector<4x64x64xf32>
    %75 = arith.truncf %74 : vector<4x64x64xf32> to vector<4x64x64xbf16>
    %76 = arith.truncf %61 : vector<4x64x64xf32> to vector<4x64x64xbf16>
    "tpu.trace_start"() <{level = 10 : i32, message = "hqk,hkd->hqd"}> : () -> ()
    %cst_33 = arith.constant dense<0.000000e+00> : vector<4x64x64xf32>
    %77 = tpu.matmul %75, %76, %cst_33 {dimension_numbers = #tpu.dot_dimension_numbers<[2], [1], [1], [2], [0, 0, 0, 1, 1, 2], [0], [0]>} : vector<4x64x64xbf16>, vector<4x64x64xbf16>, vector<4x64x64xf32> -> vector<4x64x64xf32>
    "tpu.trace_stop"() : () -> ()
    %78 = arith.truncf %77 : vector<4x64x64xf32> to vector<4x64x64xbf16>
    %c0_34 = arith.constant 0 : index
    %c0_35 = arith.constant 0 : index
    %c0_36 = arith.constant 0 : index
    %79 = vector.load %arg9[%c0_34, %c0_35, %c0_36] : memref<4x64x128xbf16, #tpu.memory_space<vmem>>, vector<4x64x128xbf16>
    "tpu.trace_start"() <{level = 10 : i32, message = "hqd,hdD->hqD"}> : () -> ()
    %cst_37 = arith.constant dense<0.000000e+00> : vector<4x64x128xf32>
    %80 = tpu.matmul %78, %79, %cst_37 {dimension_numbers = #tpu.dot_dimension_numbers<[2], [1], [1], [2], [0, 0, 0, 1, 1, 2], [0], [0]>} : vector<4x64x64xbf16>, vector<4x64x128xbf16>, vector<4x64x128xf32> -> vector<4x64x128xf32>
    "tpu.trace_stop"() : () -> ()
    %cst_38 = arith.constant dense<0.000000e+00> : vector<64x128xf32>
    %81 = vector.multi_reduction <add>, %80, %cst_38 [0] : vector<4x64x128xf32> to vector<64x128xf32>
    %c0_39 = arith.constant 0 : index
    %c0_40 = arith.constant 0 : index
    %82 = vector.load %arg10[%c0_39, %c0_40] : memref<1x128xf32, #tpu.memory_space<vmem>>, vector<1x128xf32>
    %83 = vector.broadcast %82 : vector<1x128xf32> to vector<64x128xf32>
    %84 = arith.addf %81, %83 : vector<64x128xf32>
    %c0_41 = arith.constant 0 : index
    %c0_42 = arith.constant 0 : index
    %c0_43 = arith.constant 0 : index
    %85 = vector.load %arg11[%c0_41, %c0_42, %c0_43] : memref<1x64x128xf32, #tpu.memory_space<vmem>>, vector<1x64x128xf32>
    %86 = vector.shape_cast %85 : vector<1x64x128xf32> to vector<64x128xf32>
    %87 = vector.shape_cast %84 : vector<64x128xf32> to vector<1x64x128xf32>
    tpu.vector_store %arg11[%c0_41, %c0_42, %c0_43], %87 {strides = array<i32>} : memref<1x64x128xf32, #tpu.memory_space<vmem>>, vector<1x64x128xf32>,
    return
  }
  func.func @transform_0(%arg0: i32, %arg1: i32) -> (i32, i32, i32) {
    %c0_i32 = arith.constant 0 : i32
    %c0_i32_0 = arith.constant 0 : i32
    return %arg0, %arg1, %c0_i32 : i32, i32, i32
  }
  func.func @transform_1(%arg0: i32, %arg1: i32) -> (i32, i32, i32) {
    %c0_i32 = arith.constant 0 : i32
    %c0_i32_0 = arith.constant 0 : i32
    %c0_i32_1 = arith.constant 0 : i32
    return %arg0, %c0_i32, %c0_i32_0 : i32, i32, i32
  }
  func.func @transform_2(%arg0: i32, %arg1: i32) -> (i32, i32) {
    %c0_i32 = arith.constant 0 : i32
    %c0_i32_0 = arith.constant 0 : i32
    %c0_i32_1 = arith.constant 0 : i32
    return %c0_i32, %c0_i32_0 : i32, i32
  }
  func.func @transform_3(%arg0: i32, %arg1: i32) -> (i32, i32) {
    %c0_i32 = arith.constant 0 : i32
    %c0_i32_0 = arith.constant 0 : i32
    %c0_i32_1 = arith.constant 0 : i32
    return %c0_i32, %c0_i32_0 : i32, i32
  }
  func.func @transform_4(%arg0: i32, %arg1: i32) -> (i32, i32, i32) {
    %c0_i32 = arith.constant 0 : i32
    %c0_i32_0 = arith.constant 0 : i32
    %c0_i32_1 = arith.constant 0 : i32
    %c0_i32_2 = arith.constant 0 : i32
    return %c0_i32, %c0_i32_0, %c0_i32_1 : i32, i32, i32
  }
  func.func @transform_5(%arg0: i32, %arg1: i32) -> (i32, i32, i32) {
    %c0_i32 = arith.constant 0 : i32
    %c0_i32_0 = arith.constant 0 : i32
    %c0_i32_1 = arith.constant 0 : i32
    %c0_i32_2 = arith.constant 0 : i32
    return %c0_i32, %c0_i32_0, %c0_i32_1 : i32, i32, i32
  }
  func.func @transform_6(%arg0: i32, %arg1: i32) -> (i32, i32, i32) {
    %c0_i32 = arith.constant 0 : i32
    %c0_i32_0 = arith.constant 0 : i32
    %c0_i32_1 = arith.constant 0 : i32
    %c0_i32_2 = arith.constant 0 : i32
    return %c0_i32, %c0_i32_0, %c0_i32_1 : i32, i32, i32
  }
  func.func @transform_7(%arg0: i32, %arg1: i32) -> (i32, i32, i32) {
    %c0_i32 = arith.constant 0 : i32
    %c0_i32_0 = arith.constant 0 : i32
    %c0_i32_1 = arith.constant 0 : i32
    %c0_i32_2 = arith.constant 0 : i32
    return %c0_i32, %c0_i32_0, %c0_i32_1 : i32, i32, i32
  }
  func.func @transform_8(%arg0: i32, %arg1: i32) -> (i32, i32) {
    %c0_i32 = arith.constant 0 : i32
    %c0_i32_0 = arith.constant 0 : i32
    %c0_i32_1 = arith.constant 0 : i32
    return %c0_i32, %c0_i32_0 : i32, i32
  }
  func.func @transform_9(%arg0: i32, %arg1: i32) -> (i32, i32, i32) {
    %c0_i32 = arith.constant 0 : i32
    %c0_i32_0 = arith.constant 0 : i32
    return %arg0, %arg1, %c0_i32 : i32, i32, i32
  }
}

</mosaic_0001>

<llo_original>
// kernel: tpu_custom_call.1
$region0: #{tpu_custom_call.1}
  #allocation0 [shape = 'u32[]', space=smem, size = 0x4, offset = 0x4, fixed_abs, tag = 'smem constant byte address 0x4 - core index']
  #allocation1 [shape = 'u32[72,128]{1,0:T(1,128)}', space=vmem, size = 0x9000, scoped, tag = 'internal scratch']
  %s0 = inlined_call_operand.vmem [shape: f32[2,64,128], index: 0, kind: input, shape index: {}]
  %s1 = inlined_call_operand.vmem [shape: f32[2,64,128], index: 1, kind: input, shape index: {}]
  %s2 = inlined_call_operand.vmem [shape: f32[1,128], index: 2, kind: input, shape index: {}]
  %s3 = inlined_call_operand.vmem [shape: f32[1,128], index: 3, kind: input, shape index: {}]
  %s4 = inlined_call_operand.vmem [shape: bf16[4,128,64], index: 4, kind: input, shape index: {}]
  %s5 = inlined_call_operand.vmem [shape: bf16[4,128,64], index: 5, kind: input, shape index: {}]
  %s6 = inlined_call_operand.vmem [shape: bf16[4,128,64], index: 6, kind: input, shape index: {}]
  %s7 = inlined_call_operand.vmem [shape: bf16[4,64,128], index: 7, kind: input, shape index: {}]
  %s8 = inlined_call_operand.vmem [shape: f32[1,128], index: 8, kind: input, shape index: {}]
  %s9 = inlined_call_operand.hbm [shape: f32[2,64,128], index: 9, kind: output, shape index: {}]
  %s10 = sld [smem:[#allocation0]]
  $region69: #{tpu_custom_call.1} parent=0
    _
  %s12 = ssub.s32 1, %s10
  %s13 = scalar_select 0, %s12, %s10
  $region1: #{tpu_custom_call.1} parent=0
    #allocation2 [shape = 'u8[65536]{0}', space=vmem, size = 0x10000, scoped, tag = 'output window, operand 0']
    #allocation3 [shape = 's32[2]{0}', space=sflag, size = 0x8, scoped, tag = 'scoped memory for tpu_custom_call.1']
    %14 = vsyncpa [#allocation3], 0
    %s15 = scalar_lea.sflag [#allocation3], 1
    %16 = vsyncpa %s15, 0
    loop: start=0, step=1, limit=4
    $region2: #{tpu_custom_call.1} parent=1 // loop_pre_header
      _
    $region3: #{tpu_custom_call.1} parent=1 // loop_header
      %s18 = sphi 0, %s22
      %p19 = scmp.ge.s32.totalorder %s18, 4
      %s25 = sphi 0, %s37
      %s26 = sphi 0, %s33
      %s27 = sphi 0, %s25
      %s28 = sphi 0, %s26
      %s29 = sphi 0, %s27
      %s30 = sphi 0, %s28
      %s42 = sphi 0, %s44
      %s45 = sphi 0, %s42
      %s46 = sphi 0, %s45
      %s62 = sphi 0, %s46
      %s68 = sphi 0, %s70
      %s71 = sphi 0, %s68
      %s72 = sphi 0, %s71
      %s88 = sphi 0, %s72
      %s92 = sphi 0, %s92
      %s94 = sphi 0, %s92
      %s95 = sphi 0, %s94
      %s109 = sphi 0, %s95
      %s113 = sphi 0, %s113
      %s115 = sphi 0, %s113
      %s116 = sphi 0, %s115
      %s130 = sphi 0, %s116
      %s134 = sphi 0, %s134
      %s136 = sphi 0, %s134
      %s137 = sphi 0, %s136
      %s151 = sphi 0, %s137
      %s155 = sphi 0, %s155
      %s157 = sphi 0, %s155
      %s158 = sphi 0, %s157
      %s172 = sphi 0, %s158
      %s176 = sphi 0, %s176
      %s178 = sphi 0, %s176
      %s179 = sphi 0, %s178
      %s193 = sphi 0, %s179
      %s197 = sphi 0, %s197
      %s199 = sphi 0, %s197
      %s200 = sphi 0, %s199
      %s214 = sphi 0, %s200
      %s218 = sphi 0, %s218
      %s220 = sphi 0, %s218
      %s221 = sphi 0, %s220
      %s235 = sphi 0, %s221
      %s243 = sphi 0, %s245
      %s246 = sphi 0, %s243
      %s247 = sphi 0, %s246
      %s263 = sphi 0, %s247
    $region4: #{tpu_custom_call.1} parent=1 // loop_header_branch
      %21 = sbr.rel (%p19) target = $region8
    $region5: #{tpu_custom_call.1} parent=1 // loop_body
      %s23 = ssub.s32 %s18, 1
      %s24 = ssub.s32 %s18, 2
      %s31 = sadd.s32 1, %s26
      %p32 = scmp.ge.s32.totalorder %s31, 1
      %s33 = scalar_select %p32, 0, %s31
      %s34 = sadd.s32 1, %s25
      %s35 = scalar_select %p32, %s34, %s25
      %p36 = scmp.ge.s32.totalorder %s35, 2
      %s37 = scalar_select %p36, 0, %s35
      %s38 = ssub.s32 %s25, %s37
      %s39 = ssub.s32 %s26, %s33
      %s40 = sor.u32 %s38, %s39
      %p41 = scmp.eq.s32.totalorder %s40, 0
      %s43 = sadd.s32 %s42, 1
      %s44 = scalar_select %p41, %s42, %s43
      %p47 = pneg %p41
      %p48 = scmp.eq.s32.totalorder %s18, 1
      %p49 = por %p47, %p48
      %p50 = scmp.ne.s32.totalorder %s42, %s45
      %p51 = scmp.eq.s32.totalorder %s18, 0
      %p52 = por %p50, %p51
      %p53 = scmp.ne.s32.totalorder %s42, %s45
      %p54 = scmp.eq.s32.totalorder %s23, 1
      %p55 = por %p53, %p54
      %p56 = scmp.ne.s32.totalorder %s45, %s46
      %p57 = scmp.eq.s32.totalorder %s23, 0
      %p58 = por %p56, %p57
      %p59 = scmp.ne.s32.totalorder %s45, %s46
      %p60 = scmp.eq.s32.totalorder %s24, 1
      %p61 = por %p59, %p60
      %p63 = scmp.ne.s32.totalorder %s46, %s62
      %p64 = scmp.eq.s32.totalorder %s24, 0
      %p65 = por %p63, %p64
      %s66 = ssub.s32 %s25, %s37
      %p67 = scmp.eq.s32.totalorder %s66, 0
      %s69 = sadd.s32 %s68, 1
      %s70 = scalar_select %p67, %s68, %s69
      %p73 = pneg %p67
      %p74 = scmp.eq.s32.totalorder %s18, 1
      %p75 = por %p73, %p74
      %p76 = scmp.ne.s32.totalorder %s68, %s71
      %p77 = scmp.eq.s32.totalorder %s18, 0
      %p78 = por %p76, %p77
      %p79 = scmp.ne.s32.totalorder %s68, %s71
      %p80 = scmp.eq.s32.totalorder %s23, 1
      %p81 = por %p79, %p80
      %p82 = scmp.ne.s32.totalorder %s71, %s72
      %p83 = scmp.eq.s32.totalorder %s23, 0
      %p84 = por %p82, %p83
      %p85 = scmp.ne.s32.totalorder %s71, %s72
      %p86 = scmp.eq.s32.totalorder %s24, 1
      %p87 = por %p85, %p86
      %p89 = scmp.ne.s32.totalorder %s72, %s88
      %p90 = scmp.eq.s32.totalorder %s24, 0
      %p91 = por %p89, %p90
      %s93 = sadd.s32 %s92, 1
      %p96 = scmp.eq.s32.totalorder %s18, 1
      %p97 = scmp.ne.s32.totalorder %s92, %s94
      %p98 = scmp.eq.s32.totalorder %s18, 0
      %p99 = por %p97, %p98
      %p100 = scmp.ne.s32.totalorder %s92, %s94
      %p101 = scmp.eq.s32.totalorder %s23, 1
      %p102 = por %p100, %p101
      %p103 = scmp.ne.s32.totalorder %s94, %s95
      %p104 = scmp.eq.s32.totalorder %s23, 0
      %p105 = por %p103, %p104
      %p106 = scmp.ne.s32.totalorder %s94, %s95
      %p107 = scmp.eq.s32.totalorder %s24, 1
      %p108 = por %p106, %p107
      %p110 = scmp.ne.s32.totalorder %s95, %s109
      %p111 = scmp.eq.s32.totalorder %s24, 0
      %p112 = por %p110, %p111
      %s114 = sadd.s32 %s113, 1
      %p117 = scmp.eq.s32.totalorder %s18, 1
      %p118 = scmp.ne.s32.totalorder %s113, %s115
      %p119 = scmp.eq.s32.totalorder %s18, 0
      %p120 = por %p118, %p119
      %p121 = scmp.ne.s32.totalorder %s113, %s115
      %p122 = scmp.eq.s32.totalorder %s23, 1
      %p123 = por %p121, %p122
      %p124 = scmp.ne.s32.totalorder %s115, %s116
      %p125 = scmp.eq.s32.totalorder %s23, 0
      %p126 = por %p124, %p125
      %p127 = scmp.ne.s32.totalorder %s115, %s116
      %p128 = scmp.eq.s32.totalorder %s24, 1
      %p129 = por %p127, %p128
      %p131 = scmp.ne.s32.totalorder %s116, %s130
      %p132 = scmp.eq.s32.totalorder %s24, 0
      %p133 = por %p131, %p132
      %s135 = sadd.s32 %s134, 1
      %p138 = scmp.eq.s32.totalorder %s18, 1
      %p139 = scmp.ne.s32.totalorder %s134, %s136
      %p140 = scmp.eq.s32.totalorder %s18, 0
      %p141 = por %p139, %p140
      %p142 = scmp.ne.s32.totalorder %s134, %s136
      %p143 = scmp.eq.s32.totalorder %s23, 1
      %p144 = por %p142, %p143
      %p145 = scmp.ne.s32.totalorder %s136, %s137
      %p146 = scmp.eq.s32.totalorder %s23, 0
      %p147 = por %p145, %p146
      %p148 = scmp.ne.s32.totalorder %s136, %s137
      %p149 = scmp.eq.s32.totalorder %s24, 1
      %p150 = por %p148, %p149
      %p152 = scmp.ne.s32.totalorder %s137, %s151
      %p153 = scmp.eq.s32.totalorder %s24, 0
      %p154 = por %p152, %p153
      %s156 = sadd.s32 %s155, 1
      %p159 = scmp.eq.s32.totalorder %s18, 1
      %p160 = scmp.ne.s32.totalorder %s155, %s157
      %p161 = scmp.eq.s32.totalorder %s18, 0
      %p162 = por %p160, %p161
      %p163 = scmp.ne.s32.totalorder %s155, %s157
      %p164 = scmp.eq.s32.totalorder %s23, 1
      %p165 = por %p163, %p164
      %p166 = scmp.ne.s32.totalorder %s157, %s158
      %p167 = scmp.eq.s32.totalorder %s23, 0
      %p168 = por %p166, %p167
      %p169 = scmp.ne.s32.totalorder %s157, %s158
      %p170 = scmp.eq.s32.totalorder %s24, 1
      %p171 = por %p169, %p170
      %p173 = scmp.ne.s32.totalorder %s158, %s172
      %p174 = scmp.eq.s32.totalorder %s24, 0
      %p175 = por %p173, %p174
      %s177 = sadd.s32 %s176, 1
      %p180 = scmp.eq.s32.totalorder %s18, 1
      %p181 = scmp.ne.s32.totalorder %s176, %s178
      %p182 = scmp.eq.s32.totalorder %s18, 0
      %p183 = por %p181, %p182
      %p184 = scmp.ne.s32.totalorder %s176, %s178
      %p185 = scmp.eq.s32.totalorder %s23, 1
      %p186 = por %p184, %p185
      %p187 = scmp.ne.s32.totalorder %s178, %s179
      %p188 = scmp.eq.s32.totalorder %s23, 0
      %p189 = por %p187, %p188
      %p190 = scmp.ne.s32.totalorder %s178, %s179
      %p191 = scmp.eq.s32.totalorder %s24, 1
      %p192 = por %p190, %p191
      %p194 = scmp.ne.s32.totalorder %s179, %s193
      %p195 = scmp.eq.s32.totalorder %s24, 0
      %p196 = por %p194, %p195
      %s198 = sadd.s32 %s197, 1
      %p201 = scmp.eq.s32.totalorder %s18, 1
      %p202 = scmp.ne.s32.totalorder %s197, %s199
      %p203 = scmp.eq.s32.totalorder %s18, 0
      %p204 = por %p202, %p203
      %p205 = scmp.ne.s32.totalorder %s197, %s199
      %p206 = scmp.eq.s32.totalorder %s23, 1
      %p207 = por %p205, %p206
      %p208 = scmp.ne.s32.totalorder %s199, %s200
      %p209 = scmp.eq.s32.totalorder %s23, 0
      %p210 = por %p208, %p209
      %p211 = scmp.ne.s32.totalorder %s199, %s200
      %p212 = scmp.eq.s32.totalorder %s24, 1
      %p213 = por %p211, %p212
      %p215 = scmp.ne.s32.totalorder %s200, %s214
      %p216 = scmp.eq.s32.totalorder %s24, 0
      %p217 = por %p215, %p216
      %s219 = sadd.s32 %s218, 1
      %p222 = scmp.eq.s32.totalorder %s18, 1
      %p223 = scmp.ne.s32.totalorder %s218, %s220
      %p224 = scmp.eq.s32.totalorder %s18, 0
      %p225 = por %p223, %p224
      %p226 = scmp.ne.s32.totalorder %s218, %s220
      %p227 = scmp.eq.s32.totalorder %s23, 1
      %p228 = por %p226, %p227
      %p229 = scmp.ne.s32.totalorder %s220, %s221
      %p230 = scmp.eq.s32.totalorder %s23, 0
      %p231 = por %p229, %p230
      %p232 = scmp.ne.s32.totalorder %s220, %s221
      %p233 = scmp.eq.s32.totalorder %s24, 1
      %p234 = por %p232, %p233
      %p236 = scmp.ne.s32.totalorder %s221, %s235
      %p237 = scmp.eq.s32.totalorder %s24, 0
      %p238 = por %p236, %p237
      %s239 = ssub.s32 %s25, %s37
      %s240 = ssub.s32 %s26, %s33
      %s241 = sor.u32 %s239, %s240
      %p242 = scmp.eq.s32.totalorder %s241, 0
      %s244 = sadd.s32 %s243, 1
      %s245 = scalar_select %p242, %s243, %s244
      %p248 = pneg %p242
      %p249 = scmp.eq.s32.totalorder %s18, 1
      %p250 = por %p248, %p249
      %p251 = scmp.ne.s32.totalorder %s243, %s246
      %p252 = scmp.eq.s32.totalorder %s18, 0
      %p253 = por %p251, %p252
      %p254 = scmp.ne.s32.totalorder %s243, %s246
      %p255 = scmp.eq.s32.totalorder %s23, 1
      %p256 = por %p254, %p255
      %p257 = scmp.ne.s32.totalorder %s246, %s247
      %p258 = scmp.eq.s32.totalorder %s23, 0
      %p259 = por %p257, %p258
      %p260 = scmp.ne.s32.totalorder %s246, %s247
      %p261 = scmp.eq.s32.totalorder %s24, 1
      %p262 = por %p260, %p261
      %p264 = scmp.ne.s32.totalorder %s247, %s263
      %p265 = scmp.eq.s32.totalorder %s24, 0
      %p266 = por %p264, %p265
      %p267 = scmp.le.s32.totalorder 1, %s18
      %p268 = scmp.lt.s32.totalorder %s18, 3
      %p269 = pnand %p267, %p268
      %p270 = pneg %p269
      // Predicated region
      $region9: #{tpu_custom_call.1} parent=5 // pred_check
        _
      $region10: #{tpu_custom_call.1} parent=5 // pred_check_branch
        %272 = sbr.rel (%p269) target = $region12
      $region11: #{tpu_custom_call.1} parent=5 // pred_region
        %s273 = ssub.s32 %s18, 1
        // Predicated region
        $region13: #{tpu_custom_call.1} parent=11 // pred_check
          %p274 = pneg %p105
        $region14: #{tpu_custom_call.1} parent=11 // pred_check_branch
          %276 = sbr.rel (%p274) target = $region16
        $region15: #{tpu_custom_call.1} parent=11 // pred_region
          _
        $region16: #{tpu_custom_call.1} parent=11 // pred_fallthru
          _
        // Predicated region
        $region17: #{tpu_custom_call.1} parent=11 // pred_check
          %p277 = pneg %p126
        $region18: #{tpu_custom_call.1} parent=11 // pred_check_branch
          %279 = sbr.rel (%p277) target = $region20
        $region19: #{tpu_custom_call.1} parent=11 // pred_region
          _
        $region20: #{tpu_custom_call.1} parent=11 // pred_fallthru
          _
        // Predicated region
        $region21: #{tpu_custom_call.1} parent=11 // pred_check
          %p280 = pneg %p147
        $region22: #{tpu_custom_call.1} parent=11 // pred_check_branch
          %282 = sbr.rel (%p280) target = $region24
        $region23: #{tpu_custom_call.1} parent=11 // pred_region
          _
        $region24: #{tpu_custom_call.1} parent=11 // pred_fallthru
          _
        // Predicated region
        $region25: #{tpu_custom_call.1} parent=11 // pred_check
          %p283 = pneg %p168
        $region26: #{tpu_custom_call.1} parent=11 // pred_check_branch
          %285 = sbr.rel (%p283) target = $region28
        $region27: #{tpu_custom_call.1} parent=11 // pred_region
          _
        $region28: #{tpu_custom_call.1} parent=11 // pred_fallthru
          _
        // Predicated region
        $region29: #{tpu_custom_call.1} parent=11 // pred_check
          %p286 = pneg %p189
        $region30: #{tpu_custom_call.1} parent=11 // pred_check_branch
          %288 = sbr.rel (%p286) target = $region32
        $region31: #{tpu_custom_call.1} parent=11 // pred_region
          _
        $region32: #{tpu_custom_call.1} parent=11 // pred_fallthru
          _
        // Predicated region
        $region33: #{tpu_custom_call.1} parent=11 // pred_check
          %p289 = pneg %p210
        $region34: #{tpu_custom_call.1} parent=11 // pred_check_branch
          %291 = sbr.rel (%p289) target = $region36
        $region35: #{tpu_custom_call.1} parent=11 // pred_region
          _
        $region36: #{tpu_custom_call.1} parent=11 // pred_fallthru
          _
        // Predicated region
        $region37: #{tpu_custom_call.1} parent=11 // pred_check
          %p292 = pneg %p231
        $region38: #{tpu_custom_call.1} parent=11 // pred_check_branch
          %294 = sbr.rel (%p292) target = $region40
        $region39: #{tpu_custom_call.1} parent=11 // pred_region
          _
        $region40: #{tpu_custom_call.1} parent=11 // pred_fallthru
          _
      $region12: #{tpu_custom_call.1} parent=5 // pred_fallthru
        _
      %p295 = scmp.lt.s32.totalorder %s18, 2
      // Predicated region
      $region41: #{tpu_custom_call.1} parent=5 // pred_check
        %p296 = pneg %p295
      $region42: #{tpu_custom_call.1} parent=5 // pred_check_branch
        %298 = sbr.rel (%p296) target = $region44
      $region43: #{tpu_custom_call.1} parent=5 // pred_region
        // Predicated region
        $region45: #{tpu_custom_call.1} parent=43 // pred_check
          %p299 = pneg %p52
        $region46: #{tpu_custom_call.1} parent=43 // pred_check_branch
          %301 = sbr.rel (%p299) target = $region48
        $region47: #{tpu_custom_call.1} parent=43 // pred_region
          %s302 = smul.u32 8, %s26
          %p303 = scmp.lt.s32.totalorder %s25, 1
          %s304 = scalar_select %p303, %s25, 1
          %p305 = scmp.lt.s32.totalorder %s302, 7
          %s306 = scalar_select %p305, %s302, 7
          %s307 = smul.addr %s304, 8
          %s308 = sadd.s32 %s306, %s307
          %s309 = smul.addr %s308, 8
          %s310 = scalar_lea.vmem %s0, %s309
          %s311 = smul.u32 8, %s26
        $region48: #{tpu_custom_call.1} parent=43 // pred_fallthru
          _
        // Predicated region
        $region49: #{tpu_custom_call.1} parent=43 // pred_check
          %p312 = pneg %p78
        $region50: #{tpu_custom_call.1} parent=43 // pred_check_branch
          %314 = sbr.rel (%p312) target = $region52
        $region51: #{tpu_custom_call.1} parent=43 // pred_region
          %p315 = scmp.lt.s32.totalorder %s25, 1
          %s316 = scalar_select %p315, %s25, 1
          %s317 = smul.addr %s316, 8
          %s318 = smul.addr %s317, 8
          %s319 = scalar_lea.vmem %s1, %s318
        $region52: #{tpu_custom_call.1} parent=43 // pred_fallthru
          _
      $region44: #{tpu_custom_call.1} parent=5 // pred_fallthru
        _
      %p320 = scmp.le.s32.totalorder 1, %s18
      %p321 = scmp.lt.s32.totalorder %s18, 3
      %p322 = pnand %p320, %p321
      %p323 = pneg %p322
      // Predicated region
      $region53: #{tpu_custom_call.1} parent=5 // pred_check
        _
      $region54: #{tpu_custom_call.1} parent=5 // pred_check_branch
        %325 = sbr.rel (%p322) target = $region56
      $region55: #{tpu_custom_call.1} parent=5 // pred_region
        %s326 = ssub.s32 %s18, 1
        %s327 = smul.u32 8, %s28
        %p328 = scmp.lt.s32.totalorder %s27, 1
        %s329 = scalar_select %p328, %s27, 1
        %p330 = scmp.lt.s32.totalorder %s327, 7
        %s331 = scalar_select %p330, %s327, 7
        %s332 = smul.addr %s329, 8
        %s333 = sadd.s32 %s331, %s332
        %s334 = smul.addr %s333, 8
        %s335 = scalar_lea.vmem %s0, %s334
        %p336 = pneg %p58
        %p337 = pneg %p55
        %p338 = scmp.lt.s32.totalorder %s27, 1
        %s339 = scalar_select %p338, %s27, 1
        %s340 = smul.addr %s339, 8
        %s341 = smul.addr %s340, 8
        %s342 = scalar_lea.vmem %s1, %s341
        %p343 = pneg %p84
        %p344 = pneg %p81
        %p345 = pneg %p105
        %p346 = pneg %p102
        %p347 = pneg %p126
        %p348 = pneg %p123
        %p349 = pneg %p147
        %p350 = pneg %p144
        %p351 = pneg %p168
        %p352 = pneg %p165
        %p353 = pneg %p189
        %p354 = pneg %p186
        %p355 = pneg %p210
        %p356 = pneg %p207
        %p357 = pneg %p231
        %p358 = pneg %p228
        %p359 = pneg %p259
        %p360 = pneg %p256
        %s361 = sand.u32 %s246, 1
        %s362 = scalar_lea.sflag [#allocation3], %s361
        %s363 = sand.u32 %s246, 1
        %s364 = smul.addr %s363, 64
        %s365 = scalar_lea.vmem [#allocation2], %s364
        %s366 = smul.u32 8, %s28
        %p367 = scmp.lt.s32.totalorder %s27, 1
        %s368 = scalar_select %p367, %s27, 1
        %p369 = scmp.lt.s32.totalorder %s366, 7
        %s370 = scalar_select %p369, %s366, 7
        %s371 = smul.addr %s368, 8
        %s372 = sadd.s32 %s370, %s371
        %s373 = smul.addr %s372, 8
        %s374 = scalar_lea.vmem %s0, %s373
        %s375 = smul.u32 8, %s28
        %p376 = scmp.lt.s32.totalorder %s27, 1
        %s377 = scalar_select %p376, %s27, 1
        %s378 = smul.addr %s377, 8
        %s379 = smul.addr %s378, 8
        %s380 = scalar_lea.vmem %s1, %s379
        %s381 = smul.u32 8, %s28
        %v383 = vld [vmem:[%s2] sm:$0x1]
        %v384 = vld [vmem:[%s3] sm:$0x1]
        %v385 = vld [vmem:[%s374] sm:$0xff]
        %v386 = vld [vmem:[%s374 + $0x8] sm:$0xff]
        %v387 = vld [vmem:[%s374 + $0x10] sm:$0xff]
        %v388 = vld [vmem:[%s374 + $0x18] sm:$0xff]
        %v389 = vld [vmem:[%s374 + $0x20] sm:$0xff]
        %v390 = vld [vmem:[%s374 + $0x28] sm:$0xff]
        %v391 = vld [vmem:[%s374 + $0x30] sm:$0xff]
        %v392 = vld [vmem:[%s374 + $0x38] sm:$0xff]
        %393 = vadd.xlane.f32.xlu0 %v385
        %v394 = vpop.xlane.xlu0 %393
        %395 = vadd.xlane.f32.xlu0 %v386
        %v396 = vpop.xlane.xlu0 %395
        %397 = vadd.xlane.f32.xlu0 %v387
        %v398 = vpop.xlane.xlu0 %397
        %399 = vadd.xlane.f32.xlu0 %v388
        %v400 = vpop.xlane.xlu0 %399
        %401 = vadd.xlane.f32.xlu0 %v389
        %v402 = vpop.xlane.xlu0 %401
        %403 = vadd.xlane.f32.xlu0 %v390
        %v404 = vpop.xlane.xlu0 %403
        %405 = vadd.xlane.f32.xlu0 %v391
        %v406 = vpop.xlane.xlu0 %405
        %407 = vadd.xlane.f32.xlu0 %v392
        %v408 = vpop.xlane.xlu0 %407
        %v409 = vrcp.pop 128.0
        %v410 = vmul.f32 128.0, %v409
        %v411 = vsub.f32 1.0, %v410
        %v412 = vmul.f32 %v409, %v411
        %v413 = vadd.f32 %v409, %v412
        %vm414 = vweird.f32 %v409
        %v415 = vsel %vm414, %v409, %v413
        %v416 = vmul.f32 %v394, %v415
        %v417 = vmul.f32 %v396, %v415
        %v418 = vmul.f32 %v398, %v415
        %v419 = vmul.f32 %v400, %v415
        %v420 = vmul.f32 %v402, %v415
        %v421 = vmul.f32 %v404, %v415
        %v422 = vmul.f32 %v406, %v415
        %v423 = vmul.f32 %v408, %v415
        %v424 = vsub.f32 %v385, %v416
        %v425 = vsub.f32 %v386, %v417
        %v426 = vsub.f32 %v387, %v418
        %v427 = vsub.f32 %v388, %v419
        %v428 = vsub.f32 %v389, %v420
        %v429 = vsub.f32 %v390, %v421
        %v430 = vsub.f32 %v391, %v422
        %v431 = vsub.f32 %v392, %v423
        %v432 = vmul.f32 %v424, %v424
        %v433 = vmul.f32 %v425, %v425
        %v434 = vmul.f32 %v426, %v426
        %v435 = vmul.f32 %v427, %v427
        %v436 = vmul.f32 %v428, %v428
        %v437 = vmul.f32 %v429, %v429
        %v438 = vmul.f32 %v430, %v430
        %v439 = vmul.f32 %v431, %v431
        %440 = vadd.xlane.f32.xlu0 %v432
        %v441 = vpop.xlane.xlu0 %440
        %442 = vadd.xlane.f32.xlu0 %v433
        %v443 = vpop.xlane.xlu0 %442
        %444 = vadd.xlane.f32.xlu0 %v434
        %v445 = vpop.xlane.xlu0 %444
        %446 = vadd.xlane.f32.xlu0 %v435
        %v447 = vpop.xlane.xlu0 %446
        %448 = vadd.xlane.f32.xlu0 %v436
        %v449 = vpop.xlane.xlu0 %448
        %450 = vadd.xlane.f32.xlu0 %v437
        %v451 = vpop.xlane.xlu0 %450
        %452 = vadd.xlane.f32.xlu0 %v438
        %v453 = vpop.xlane.xlu0 %452
        %454 = vadd.xlane.f32.xlu0 %v439
        %v455 = vpop.xlane.xlu0 %454
        %v456 = vmul.f32 %v441, %v415
        %v457 = vmul.f32 %v443, %v415
        %v458 = vmul.f32 %v445, %v415
        %v459 = vmul.f32 %v447, %v415
        %v460 = vmul.f32 %v449, %v415
        %v461 = vmul.f32 %v451, %v415
        %v462 = vmul.f32 %v453, %v415
        %v463 = vmul.f32 %v455, %v415
        %v464 = vadd.f32 %v456, 1e-05
        %v465 = vadd.f32 %v457, 1e-05
        %v466 = vadd.f32 %v458, 1e-05
        %v467 = vadd.f32 %v459, 1e-05
        %v468 = vadd.f32 %v460, 1e-05
        %v469 = vadd.f32 %v461, 1e-05
        %v470 = vadd.f32 %v462, 1e-05
        %v471 = vadd.f32 %v463, 1e-05
        %v472 = vrsqrt.pop %v464
        %v473 = vmul.f32 %v472, %v464
        %v474 = vmul.f32 %v473, %v472
        %v475 = vmul.f32 0.5, %v474
        %v476 = vsub.f32 1.5, %v475
        %v477 = vmul.f32 %v472, %v476
        %vm478 = vweird.f32 %v464
        %vm479 = vweird.f32 %v472
        %vm480 = vmor %vm478, %vm479
        %v481 = vsel %vm480, %v472, %v477
        %v482 = vrsqrt.pop %v465
        %v483 = vmul.f32 %v482, %v465
        %v484 = vmul.f32 %v483, %v482
        %v485 = vmul.f32 0.5, %v484
        %v486 = vsub.f32 1.5, %v485
        %v487 = vmul.f32 %v482, %v486
        %vm488 = vweird.f32 %v465
        %vm489 = vweird.f32 %v482
        %vm490 = vmor %vm488, %vm489
        %v491 = vsel %vm490, %v482, %v487
        %v492 = vrsqrt.pop %v466
        %v493 = vmul.f32 %v492, %v466
        %v494 = vmul.f32 %v493, %v492
        %v495 = vmul.f32 0.5, %v494
        %v496 = vsub.f32 1.5, %v495
        %v497 = vmul.f32 %v492, %v496
        %vm498 = vweird.f32 %v466
        %vm499 = vweird.f32 %v492
        %vm500 = vmor %vm498, %vm499
        %v501 = vsel %vm500, %v492, %v497
        %v502 = vrsqrt.pop %v467
        %v503 = vmul.f32 %v502, %v467
        %v504 = vmul.f32 %v503, %v502
        %v505 = vmul.f32 0.5, %v504
        %v506 = vsub.f32 1.5, %v505
        %v507 = vmul.f32 %v502, %v506
        %vm508 = vweird.f32 %v467
        %vm509 = vweird.f32 %v502
        %vm510 = vmor %vm508, %vm509
        %v511 = vsel %vm510, %v502, %v507
        %v512 = vrsqrt.pop %v468
        %v513 = vmul.f32 %v512, %v468
        %v514 = vmul.f32 %v513, %v512
        %v515 = vmul.f32 0.5, %v514
        %v516 = vsub.f32 1.5, %v515
        %v517 = vmul.f32 %v512, %v516
        %vm518 = vweird.f32 %v468
        %vm519 = vweird.f32 %v512
        %vm520 = vmor %vm518, %vm519
        %v521 = vsel %vm520, %v512, %v517
        %v522 = vrsqrt.pop %v469
        %v523 = vmul.f32 %v522, %v469
        %v524 = vmul.f32 %v523, %v522
        %v525 = vmul.f32 0.5, %v524
        %v526 = vsub.f32 1.5, %v525
        %v527 = vmul.f32 %v522, %v526
        %vm528 = vweird.f32 %v469
        %vm529 = vweird.f32 %v522
        %vm530 = vmor %vm528, %vm529
        %v531 = vsel %vm530, %v522, %v527
        %v532 = vrsqrt.pop %v470
        %v533 = vmul.f32 %v532, %v470
        %v534 = vmul.f32 %v533, %v532
        %v535 = vmul.f32 0.5, %v534
        %v536 = vsub.f32 1.5, %v535
        %v537 = vmul.f32 %v532, %v536
        %vm538 = vweird.f32 %v470
        %vm539 = vweird.f32 %v532
        %vm540 = vmor %vm538, %vm539
        %v541 = vsel %vm540, %v532, %v537
        %v542 = vrsqrt.pop %v471
        %v543 = vmul.f32 %v542, %v471
        %v544 = vmul.f32 %v543, %v542
        %v545 = vmul.f32 0.5, %v544
        %v546 = vsub.f32 1.5, %v545
        %v547 = vmul.f32 %v542, %v546
        %vm548 = vweird.f32 %v471
        %vm549 = vweird.f32 %v542
        %vm550 = vmor %vm548, %vm549
        %v551 = vsel %vm550, %v542, %v547
        %v552 = vmul.f32 %v424, %v481
        %v553 = vmul.f32 %v425, %v491
        %v554 = vmul.f32 %v426, %v501
        %v555 = vmul.f32 %v427, %v511
        %v556 = vmul.f32 %v428, %v521
        %v557 = vmul.f32 %v429, %v531
        %v558 = vmul.f32 %v430, %v541
        %v559 = vmul.f32 %v431, %v551
        %v561 = vperm.slane %v383, 0
        %v563 = vmul.f32 %v552, %v561
        %v564 = vmul.f32 %v553, %v561
        %v565 = vmul.f32 %v554, %v561
        %v566 = vmul.f32 %v555, %v561
        %v567 = vmul.f32 %v556, %v561
        %v568 = vmul.f32 %v557, %v561
        %v569 = vmul.f32 %v558, %v561
        %v570 = vmul.f32 %v559, %v561
        %v572 = vperm.slane %v384, 0
        %v574 = vadd.f32 %v563, %v572
        %v575 = vadd.f32 %v564, %v572
        %v576 = vadd.f32 %v565, %v572
        %v577 = vadd.f32 %v566, %v572
        %v578 = vadd.f32 %v567, %v572
        %v579 = vadd.f32 %v568, %v572
        %v580 = vadd.f32 %v569, %v572
        %v581 = vadd.f32 %v570, %v572
        %v582 = vpack.c.bf16 %v574, %v574
        %v583 = vpack.c.bf16 %v575, %v575
        %v584 = vpack.c.bf16 %v576, %v576
        %v585 = vpack.c.bf16 %v577, %v577
        %v586 = vpack.c.bf16 %v578, %v578
        %v587 = vpack.c.bf16 %v579, %v579
        %v588 = vpack.c.bf16 %v580, %v580
        %v589 = vpack.c.bf16 %v581, %v581
        %v590 = vld [vmem:[%s380] sm:$0xff]
        %v591 = vld [vmem:[%s380 + $0x8] sm:$0xff]
        %v592 = vld [vmem:[%s380 + $0x10] sm:$0xff]
        %v593 = vld [vmem:[%s380 + $0x18] sm:$0xff]
        %v594 = vld [vmem:[%s380 + $0x20] sm:$0xff]
        %v595 = vld [vmem:[%s380 + $0x28] sm:$0xff]
        %v596 = vld [vmem:[%s380 + $0x30] sm:$0xff]
        %v597 = vld [vmem:[%s380 + $0x38] sm:$0xff]
        %598 = vadd.xlane.f32.xlu0 %v590
        %v599 = vpop.xlane.xlu0 %598
        %600 = vadd.xlane.f32.xlu0 %v591
        %v601 = vpop.xlane.xlu0 %600
        %602 = vadd.xlane.f32.xlu0 %v592
        %v603 = vpop.xlane.xlu0 %602
        %604 = vadd.xlane.f32.xlu0 %v593
        %v605 = vpop.xlane.xlu0 %604
        %606 = vadd.xlane.f32.xlu0 %v594
        %v607 = vpop.xlane.xlu0 %606
        %608 = vadd.xlane.f32.xlu0 %v595
        %v609 = vpop.xlane.xlu0 %608
        %610 = vadd.xlane.f32.xlu0 %v596
        %v611 = vpop.xlane.xlu0 %610
        %612 = vadd.xlane.f32.xlu0 %v597
        %v613 = vpop.xlane.xlu0 %612
        %v614 = vmul.f32 %v599, %v415
        %v615 = vmul.f32 %v601, %v415
        %v616 = vmul.f32 %v603, %v415
        %v617 = vmul.f32 %v605, %v415
        %v618 = vmul.f32 %v607, %v415
        %v619 = vmul.f32 %v609, %v415
        %v620 = vmul.f32 %v611, %v415
        %v621 = vmul.f32 %v613, %v415
        %v622 = vsub.f32 %v590, %v614
        %v623 = vsub.f32 %v591, %v615
        %v624 = vsub.f32 %v592, %v616
        %v625 = vsub.f32 %v593, %v617
        %v626 = vsub.f32 %v594, %v618
        %v627 = vsub.f32 %v595, %v619
        %v628 = vsub.f32 %v596, %v620
        %v629 = vsub.f32 %v597, %v621
        %v630 = vmul.f32 %v622, %v622
        %v631 = vmul.f32 %v623, %v623
        %v632 = vmul.f32 %v624, %v624
        %v633 = vmul.f32 %v625, %v625
        %v634 = vmul.f32 %v626, %v626
        %v635 = vmul.f32 %v627, %v627
        %v636 = vmul.f32 %v628, %v628
        %v637 = vmul.f32 %v629, %v629
        %638 = vadd.xlane.f32.xlu0 %v630
        %v639 = vpop.xlane.xlu0 %638
        %640 = vadd.xlane.f32.xlu0 %v631
        %v641 = vpop.xlane.xlu0 %640
        %642 = vadd.xlane.f32.xlu0 %v632
        %v643 = vpop.xlane.xlu0 %642
        %644 = vadd.xlane.f32.xlu0 %v633
        %v645 = vpop.xlane.xlu0 %644
        %646 = vadd.xlane.f32.xlu0 %v634
        %v647 = vpop.xlane.xlu0 %646
        %648 = vadd.xlane.f32.xlu0 %v635
        %v649 = vpop.xlane.xlu0 %648
        %650 = vadd.xlane.f32.xlu0 %v636
        %v651 = vpop.xlane.xlu0 %650
        %652 = vadd.xlane.f32.xlu0 %v637
        %v653 = vpop.xlane.xlu0 %652
        %v654 = vmul.f32 %v639, %v415
        %v655 = vmul.f32 %v641, %v415
        %v656 = vmul.f32 %v643, %v415
        %v657 = vmul.f32 %v645, %v415
        %v658 = vmul.f32 %v647, %v415
        %v659 = vmul.f32 %v649, %v415
        %v660 = vmul.f32 %v651, %v415
        %v661 = vmul.f32 %v653, %v415
        %v662 = vadd.f32 %v654, 1e-05
        %v663 = vadd.f32 %v655, 1e-05
        %v664 = vadd.f32 %v656, 1e-05
        %v665 = vadd.f32 %v657, 1e-05
        %v666 = vadd.f32 %v658, 1e-05
        %v667 = vadd.f32 %v659, 1e-05
        %v668 = vadd.f32 %v660, 1e-05
        %v669 = vadd.f32 %v661, 1e-05
        %v670 = vrsqrt.pop %v662
        %v671 = vmul.f32 %v670, %v662
        %v672 = vmul.f32 %v671, %v670
        %v673 = vmul.f32 0.5, %v672
        %v674 = vsub.f32 1.5, %v673
        %v675 = vmul.f32 %v670, %v674
        %vm676 = vweird.f32 %v662
        %vm677 = vweird.f32 %v670
        %vm678 = vmor %vm676, %vm677
        %v679 = vsel %vm678, %v670, %v675
        %v680 = vrsqrt.pop %v663
        %v681 = vmul.f32 %v680, %v663
        %v682 = vmul.f32 %v681, %v680
        %v683 = vmul.f32 0.5, %v682
        %v684 = vsub.f32 1.5, %v683
        %v685 = vmul.f32 %v680, %v684
        %vm686 = vweird.f32 %v663
        %vm687 = vweird.f32 %v680
        %vm688 = vmor %vm686, %vm687
        %v689 = vsel %vm688, %v680, %v685
        %v690 = vrsqrt.pop %v664
        %v691 = vmul.f32 %v690, %v664
        %v692 = vmul.f32 %v691, %v690
        %v693 = vmul.f32 0.5, %v692
        %v694 = vsub.f32 1.5, %v693
        %v695 = vmul.f32 %v690, %v694
        %vm696 = vweird.f32 %v664
        %vm697 = vweird.f32 %v690
        %vm698 = vmor %vm696, %vm697
        %v699 = vsel %vm698, %v690, %v695
        %v700 = vrsqrt.pop %v665
        %v701 = vmul.f32 %v700, %v665
        %v702 = vmul.f32 %v701, %v700
        %v703 = vmul.f32 0.5, %v702
        %v704 = vsub.f32 1.5, %v703
        %v705 = vmul.f32 %v700, %v704
        %vm706 = vweird.f32 %v665
        %vm707 = vweird.f32 %v700
        %vm708 = vmor %vm706, %vm707
        %v709 = vsel %vm708, %v700, %v705
        %v710 = vrsqrt.pop %v666
        %v711 = vmul.f32 %v710, %v666
        %v712 = vmul.f32 %v711, %v710
        %v713 = vmul.f32 0.5, %v712
        %v714 = vsub.f32 1.5, %v713
        %v715 = vmul.f32 %v710, %v714
        %vm716 = vweird.f32 %v666
        %vm717 = vweird.f32 %v710
        %vm718 = vmor %vm716, %vm717
        %v719 = vsel %vm718, %v710, %v715
        %v720 = vrsqrt.pop %v667
        %v721 = vmul.f32 %v720, %v667
        %v722 = vmul.f32 %v721, %v720
        %v723 = vmul.f32 0.5, %v722
        %v724 = vsub.f32 1.5, %v723
        %v725 = vmul.f32 %v720, %v724
        %vm726 = vweird.f32 %v667
        %vm727 = vweird.f32 %v720
        %vm728 = vmor %vm726, %vm727
        %v729 = vsel %vm728, %v720, %v725
        %v730 = vrsqrt.pop %v668
        %v731 = vmul.f32 %v730, %v668
        %v732 = vmul.f32 %v731, %v730
        %v733 = vmul.f32 0.5, %v732
        %v734 = vsub.f32 1.5, %v733
        %v735 = vmul.f32 %v730, %v734
        %vm736 = vweird.f32 %v668
        %vm737 = vweird.f32 %v730
        %vm738 = vmor %vm736, %vm737
        %v739 = vsel %vm738, %v730, %v735
        %v740 = vrsqrt.pop %v669
        %v741 = vmul.f32 %v740, %v669
        %v742 = vmul.f32 %v741, %v740
        %v743 = vmul.f32 0.5, %v742
        %v744 = vsub.f32 1.5, %v743
        %v745 = vmul.f32 %v740, %v744
        %vm746 = vweird.f32 %v669
        %vm747 = vweird.f32 %v740
        %vm748 = vmor %vm746, %vm747
        %v749 = vsel %vm748, %v740, %v745
        %v750 = vmul.f32 %v622, %v679
        %v751 = vmul.f32 %v623, %v689
        %v752 = vmul.f32 %v624, %v699
        %v753 = vmul.f32 %v625, %v709
        %v754 = vmul.f32 %v626, %v719
        %v755 = vmul.f32 %v627, %v729
        %v756 = vmul.f32 %v628, %v739
        %v757 = vmul.f32 %v629, %v749
        %v758 = vmul.f32 %v750, %v561
        %v759 = vmul.f32 %v751, %v561
        %v760 = vmul.f32 %v752, %v561
        %v761 = vmul.f32 %v753, %v561
        %v762 = vmul.f32 %v754, %v561
        %v763 = vmul.f32 %v755, %v561
        %v764 = vmul.f32 %v756, %v561
        %v765 = vmul.f32 %v757, %v561
        %v766 = vadd.f32 %v758, %v572
        %v767 = vadd.f32 %v759, %v572
        %v768 = vadd.f32 %v760, %v572
        %v769 = vadd.f32 %v761, %v572
        %v770 = vadd.f32 %v762, %v572
        %v771 = vadd.f32 %v763, %v572
        %v772 = vadd.f32 %v764, %v572
        %v773 = vadd.f32 %v765, %v572
        %v774 = vpack.c.bf16 %v766, %v766
        %v775 = vpack.c.bf16 %v767, %v767
        %v776 = vpack.c.bf16 %v768, %v768
        %v777 = vpack.c.bf16 %v769, %v769
        %v778 = vpack.c.bf16 %v770, %v770
        %v779 = vpack.c.bf16 %v771, %v771
        %v780 = vpack.c.bf16 %v772, %v772
        %v781 = vpack.c.bf16 %v773, %v773
        %v782 = vld [vmem:[%s4] sm:$0xf]
        %v783 = vld [vmem:[%s4 + $0x4] sm:$0xf]
        %v784 = vld [vmem:[%s4 + $0x8] sm:$0xf]
        %v785 = vld [vmem:[%s4 + $0xc] sm:$0xf]
        %v786 = vld [vmem:[%s4 + $0x10] sm:$0xf]
        %v787 = vld [vmem:[%s4 + $0x14] sm:$0xf]
        %v788 = vld [vmem:[%s4 + $0x18] sm:$0xf]
        %v789 = vld [vmem:[%s4 + $0x1c] sm:$0xf]
        %v790 = vld [vmem:[%s4 + $0x20] sm:$0xf]
        %v791 = vld [vmem:[%s4 + $0x24] sm:$0xf]
        %v792 = vld [vmem:[%s4 + $0x28] sm:$0xf]
        %v793 = vld [vmem:[%s4 + $0x2c] sm:$0xf]
        %v794 = vld [vmem:[%s4 + $0x30] sm:$0xf]
        %v795 = vld [vmem:[%s4 + $0x34] sm:$0xf]
        %v796 = vld [vmem:[%s4 + $0x38] sm:$0xf]
        %v797 = vld [vmem:[%s4 + $0x3c] sm:$0xf]
        %v798 = vld [vmem:[%s4 + $0x40] sm:$0xf]
        %v799 = vld [vmem:[%s4 + $0x44] sm:$0xf]
        %v800 = vld [vmem:[%s4 + $0x48] sm:$0xf]
        %v801 = vld [vmem:[%s4 + $0x4c] sm:$0xf]
        %v802 = vld [vmem:[%s4 + $0x50] sm:$0xf]
        %v803 = vld [vmem:[%s4 + $0x54] sm:$0xf]
        %v804 = vld [vmem:[%s4 + $0x58] sm:$0xf]
        %v805 = vld [vmem:[%s4 + $0x5c] sm:$0xf]
        %v806 = vld [vmem:[%s4 + $0x60] sm:$0xf]
        %v807 = vld [vmem:[%s4 + $0x64] sm:$0xf]
        %v808 = vld [vmem:[%s4 + $0x68] sm:$0xf]
        %v809 = vld [vmem:[%s4 + $0x6c] sm:$0xf]
        %v810 = vld [vmem:[%s4 + $0x70] sm:$0xf]
        %v811 = vld [vmem:[%s4 + $0x74] sm:$0xf]
        %v812 = vld [vmem:[%s4 + $0x78] sm:$0xf]
        %v813 = vld [vmem:[%s4 + $0x7c] sm:$0xf]
        %v814 = vld [vmem:[%s4 + $0x80] sm:$0xf]
        %v815 = vld [vmem:[%s4 + $0x84] sm:$0xf]
        %v816 = vld [vmem:[%s4 + $0x88] sm:$0xf]
        %v817 = vld [vmem:[%s4 + $0x8c] sm:$0xf]
        %v818 = vld [vmem:[%s4 + $0x90] sm:$0xf]
        %v819 = vld [vmem:[%s4 + $0x94] sm:$0xf]
        %v820 = vld [vmem:[%s4 + $0x98] sm:$0xf]
        %v821 = vld [vmem:[%s4 + $0x9c] sm:$0xf]
        %v822 = vld [vmem:[%s4 + $0xa0] sm:$0xf]
        %v823 = vld [vmem:[%s4 + $0xa4] sm:$0xf]
        %v824 = vld [vmem:[%s4 + $0xa8] sm:$0xf]
        %v825 = vld [vmem:[%s4 + $0xac] sm:$0xf]
        %v826 = vld [vmem:[%s4 + $0xb0] sm:$0xf]
        %v827 = vld [vmem:[%s4 + $0xb4] sm:$0xf]
        %v828 = vld [vmem:[%s4 + $0xb8] sm:$0xf]
        %v829 = vld [vmem:[%s4 + $0xbc] sm:$0xf]
        %v830 = vld [vmem:[%s4 + $0xc0] sm:$0xf]
        %v831 = vld [vmem:[%s4 + $0xc4] sm:$0xf]
        %v832 = vld [vmem:[%s4 + $0xc8] sm:$0xf]
        %v833 = vld [vmem:[%s4 + $0xcc] sm:$0xf]
        %v834 = vld [vmem:[%s4 + $0xd0] sm:$0xf]
        %v835 = vld [vmem:[%s4 + $0xd4] sm:$0xf]
        %v836 = vld [vmem:[%s4 + $0xd8] sm:$0xf]
        %v837 = vld [vmem:[%s4 + $0xdc] sm:$0xf]
        %v838 = vld [vmem:[%s4 + $0xe0] sm:$0xf]
        %v839 = vld [vmem:[%s4 + $0xe4] sm:$0xf]
        %v840 = vld [vmem:[%s4 + $0xe8] sm:$0xf]
        %v841 = vld [vmem:[%s4 + $0xec] sm:$0xf]
        %v842 = vld [vmem:[%s4 + $0xf0] sm:$0xf]
        %v843 = vld [vmem:[%s4 + $0xf4] sm:$0xf]
        %v844 = vld [vmem:[%s4 + $0xf8] sm:$0xf]
        %v845 = vld [vmem:[%s4 + $0xfc] sm:$0xf]
        %v854 = vunpack.c.l.b16 %v582
        %v855 = vunpack.c.l.b16 %v583
        %v856 = vunpack.c.l.b16 %v584
        %v857 = vunpack.c.l.b16 %v585
        %v858 = vunpack.c.l.b16 %v586
        %v859 = vunpack.c.l.b16 %v587
        %v860 = vunpack.c.l.b16 %v588
        %v861 = vunpack.c.l.b16 %v589
        %v862 = vpack.c.b16 %v855, %v854
        %v863 = vpack.c.b16 %v857, %v856
        %v864 = vpack.c.b16 %v859, %v858
        %v865 = vpack.c.b16 %v861, %v860
        %v886 = vunpack.c.l.b16 %v782
        %v887 = vunpack.c.l.b16 %v783
        %v888 = vunpack.c.l.b16 %v784
        %v889 = vunpack.c.l.b16 %v785
        %v890 = vunpack.c.l.b16 %v786
        %v891 = vunpack.c.l.b16 %v787
        %v892 = vunpack.c.l.b16 %v788
        %v893 = vunpack.c.l.b16 %v789
        %v894 = vunpack.c.l.b16 %v790
        %v895 = vunpack.c.l.b16 %v791
        %v896 = vunpack.c.l.b16 %v792
        %v897 = vunpack.c.l.b16 %v793
        %v898 = vunpack.c.l.b16 %v794
        %v899 = vunpack.c.l.b16 %v795
        %v900 = vunpack.c.l.b16 %v796
        %v901 = vunpack.c.l.b16 %v797
        %v902 = vpack.c.b16 %v887, %v886
        %v903 = vpack.c.b16 %v889, %v888
        %v904 = vpack.c.b16 %v891, %v890
        %v905 = vpack.c.b16 %v893, %v892
        %v906 = vpack.c.b16 %v895, %v894
        %v907 = vpack.c.b16 %v897, %v896
        %v908 = vpack.c.b16 %v899, %v898
        %v909 = vpack.c.b16 %v901, %v900
        %918 = vmatpush.bf16.msra.mxu0 %v909
        %919 = vmatpush.bf16.msra.mxu0 %v908
        %920 = vmatpush.bf16.msra.mxu0 %v907
        %921 = vmatpush.bf16.msra.mxu0 %v906
        %922 = vmatpush.bf16.msra.mxu0 %v905
        %923 = vmatpush.bf16.msra.mxu0 %v904
        %924 = vmatpush.bf16.msra.mxu0 %v903
        %925 = vmatpush.bf16.msra.mxu0 %v902
        %926 = vmatmul.bf16.gmra.mxu0 %v862
        %v927 = vpop.f32.mrf.mxu0
        %v928 = vadd.f32 0.0, %v927
        %v929 = vpop.f32.mrf.mxu0
        %v930 = vadd.f32 0.0, %v929
        %931 = vmatmul.bf16.gmra.mxu0 %v863
        %v932 = vpop.f32.mrf.mxu0
        %v933 = vadd.f32 0.0, %v932
        %v934 = vpop.f32.mrf.mxu0
        %v935 = vadd.f32 0.0, %v934
        %936 = vmatmul.bf16.gmra.mxu0 %v864
        %v937 = vpop.f32.mrf.mxu0
        %v938 = vadd.f32 0.0, %v937
        %v939 = vpop.f32.mrf.mxu0
        %v940 = vadd.f32 0.0, %v939
        %941 = vmatmul.bf16.gmra.mxu0 %v865
        %v942 = vpop.f32.mrf.mxu0
        %v943 = vadd.f32 0.0, %v942
        %v944 = vpop.f32.mrf.mxu0
        %v945 = vadd.f32 0.0, %v944
        %946 = vdwg.mxu0
        %v963 = vunpack.c.l.b16 %v798
        %v964 = vunpack.c.l.b16 %v799
        %v965 = vunpack.c.l.b16 %v800
        %v966 = vunpack.c.l.b16 %v801
        %v967 = vunpack.c.l.b16 %v802
        %v968 = vunpack.c.l.b16 %v803
        %v969 = vunpack.c.l.b16 %v804
        %v970 = vunpack.c.l.b16 %v805
        %v971 = vunpack.c.l.b16 %v806
        %v972 = vunpack.c.l.b16 %v807
        %v973 = vunpack.c.l.b16 %v808
        %v974 = vunpack.c.l.b16 %v809
        %v975 = vunpack.c.l.b16 %v810
        %v976 = vunpack.c.l.b16 %v811
        %v977 = vunpack.c.l.b16 %v812
        %v978 = vunpack.c.l.b16 %v813
        %v979 = vpack.c.b16 %v964, %v963
        %v980 = vpack.c.b16 %v966, %v965
        %v981 = vpack.c.b16 %v968, %v967
        %v982 = vpack.c.b16 %v970, %v969
        %v983 = vpack.c.b16 %v972, %v971
        %v984 = vpack.c.b16 %v974, %v973
        %v985 = vpack.c.b16 %v976, %v975
        %v986 = vpack.c.b16 %v978, %v977
        %995 = vmatpush.bf16.msra.mxu0 %v986
        %996 = vmatpush.bf16.msra.mxu0 %v985
        %997 = vmatpush.bf16.msra.mxu0 %v984
        %998 = vmatpush.bf16.msra.mxu0 %v983
        %999 = vmatpush.bf16.msra.mxu0 %v982
        %1000 = vmatpush.bf16.msra.mxu0 %v981
        %1001 = vmatpush.bf16.msra.mxu0 %v980
        %1002 = vmatpush.bf16.msra.mxu0 %v979
        %1003 = vmatmul.bf16.gmra.mxu0 %v862
        %v1004 = vpop.f32.mrf.mxu0
        %v1005 = vadd.f32 0.0, %v1004
        %v1006 = vpop.f32.mrf.mxu0
        %v1007 = vadd.f32 0.0, %v1006
        %1008 = vmatmul.bf16.gmra.mxu0 %v863
        %v1009 = vpop.f32.mrf.mxu0
        %v1010 = vadd.f32 0.0, %v1009
        %v1011 = vpop.f32.mrf.mxu0
        %v1012 = vadd.f32 0.0, %v1011
        %1013 = vmatmul.bf16.gmra.mxu0 %v864
        %v1014 = vpop.f32.mrf.mxu0
        %v1015 = vadd.f32 0.0, %v1014
        %v1016 = vpop.f32.mrf.mxu0
        %v1017 = vadd.f32 0.0, %v1016
        %1018 = vmatmul.bf16.gmra.mxu0 %v865
        %v1019 = vpop.f32.mrf.mxu0
        %v1020 = vadd.f32 0.0, %v1019
        %v1021 = vpop.f32.mrf.mxu0
        %v1022 = vadd.f32 0.0, %v1021
        %1023 = vdwg.mxu0
        %v1040 = vunpack.c.l.b16 %v814
        %v1041 = vunpack.c.l.b16 %v815
        %v1042 = vunpack.c.l.b16 %v816
        %v1043 = vunpack.c.l.b16 %v817
        %v1044 = vunpack.c.l.b16 %v818
        %v1045 = vunpack.c.l.b16 %v819
        %v1046 = vunpack.c.l.b16 %v820
        %v1047 = vunpack.c.l.b16 %v821
        %v1048 = vunpack.c.l.b16 %v822
        %v1049 = vunpack.c.l.b16 %v823
        %v1050 = vunpack.c.l.b16 %v824
        %v1051 = vunpack.c.l.b16 %v825
        %v1052 = vunpack.c.l.b16 %v826
        %v1053 = vunpack.c.l.b16 %v827
        %v1054 = vunpack.c.l.b16 %v828
        %v1055 = vunpack.c.l.b16 %v829
        %v1056 = vpack.c.b16 %v1041, %v1040
        %v1057 = vpack.c.b16 %v1043, %v1042
        %v1058 = vpack.c.b16 %v1045, %v1044
        %v1059 = vpack.c.b16 %v1047, %v1046
        %v1060 = vpack.c.b16 %v1049, %v1048
        %v1061 = vpack.c.b16 %v1051, %v1050
        %v1062 = vpack.c.b16 %v1053, %v1052
        %v1063 = vpack.c.b16 %v1055, %v1054
        %1072 = vmatpush.bf16.msra.mxu0 %v1063
        %1073 = vmatpush.bf16.msra.mxu0 %v1062
        %1074 = vmatpush.bf16.msra.mxu0 %v1061
        %1075 = vmatpush.bf16.msra.mxu0 %v1060
        %1076 = vmatpush.bf16.msra.mxu0 %v1059
        %1077 = vmatpush.bf16.msra.mxu0 %v1058
        %1078 = vmatpush.bf16.msra.mxu0 %v1057
        %1079 = vmatpush.bf16.msra.mxu0 %v1056
        %1080 = vmatmul.bf16.gmra.mxu0 %v862
        %v1081 = vpop.f32.mrf.mxu0
        %v1082 = vadd.f32 0.0, %v1081
        %v1083 = vpop.f32.mrf.mxu0
        %v1084 = vadd.f32 0.0, %v1083
        %1085 = vmatmul.bf16.gmra.mxu0 %v863
        %v1086 = vpop.f32.mrf.mxu0
        %v1087 = vadd.f32 0.0, %v1086
        %v1088 = vpop.f32.mrf.mxu0
        %v1089 = vadd.f32 0.0, %v1088
        %1090 = vmatmul.bf16.gmra.mxu0 %v864
        %v1091 = vpop.f32.mrf.mxu0
        %v1092 = vadd.f32 0.0, %v1091
        %v1093 = vpop.f32.mrf.mxu0
        %v1094 = vadd.f32 0.0, %v1093
        %1095 = vmatmul.bf16.gmra.mxu0 %v865
        %v1096 = vpop.f32.mrf.mxu0
        %v1097 = vadd.f32 0.0, %v1096
        %v1098 = vpop.f32.mrf.mxu0
        %v1099 = vadd.f32 0.0, %v1098
        %1100 = vdwg.mxu0
        %v1117 = vunpack.c.l.b16 %v830
        %v1118 = vunpack.c.l.b16 %v831
        %v1119 = vunpack.c.l.b16 %v832
        %v1120 = vunpack.c.l.b16 %v833
        %v1121 = vunpack.c.l.b16 %v834
        %v1122 = vunpack.c.l.b16 %v835
        %v1123 = vunpack.c.l.b16 %v836
        %v1124 = vunpack.c.l.b16 %v837
        %v1125 = vunpack.c.l.b16 %v838
        %v1126 = vunpack.c.l.b16 %v839
        %v1127 = vunpack.c.l.b16 %v840
        %v1128 = vunpack.c.l.b16 %v841
        %v1129 = vunpack.c.l.b16 %v842
        %v1130 = vunpack.c.l.b16 %v843
        %v1131 = vunpack.c.l.b16 %v844
        %v1132 = vunpack.c.l.b16 %v845
        %v1133 = vpack.c.b16 %v1118, %v1117
        %v1134 = vpack.c.b16 %v1120, %v1119
        %v1135 = vpack.c.b16 %v1122, %v1121
        %v1136 = vpack.c.b16 %v1124, %v1123
        %v1137 = vpack.c.b16 %v1126, %v1125
        %v1138 = vpack.c.b16 %v1128, %v1127
        %v1139 = vpack.c.b16 %v1130, %v1129
        %v1140 = vpack.c.b16 %v1132, %v1131
        %1149 = vmatpush.bf16.msra.mxu0 %v1140
        %1150 = vmatpush.bf16.msra.mxu0 %v1139
        %1151 = vmatpush.bf16.msra.mxu0 %v1138
        %1152 = vmatpush.bf16.msra.mxu0 %v1137
        %1153 = vmatpush.bf16.msra.mxu0 %v1136
        %1154 = vmatpush.bf16.msra.mxu0 %v1135
        %1155 = vmatpush.bf16.msra.mxu0 %v1134
        %1156 = vmatpush.bf16.msra.mxu0 %v1133
        %1157 = vmatmul.bf16.gmra.mxu0 %v862
        %v1158 = vpop.f32.mrf.mxu0
        %v1159 = vadd.f32 0.0, %v1158
        %v1160 = vpop.f32.mrf.mxu0
        %v1161 = vadd.f32 0.0, %v1160
        %1162 = vmatmul.bf16.gmra.mxu0 %v863
        %v1163 = vpop.f32.mrf.mxu0
        %v1164 = vadd.f32 0.0, %v1163
        %v1165 = vpop.f32.mrf.mxu0
        %v1166 = vadd.f32 0.0, %v1165
        %1167 = vmatmul.bf16.gmra.mxu0 %v864
        %v1168 = vpop.f32.mrf.mxu0
        %v1169 = vadd.f32 0.0, %v1168
        %v1170 = vpop.f32.mrf.mxu0
        %v1171 = vadd.f32 0.0, %v1170
        %1172 = vmatmul.bf16.gmra.mxu0 %v865
        %v1173 = vpop.f32.mrf.mxu0
        %v1174 = vadd.f32 0.0, %v1173
        %v1175 = vpop.f32.mrf.mxu0
        %v1176 = vadd.f32 0.0, %v1175
        %1177 = vdwg.mxu0
        %v1178 = vld [vmem:[%s5] sm:$0xf]
        %v1179 = vld [vmem:[%s5 + $0x4] sm:$0xf]
        %v1180 = vld [vmem:[%s5 + $0x8] sm:$0xf]
        %v1181 = vld [vmem:[%s5 + $0xc] sm:$0xf]
        %v1182 = vld [vmem:[%s5 + $0x10] sm:$0xf]
        %v1183 = vld [vmem:[%s5 + $0x14] sm:$0xf]
        %v1184 = vld [vmem:[%s5 + $0x18] sm:$0xf]
        %v1185 = vld [vmem:[%s5 + $0x1c] sm:$0xf]
        %v1186 = vld [vmem:[%s5 + $0x20] sm:$0xf]
        %v1187 = vld [vmem:[%s5 + $0x24] sm:$0xf]
        %v1188 = vld [vmem:[%s5 + $0x28] sm:$0xf]
        %v1189 = vld [vmem:[%s5 + $0x2c] sm:$0xf]
        %v1190 = vld [vmem:[%s5 + $0x30] sm:$0xf]
        %v1191 = vld [vmem:[%s5 + $0x34] sm:$0xf]
        %v1192 = vld [vmem:[%s5 + $0x38] sm:$0xf]
        %v1193 = vld [vmem:[%s5 + $0x3c] sm:$0xf]
        %v1194 = vld [vmem:[%s5 + $0x40] sm:$0xf]
        %v1195 = vld [vmem:[%s5 + $0x44] sm:$0xf]
        %v1196 = vld [vmem:[%s5 + $0x48] sm:$0xf]
        %v1197 = vld [vmem:[%s5 + $0x4c] sm:$0xf]
        %v1198 = vld [vmem:[%s5 + $0x50] sm:$0xf]
        %v1199 = vld [vmem:[%s5 + $0x54] sm:$0xf]
        %v1200 = vld [vmem:[%s5 + $0x58] sm:$0xf]
        %v1201 = vld [vmem:[%s5 + $0x5c] sm:$0xf]
        %v1202 = vld [vmem:[%s5 + $0x60] sm:$0xf]
        %v1203 = vld [vmem:[%s5 + $0x64] sm:$0xf]
        %v1204 = vld [vmem:[%s5 + $0x68] sm:$0xf]
        %v1205 = vld [vmem:[%s5 + $0x6c] sm:$0xf]
        %v1206 = vld [vmem:[%s5 + $0x70] sm:$0xf]
        %v1207 = vld [vmem:[%s5 + $0x74] sm:$0xf]
        %v1208 = vld [vmem:[%s5 + $0x78] sm:$0xf]
        %v1209 = vld [vmem:[%s5 + $0x7c] sm:$0xf]
        %v1210 = vld [vmem:[%s5 + $0x80] sm:$0xf]
        %v1211 = vld [vmem:[%s5 + $0x84] sm:$0xf]
        %v1212 = vld [vmem:[%s5 + $0x88] sm:$0xf]
        %v1213 = vld [vmem:[%s5 + $0x8c] sm:$0xf]
        %v1214 = vld [vmem:[%s5 + $0x90] sm:$0xf]
        %v1215 = vld [vmem:[%s5 + $0x94] sm:$0xf]
        %v1216 = vld [vmem:[%s5 + $0x98] sm:$0xf]
        %v1217 = vld [vmem:[%s5 + $0x9c] sm:$0xf]
        %v1218 = vld [vmem:[%s5 + $0xa0] sm:$0xf]
        %v1219 = vld [vmem:[%s5 + $0xa4] sm:$0xf]
        %v1220 = vld [vmem:[%s5 + $0xa8] sm:$0xf]
        %v1221 = vld [vmem:[%s5 + $0xac] sm:$0xf]
        %v1222 = vld [vmem:[%s5 + $0xb0] sm:$0xf]
        %v1223 = vld [vmem:[%s5 + $0xb4] sm:$0xf]
        %v1224 = vld [vmem:[%s5 + $0xb8] sm:$0xf]
        %v1225 = vld [vmem:[%s5 + $0xbc] sm:$0xf]
        %v1226 = vld [vmem:[%s5 + $0xc0] sm:$0xf]
        %v1227 = vld [vmem:[%s5 + $0xc4] sm:$0xf]
        %v1228 = vld [vmem:[%s5 + $0xc8] sm:$0xf]
        %v1229 = vld [vmem:[%s5 + $0xcc] sm:$0xf]
        %v1230 = vld [vmem:[%s5 + $0xd0] sm:$0xf]
        %v1231 = vld [vmem:[%s5 + $0xd4] sm:$0xf]
        %v1232 = vld [vmem:[%s5 + $0xd8] sm:$0xf]
        %v1233 = vld [vmem:[%s5 + $0xdc] sm:$0xf]
        %v1234 = vld [vmem:[%s5 + $0xe0] sm:$0xf]
        %v1235 = vld [vmem:[%s5 + $0xe4] sm:$0xf]
        %v1236 = vld [vmem:[%s5 + $0xe8] sm:$0xf]
        %v1237 = vld [vmem:[%s5 + $0xec] sm:$0xf]
        %v1238 = vld [vmem:[%s5 + $0xf0] sm:$0xf]
        %v1239 = vld [vmem:[%s5 + $0xf4] sm:$0xf]
        %v1240 = vld [vmem:[%s5 + $0xf8] sm:$0xf]
        %v1241 = vld [vmem:[%s5 + $0xfc] sm:$0xf]
        %v1250 = vunpack.c.l.b16 %v774
        %v1251 = vunpack.c.l.b16 %v775
        %v1252 = vunpack.c.l.b16 %v776
        %v1253 = vunpack.c.l.b16 %v777
        %v1254 = vunpack.c.l.b16 %v778
        %v1255 = vunpack.c.l.b16 %v779
        %v1256 = vunpack.c.l.b16 %v780
        %v1257 = vunpack.c.l.b16 %v781
        %v1258 = vpack.c.b16 %v1251, %v1250
        %v1259 = vpack.c.b16 %v1253, %v1252
        %v1260 = vpack.c.b16 %v1255, %v1254
        %v1261 = vpack.c.b16 %v1257, %v1256
        %v1282 = vunpack.c.l.b16 %v1178
        %v1283 = vunpack.c.l.b16 %v1179
        %v1284 = vunpack.c.l.b16 %v1180
        %v1285 = vunpack.c.l.b16 %v1181
        %v1286 = vunpack.c.l.b16 %v1182
        %v1287 = vunpack.c.l.b16 %v1183
        %v1288 = vunpack.c.l.b16 %v1184
        %v1289 = vunpack.c.l.b16 %v1185
        %v1290 = vunpack.c.l.b16 %v1186
        %v1291 = vunpack.c.l.b16 %v1187
        %v1292 = vunpack.c.l.b16 %v1188
        %v1293 = vunpack.c.l.b16 %v1189
        %v1294 = vunpack.c.l.b16 %v1190
        %v1295 = vunpack.c.l.b16 %v1191
        %v1296 = vunpack.c.l.b16 %v1192
        %v1297 = vunpack.c.l.b16 %v1193
        %v1298 = vpack.c.b16 %v1283, %v1282
        %v1299 = vpack.c.b16 %v1285, %v1284
        %v1300 = vpack.c.b16 %v1287, %v1286
        %v1301 = vpack.c.b16 %v1289, %v1288
        %v1302 = vpack.c.b16 %v1291, %v1290
        %v1303 = vpack.c.b16 %v1293, %v1292
        %v1304 = vpack.c.b16 %v1295, %v1294
        %v1305 = vpack.c.b16 %v1297, %v1296
        %1314 = vmatpush.bf16.msra.mxu0 %v1305
        %1315 = vmatpush.bf16.msra.mxu0 %v1304
        %1316 = vmatpush.bf16.msra.mxu0 %v1303
        %1317 = vmatpush.bf16.msra.mxu0 %v1302
        %1318 = vmatpush.bf16.msra.mxu0 %v1301
        %1319 = vmatpush.bf16.msra.mxu0 %v1300
        %1320 = vmatpush.bf16.msra.mxu0 %v1299
        %1321 = vmatpush.bf16.msra.mxu0 %v1298
        %1322 = vmatmul.bf16.gmra.mxu0 %v1258
        %v1323 = vpop.f32.mrf.mxu0
        %v1324 = vadd.f32 0.0, %v1323
        %v1325 = vpop.f32.mrf.mxu0
        %v1326 = vadd.f32 0.0, %v1325
        %1327 = vmatmul.bf16.gmra.mxu0 %v1259
        %v1328 = vpop.f32.mrf.mxu0
        %v1329 = vadd.f32 0.0, %v1328
        %v1330 = vpop.f32.mrf.mxu0
        %v1331 = vadd.f32 0.0, %v1330
        %1332 = vmatmul.bf16.gmra.mxu0 %v1260
        %v1333 = vpop.f32.mrf.mxu0
        %v1334 = vadd.f32 0.0, %v1333
        %v1335 = vpop.f32.mrf.mxu0
        %v1336 = vadd.f32 0.0, %v1335
        %1337 = vmatmul.bf16.gmra.mxu0 %v1261
        %v1338 = vpop.f32.mrf.mxu0
        %v1339 = vadd.f32 0.0, %v1338
        %v1340 = vpop.f32.mrf.mxu0
        %v1341 = vadd.f32 0.0, %v1340
        %1342 = vdwg.mxu0
        %v1359 = vunpack.c.l.b16 %v1194
        %v1360 = vunpack.c.l.b16 %v1195
        %v1361 = vunpack.c.l.b16 %v1196
        %v1362 = vunpack.c.l.b16 %v1197
        %v1363 = vunpack.c.l.b16 %v1198
        %v1364 = vunpack.c.l.b16 %v1199
        %v1365 = vunpack.c.l.b16 %v1200
        %v1366 = vunpack.c.l.b16 %v1201
        %v1367 = vunpack.c.l.b16 %v1202
        %v1368 = vunpack.c.l.b16 %v1203
        %v1369 = vunpack.c.l.b16 %v1204
        %v1370 = vunpack.c.l.b16 %v1205
        %v1371 = vunpack.c.l.b16 %v1206
        %v1372 = vunpack.c.l.b16 %v1207
        %v1373 = vunpack.c.l.b16 %v1208
        %v1374 = vunpack.c.l.b16 %v1209
        %v1375 = vpack.c.b16 %v1360, %v1359
        %v1376 = vpack.c.b16 %v1362, %v1361
        %v1377 = vpack.c.b16 %v1364, %v1363
        %v1378 = vpack.c.b16 %v1366, %v1365
        %v1379 = vpack.c.b16 %v1368, %v1367
        %v1380 = vpack.c.b16 %v1370, %v1369
        %v1381 = vpack.c.b16 %v1372, %v1371
        %v1382 = vpack.c.b16 %v1374, %v1373
        %1391 = vmatpush.bf16.msra.mxu0 %v1382
        %1392 = vmatpush.bf16.msra.mxu0 %v1381
        %1393 = vmatpush.bf16.msra.mxu0 %v1380
        %1394 = vmatpush.bf16.msra.mxu0 %v1379
        %1395 = vmatpush.bf16.msra.mxu0 %v1378
        %1396 = vmatpush.bf16.msra.mxu0 %v1377
        %1397 = vmatpush.bf16.msra.mxu0 %v1376
        %1398 = vmatpush.bf16.msra.mxu0 %v1375
        %1399 = vmatmul.bf16.gmra.mxu0 %v1258
        %v1400 = vpop.f32.mrf.mxu0
        %v1401 = vadd.f32 0.0, %v1400
        %v1402 = vpop.f32.mrf.mxu0
        %v1403 = vadd.f32 0.0, %v1402
        %1404 = vmatmul.bf16.gmra.mxu0 %v1259
        %v1405 = vpop.f32.mrf.mxu0
        %v1406 = vadd.f32 0.0, %v1405
        %v1407 = vpop.f32.mrf.mxu0
        %v1408 = vadd.f32 0.0, %v1407
        %1409 = vmatmul.bf16.gmra.mxu0 %v1260
        %v1410 = vpop.f32.mrf.mxu0
        %v1411 = vadd.f32 0.0, %v1410
        %v1412 = vpop.f32.mrf.mxu0
        %v1413 = vadd.f32 0.0, %v1412
        %1414 = vmatmul.bf16.gmra.mxu0 %v1261
        %v1415 = vpop.f32.mrf.mxu0
        %v1416 = vadd.f32 0.0, %v1415
        %v1417 = vpop.f32.mrf.mxu0
        %v1418 = vadd.f32 0.0, %v1417
        %1419 = vdwg.mxu0
        %v1436 = vunpack.c.l.b16 %v1210
        %v1437 = vunpack.c.l.b16 %v1211
        %v1438 = vunpack.c.l.b16 %v1212
        %v1439 = vunpack.c.l.b16 %v1213
        %v1440 = vunpack.c.l.b16 %v1214
        %v1441 = vunpack.c.l.b16 %v1215
        %v1442 = vunpack.c.l.b16 %v1216
        %v1443 = vunpack.c.l.b16 %v1217
        %v1444 = vunpack.c.l.b16 %v1218
        %v1445 = vunpack.c.l.b16 %v1219
        %v1446 = vunpack.c.l.b16 %v1220
        %v1447 = vunpack.c.l.b16 %v1221
        %v1448 = vunpack.c.l.b16 %v1222
        %v1449 = vunpack.c.l.b16 %v1223
        %v1450 = vunpack.c.l.b16 %v1224
        %v1451 = vunpack.c.l.b16 %v1225
        %v1452 = vpack.c.b16 %v1437, %v1436
        %v1453 = vpack.c.b16 %v1439, %v1438
        %v1454 = vpack.c.b16 %v1441, %v1440
        %v1455 = vpack.c.b16 %v1443, %v1442
        %v1456 = vpack.c.b16 %v1445, %v1444
        %v1457 = vpack.c.b16 %v1447, %v1446
        %v1458 = vpack.c.b16 %v1449, %v1448
        %v1459 = vpack.c.b16 %v1451, %v1450
        %1468 = vmatpush.bf16.msra.mxu0 %v1459
        %1469 = vmatpush.bf16.msra.mxu0 %v1458
        %1470 = vmatpush.bf16.msra.mxu0 %v1457
        %1471 = vmatpush.bf16.msra.mxu0 %v1456
        %1472 = vmatpush.bf16.msra.mxu0 %v1455
        %1473 = vmatpush.bf16.msra.mxu0 %v1454
        %1474 = vmatpush.bf16.msra.mxu0 %v1453
        %1475 = vmatpush.bf16.msra.mxu0 %v1452
        %1476 = vmatmul.bf16.gmra.mxu0 %v1258
        %v1477 = vpop.f32.mrf.mxu0
        %v1478 = vadd.f32 0.0, %v1477
        %v1479 = vpop.f32.mrf.mxu0
        %v1480 = vadd.f32 0.0, %v1479
        %1481 = vmatmul.bf16.gmra.mxu0 %v1259
        %v1482 = vpop.f32.mrf.mxu0
        %v1483 = vadd.f32 0.0, %v1482
        %v1484 = vpop.f32.mrf.mxu0
        %v1485 = vadd.f32 0.0, %v1484
        %1486 = vmatmul.bf16.gmra.mxu0 %v1260
        %v1487 = vpop.f32.mrf.mxu0
        %v1488 = vadd.f32 0.0, %v1487
        %v1489 = vpop.f32.mrf.mxu0
        %v1490 = vadd.f32 0.0, %v1489
        %1491 = vmatmul.bf16.gmra.mxu0 %v1261
        %v1492 = vpop.f32.mrf.mxu0
        %v1493 = vadd.f32 0.0, %v1492
        %v1494 = vpop.f32.mrf.mxu0
        %v1495 = vadd.f32 0.0, %v1494
        %1496 = vdwg.mxu0
        %v1513 = vunpack.c.l.b16 %v1226
        %v1514 = vunpack.c.l.b16 %v1227
        %v1515 = vunpack.c.l.b16 %v1228
        %v1516 = vunpack.c.l.b16 %v1229
        %v1517 = vunpack.c.l.b16 %v1230
        %v1518 = vunpack.c.l.b16 %v1231
        %v1519 = vunpack.c.l.b16 %v1232
        %v1520 = vunpack.c.l.b16 %v1233
        %v1521 = vunpack.c.l.b16 %v1234
        %v1522 = vunpack.c.l.b16 %v1235
        %v1523 = vunpack.c.l.b16 %v1236
        %v1524 = vunpack.c.l.b16 %v1237
        %v1525 = vunpack.c.l.b16 %v1238
        %v1526 = vunpack.c.l.b16 %v1239
        %v1527 = vunpack.c.l.b16 %v1240
        %v1528 = vunpack.c.l.b16 %v1241
        %v1529 = vpack.c.b16 %v1514, %v1513
        %v1530 = vpack.c.b16 %v1516, %v1515
        %v1531 = vpack.c.b16 %v1518, %v1517
        %v1532 = vpack.c.b16 %v1520, %v1519
        %v1533 = vpack.c.b16 %v1522, %v1521
        %v1534 = vpack.c.b16 %v1524, %v1523
        %v1535 = vpack.c.b16 %v1526, %v1525
        %v1536 = vpack.c.b16 %v1528, %v1527
        %1545 = vmatpush.bf16.msra.mxu0 %v1536
        %1546 = vmatpush.bf16.msra.mxu0 %v1535
        %1547 = vmatpush.bf16.msra.mxu0 %v1534
        %1548 = vmatpush.bf16.msra.mxu0 %v1533
        %1549 = vmatpush.bf16.msra.mxu0 %v1532
        %1550 = vmatpush.bf16.msra.mxu0 %v1531
        %1551 = vmatpush.bf16.msra.mxu0 %v1530
        %1552 = vmatpush.bf16.msra.mxu0 %v1529
        %1553 = vmatmul.bf16.gmra.mxu0 %v1258
        %v1554 = vpop.f32.mrf.mxu0
        %v1555 = vadd.f32 0.0, %v1554
        %v1556 = vpop.f32.mrf.mxu0
        %v1557 = vadd.f32 0.0, %v1556
        %1558 = vmatmul.bf16.gmra.mxu0 %v1259
        %v1559 = vpop.f32.mrf.mxu0
        %v1560 = vadd.f32 0.0, %v1559
        %v1561 = vpop.f32.mrf.mxu0
        %v1562 = vadd.f32 0.0, %v1561
        %1563 = vmatmul.bf16.gmra.mxu0 %v1260
        %v1564 = vpop.f32.mrf.mxu0
        %v1565 = vadd.f32 0.0, %v1564
        %v1566 = vpop.f32.mrf.mxu0
        %v1567 = vadd.f32 0.0, %v1566
        %1568 = vmatmul.bf16.gmra.mxu0 %v1261
        %v1569 = vpop.f32.mrf.mxu0
        %v1570 = vadd.f32 0.0, %v1569
        %v1571 = vpop.f32.mrf.mxu0
        %v1572 = vadd.f32 0.0, %v1571
        %1573 = vdwg.mxu0
        %v1574 = vld [vmem:[%s6] sm:$0xf]
        %v1575 = vld [vmem:[%s6 + $0x4] sm:$0xf]
        %v1576 = vld [vmem:[%s6 + $0x8] sm:$0xf]
        %v1577 = vld [vmem:[%s6 + $0xc] sm:$0xf]
        %v1578 = vld [vmem:[%s6 + $0x10] sm:$0xf]
        %v1579 = vld [vmem:[%s6 + $0x14] sm:$0xf]
        %v1580 = vld [vmem:[%s6 + $0x18] sm:$0xf]
        %v1581 = vld [vmem:[%s6 + $0x1c] sm:$0xf]
        %v1582 = vld [vmem:[%s6 + $0x20] sm:$0xf]
        %v1583 = vld [vmem:[%s6 + $0x24] sm:$0xf]
        %v1584 = vld [vmem:[%s6 + $0x28] sm:$0xf]
        %v1585 = vld [vmem:[%s6 + $0x2c] sm:$0xf]
        %v1586 = vld [vmem:[%s6 + $0x30] sm:$0xf]
        %v1587 = vld [vmem:[%s6 + $0x34] sm:$0xf]
        %v1588 = vld [vmem:[%s6 + $0x38] sm:$0xf]
        %v1589 = vld [vmem:[%s6 + $0x3c] sm:$0xf]
        %v1590 = vld [vmem:[%s6 + $0x40] sm:$0xf]
        %v1591 = vld [vmem:[%s6 + $0x44] sm:$0xf]
        %v1592 = vld [vmem:[%s6 + $0x48] sm:$0xf]
        %v1593 = vld [vmem:[%s6 + $0x4c] sm:$0xf]
        %v1594 = vld [vmem:[%s6 + $0x50] sm:$0xf]
        %v1595 = vld [vmem:[%s6 + $0x54] sm:$0xf]
        %v1596 = vld [vmem:[%s6 + $0x58] sm:$0xf]
        %v1597 = vld [vmem:[%s6 + $0x5c] sm:$0xf]
        %v1598 = vld [vmem:[%s6 + $0x60] sm:$0xf]
        %v1599 = vld [vmem:[%s6 + $0x64] sm:$0xf]
        %v1600 = vld [vmem:[%s6 + $0x68] sm:$0xf]
        %v1601 = vld [vmem:[%s6 + $0x6c] sm:$0xf]
        %v1602 = vld [vmem:[%s6 + $0x70] sm:$0xf]
        %v1603 = vld [vmem:[%s6 + $0x74] sm:$0xf]
        %v1604 = vld [vmem:[%s6 + $0x78] sm:$0xf]
        %v1605 = vld [vmem:[%s6 + $0x7c] sm:$0xf]
        %v1606 = vld [vmem:[%s6 + $0x80] sm:$0xf]
        %v1607 = vld [vmem:[%s6 + $0x84] sm:$0xf]
        %v1608 = vld [vmem:[%s6 + $0x88] sm:$0xf]
        %v1609 = vld [vmem:[%s6 + $0x8c] sm:$0xf]
        %v1610 = vld [vmem:[%s6 + $0x90] sm:$0xf]
        %v1611 = vld [vmem:[%s6 + $0x94] sm:$0xf]
        %v1612 = vld [vmem:[%s6 + $0x98] sm:$0xf]
        %v1613 = vld [vmem:[%s6 + $0x9c] sm:$0xf]
        %v1614 = vld [vmem:[%s6 + $0xa0] sm:$0xf]
        %v1615 = vld [vmem:[%s6 + $0xa4] sm:$0xf]
        %v1616 = vld [vmem:[%s6 + $0xa8] sm:$0xf]
        %v1617 = vld [vmem:[%s6 + $0xac] sm:$0xf]
        %v1618 = vld [vmem:[%s6 + $0xb0] sm:$0xf]
        %v1619 = vld [vmem:[%s6 + $0xb4] sm:$0xf]
        %v1620 = vld [vmem:[%s6 + $0xb8] sm:$0xf]
        %v1621 = vld [vmem:[%s6 + $0xbc] sm:$0xf]
        %v1622 = vld [vmem:[%s6 + $0xc0] sm:$0xf]
        %v1623 = vld [vmem:[%s6 + $0xc4] sm:$0xf]
        %v1624 = vld [vmem:[%s6 + $0xc8] sm:$0xf]
        %v1625 = vld [vmem:[%s6 + $0xcc] sm:$0xf]
        %v1626 = vld [vmem:[%s6 + $0xd0] sm:$0xf]
        %v1627 = vld [vmem:[%s6 + $0xd4] sm:$0xf]
        %v1628 = vld [vmem:[%s6 + $0xd8] sm:$0xf]
        %v1629 = vld [vmem:[%s6 + $0xdc] sm:$0xf]
        %v1630 = vld [vmem:[%s6 + $0xe0] sm:$0xf]
        %v1631 = vld [vmem:[%s6 + $0xe4] sm:$0xf]
        %v1632 = vld [vmem:[%s6 + $0xe8] sm:$0xf]
        %v1633 = vld [vmem:[%s6 + $0xec] sm:$0xf]
        %v1634 = vld [vmem:[%s6 + $0xf0] sm:$0xf]
        %v1635 = vld [vmem:[%s6 + $0xf4] sm:$0xf]
        %v1636 = vld [vmem:[%s6 + $0xf8] sm:$0xf]
        %v1637 = vld [vmem:[%s6 + $0xfc] sm:$0xf]
        %v1654 = vunpack.c.l.b16 %v1574
        %v1655 = vunpack.c.l.b16 %v1575
        %v1656 = vunpack.c.l.b16 %v1576
        %v1657 = vunpack.c.l.b16 %v1577
        %v1658 = vunpack.c.l.b16 %v1578
        %v1659 = vunpack.c.l.b16 %v1579
        %v1660 = vunpack.c.l.b16 %v1580
        %v1661 = vunpack.c.l.b16 %v1581
        %v1662 = vunpack.c.l.b16 %v1582
        %v1663 = vunpack.c.l.b16 %v1583
        %v1664 = vunpack.c.l.b16 %v1584
        %v1665 = vunpack.c.l.b16 %v1585
        %v1666 = vunpack.c.l.b16 %v1586
        %v1667 = vunpack.c.l.b16 %v1587
        %v1668 = vunpack.c.l.b16 %v1588
        %v1669 = vunpack.c.l.b16 %v1589
        %v1670 = vpack.c.b16 %v1655, %v1654
        %v1671 = vpack.c.b16 %v1657, %v1656
        %v1672 = vpack.c.b16 %v1659, %v1658
        %v1673 = vpack.c.b16 %v1661, %v1660
        %v1674 = vpack.c.b16 %v1663, %v1662
        %v1675 = vpack.c.b16 %v1665, %v1664
        %v1676 = vpack.c.b16 %v1667, %v1666
        %v1677 = vpack.c.b16 %v1669, %v1668
        %1686 = vmatpush.bf16.msra.mxu0 %v1677
        %1687 = vmatpush.bf16.msra.mxu0 %v1676
        %1688 = vmatpush.bf16.msra.mxu0 %v1675
        %1689 = vmatpush.bf16.msra.mxu0 %v1674
        %1690 = vmatpush.bf16.msra.mxu0 %v1673
        %1691 = vmatpush.bf16.msra.mxu0 %v1672
        %1692 = vmatpush.bf16.msra.mxu0 %v1671
        %1693 = vmatpush.bf16.msra.mxu0 %v1670
        %1694 = vmatmul.bf16.gmra.mxu0 %v1258
        %v1695 = vpop.f32.mrf.mxu0
        %v1696 = vadd.f32 0.0, %v1695
        %v1697 = vpop.f32.mrf.mxu0
        %v1698 = vadd.f32 0.0, %v1697
        %1699 = vmatmul.bf16.gmra.mxu0 %v1259
        %v1700 = vpop.f32.mrf.mxu0
        %v1701 = vadd.f32 0.0, %v1700
        %v1702 = vpop.f32.mrf.mxu0
        %v1703 = vadd.f32 0.0, %v1702
        %1704 = vmatmul.bf16.gmra.mxu0 %v1260
        %v1705 = vpop.f32.mrf.mxu0
        %v1706 = vadd.f32 0.0, %v1705
        %v1707 = vpop.f32.mrf.mxu0
        %v1708 = vadd.f32 0.0, %v1707
        %1709 = vmatmul.bf16.gmra.mxu0 %v1261
        %v1710 = vpop.f32.mrf.mxu0
        %v1711 = vadd.f32 0.0, %v1710
        %v1712 = vpop.f32.mrf.mxu0
        %v1713 = vadd.f32 0.0, %v1712
        %1714 = vdwg.mxu0
        %v1731 = vunpack.c.l.b16 %v1590
        %v1732 = vunpack.c.l.b16 %v1591
        %v1733 = vunpack.c.l.b16 %v1592
        %v1734 = vunpack.c.l.b16 %v1593
        %v1735 = vunpack.c.l.b16 %v1594
        %v1736 = vunpack.c.l.b16 %v1595
        %v1737 = vunpack.c.l.b16 %v1596
        %v1738 = vunpack.c.l.b16 %v1597
        %v1739 = vunpack.c.l.b16 %v1598
        %v1740 = vunpack.c.l.b16 %v1599
        %v1741 = vunpack.c.l.b16 %v1600
        %v1742 = vunpack.c.l.b16 %v1601
        %v1743 = vunpack.c.l.b16 %v1602
        %v1744 = vunpack.c.l.b16 %v1603
        %v1745 = vunpack.c.l.b16 %v1604
        %v1746 = vunpack.c.l.b16 %v1605
        %v1747 = vpack.c.b16 %v1732, %v1731
        %v1748 = vpack.c.b16 %v1734, %v1733
        %v1749 = vpack.c.b16 %v1736, %v1735
        %v1750 = vpack.c.b16 %v1738, %v1737
        %v1751 = vpack.c.b16 %v1740, %v1739
        %v1752 = vpack.c.b16 %v1742, %v1741
        %v1753 = vpack.c.b16 %v1744, %v1743
        %v1754 = vpack.c.b16 %v1746, %v1745
        %1763 = vmatpush.bf16.msra.mxu0 %v1754
        %1764 = vmatpush.bf16.msra.mxu0 %v1753
        %1765 = vmatpush.bf16.msra.mxu0 %v1752
        %1766 = vmatpush.bf16.msra.mxu0 %v1751
        %1767 = vmatpush.bf16.msra.mxu0 %v1750
        %1768 = vmatpush.bf16.msra.mxu0 %v1749
        %1769 = vmatpush.bf16.msra.mxu0 %v1748
        %1770 = vmatpush.bf16.msra.mxu0 %v1747
        %1771 = vmatmul.bf16.gmra.mxu0 %v1258
        %v1772 = vpop.f32.mrf.mxu0
        %v1773 = vadd.f32 0.0, %v1772
        %v1774 = vpop.f32.mrf.mxu0
        %v1775 = vadd.f32 0.0, %v1774
        %1776 = vmatmul.bf16.gmra.mxu0 %v1259
        %v1777 = vpop.f32.mrf.mxu0
        %v1778 = vadd.f32 0.0, %v1777
        %v1779 = vpop.f32.mrf.mxu0
        %v1780 = vadd.f32 0.0, %v1779
        %1781 = vmatmul.bf16.gmra.mxu0 %v1260
        %v1782 = vpop.f32.mrf.mxu0
        %v1783 = vadd.f32 0.0, %v1782
        %v1784 = vpop.f32.mrf.mxu0
        %v1785 = vadd.f32 0.0, %v1784
        %1786 = vmatmul.bf16.gmra.mxu0 %v1261
        %v1787 = vpop.f32.mrf.mxu0
        %v1788 = vadd.f32 0.0, %v1787
        %v1789 = vpop.f32.mrf.mxu0
        %v1790 = vadd.f32 0.0, %v1789
        %1791 = vdwg.mxu0
        %v1808 = vunpack.c.l.b16 %v1606
        %v1809 = vunpack.c.l.b16 %v1607
        %v1810 = vunpack.c.l.b16 %v1608
        %v1811 = vunpack.c.l.b16 %v1609
        %v1812 = vunpack.c.l.b16 %v1610
        %v1813 = vunpack.c.l.b16 %v1611
        %v1814 = vunpack.c.l.b16 %v1612
        %v1815 = vunpack.c.l.b16 %v1613
        %v1816 = vunpack.c.l.b16 %v1614
        %v1817 = vunpack.c.l.b16 %v1615
        %v1818 = vunpack.c.l.b16 %v1616
        %v1819 = vunpack.c.l.b16 %v1617
        %v1820 = vunpack.c.l.b16 %v1618
        %v1821 = vunpack.c.l.b16 %v1619
        %v1822 = vunpack.c.l.b16 %v1620
        %v1823 = vunpack.c.l.b16 %v1621
        %v1824 = vpack.c.b16 %v1809, %v1808
        %v1825 = vpack.c.b16 %v1811, %v1810
        %v1826 = vpack.c.b16 %v1813, %v1812
        %v1827 = vpack.c.b16 %v1815, %v1814
        %v1828 = vpack.c.b16 %v1817, %v1816
        %v1829 = vpack.c.b16 %v1819, %v1818
        %v1830 = vpack.c.b16 %v1821, %v1820
        %v1831 = vpack.c.b16 %v1823, %v1822
        %1840 = vmatpush.bf16.msra.mxu0 %v1831
        %1841 = vmatpush.bf16.msra.mxu0 %v1830
        %1842 = vmatpush.bf16.msra.mxu0 %v1829
        %1843 = vmatpush.bf16.msra.mxu0 %v1828
        %1844 = vmatpush.bf16.msra.mxu0 %v1827
        %1845 = vmatpush.bf16.msra.mxu0 %v1826
        %1846 = vmatpush.bf16.msra.mxu0 %v1825
        %1847 = vmatpush.bf16.msra.mxu0 %v1824
        %1848 = vmatmul.bf16.gmra.mxu0 %v1258
        %v1849 = vpop.f32.mrf.mxu0
        %v1850 = vadd.f32 0.0, %v1849
        %v1851 = vpop.f32.mrf.mxu0
        %v1852 = vadd.f32 0.0, %v1851
        %1853 = vmatmul.bf16.gmra.mxu0 %v1259
        %v1854 = vpop.f32.mrf.mxu0
        %v1855 = vadd.f32 0.0, %v1854
        %v1856 = vpop.f32.mrf.mxu0
        %v1857 = vadd.f32 0.0, %v1856
        %1858 = vmatmul.bf16.gmra.mxu0 %v1260
        %v1859 = vpop.f32.mrf.mxu0
        %v1860 = vadd.f32 0.0, %v1859
        %v1861 = vpop.f32.mrf.mxu0
        %v1862 = vadd.f32 0.0, %v1861
        %1863 = vmatmul.bf16.gmra.mxu0 %v1261
        %v1864 = vpop.f32.mrf.mxu0
        %v1865 = vadd.f32 0.0, %v1864
        %v1866 = vpop.f32.mrf.mxu0
        %v1867 = vadd.f32 0.0, %v1866
        %1868 = vdwg.mxu0
        %v1885 = vunpack.c.l.b16 %v1622
        %v1886 = vunpack.c.l.b16 %v1623
        %v1887 = vunpack.c.l.b16 %v1624
        %v1888 = vunpack.c.l.b16 %v1625
        %v1889 = vunpack.c.l.b16 %v1626
        %v1890 = vunpack.c.l.b16 %v1627
        %v1891 = vunpack.c.l.b16 %v1628
        %v1892 = vunpack.c.l.b16 %v1629
        %v1893 = vunpack.c.l.b16 %v1630
        %v1894 = vunpack.c.l.b16 %v1631
        %v1895 = vunpack.c.l.b16 %v1632
        %v1896 = vunpack.c.l.b16 %v1633
        %v1897 = vunpack.c.l.b16 %v1634
        %v1898 = vunpack.c.l.b16 %v1635
        %v1899 = vunpack.c.l.b16 %v1636
        %v1900 = vunpack.c.l.b16 %v1637
        %v1901 = vpack.c.b16 %v1886, %v1885
        %v1902 = vpack.c.b16 %v1888, %v1887
        %v1903 = vpack.c.b16 %v1890, %v1889
        %v1904 = vpack.c.b16 %v1892, %v1891
        %v1905 = vpack.c.b16 %v1894, %v1893
        %v1906 = vpack.c.b16 %v1896, %v1895
        %v1907 = vpack.c.b16 %v1898, %v1897
        %v1908 = vpack.c.b16 %v1900, %v1899
        %1917 = vmatpush.bf16.msra.mxu0 %v1908
        %1918 = vmatpush.bf16.msra.mxu0 %v1907
        %1919 = vmatpush.bf16.msra.mxu0 %v1906
        %1920 = vmatpush.bf16.msra.mxu0 %v1905
        %1921 = vmatpush.bf16.msra.mxu0 %v1904
        %1922 = vmatpush.bf16.msra.mxu0 %v1903
        %1923 = vmatpush.bf16.msra.mxu0 %v1902
        %1924 = vmatpush.bf16.msra.mxu0 %v1901
        %1925 = vmatmul.bf16.gmra.mxu0 %v1258
        %v1926 = vpop.f32.mrf.mxu0
        %v1927 = vadd.f32 0.0, %v1926
        %v1928 = vpop.f32.mrf.mxu0
        %v1929 = vadd.f32 0.0, %v1928
        %1930 = vmatmul.bf16.gmra.mxu0 %v1259
        %v1931 = vpop.f32.mrf.mxu0
        %v1932 = vadd.f32 0.0, %v1931
        %v1933 = vpop.f32.mrf.mxu0
        %v1934 = vadd.f32 0.0, %v1933
        %1935 = vmatmul.bf16.gmra.mxu0 %v1260
        %v1936 = vpop.f32.mrf.mxu0
        %v1937 = vadd.f32 0.0, %v1936
        %v1938 = vpop.f32.mrf.mxu0
        %v1939 = vadd.f32 0.0, %v1938
        %1940 = vmatmul.bf16.gmra.mxu0 %v1261
        %v1941 = vpop.f32.mrf.mxu0
        %v1942 = vadd.f32 0.0, %v1941
        %v1943 = vpop.f32.mrf.mxu0
        %v1944 = vadd.f32 0.0, %v1943
        %1945 = vdwg.mxu0
        %v1946 = vpack.c.bf16 %v928, %v928
        %v1947 = vpack.c.bf16 %v930, %v930
        %v1948 = vpack.c.bf16 %v933, %v933
        %v1949 = vpack.c.bf16 %v935, %v935
        %v1950 = vpack.c.bf16 %v938, %v938
        %v1951 = vpack.c.bf16 %v940, %v940
        %v1952 = vpack.c.bf16 %v943, %v943
        %v1953 = vpack.c.bf16 %v945, %v945
        %v1954 = vpack.c.bf16 %v1005, %v1005
        %v1955 = vpack.c.bf16 %v1007, %v1007
        %v1956 = vpack.c.bf16 %v1010, %v1010
        %v1957 = vpack.c.bf16 %v1012, %v1012
        %v1958 = vpack.c.bf16 %v1015, %v1015
        %v1959 = vpack.c.bf16 %v1017, %v1017
        %v1960 = vpack.c.bf16 %v1020, %v1020
        %v1961 = vpack.c.bf16 %v1022, %v1022
        %v1962 = vpack.c.bf16 %v1082, %v1082
        %v1963 = vpack.c.bf16 %v1084, %v1084
        %v1964 = vpack.c.bf16 %v1087, %v1087
        %v1965 = vpack.c.bf16 %v1089, %v1089
        %v1966 = vpack.c.bf16 %v1092, %v1092
        %v1967 = vpack.c.bf16 %v1094, %v1094
        %v1968 = vpack.c.bf16 %v1097, %v1097
        %v1969 = vpack.c.bf16 %v1099, %v1099
        %v1970 = vpack.c.bf16 %v1159, %v1159
        %v1971 = vpack.c.bf16 %v1161, %v1161
        %v1972 = vpack.c.bf16 %v1164, %v1164
        %v1973 = vpack.c.bf16 %v1166, %v1166
        %v1974 = vpack.c.bf16 %v1169, %v1169
        %v1975 = vpack.c.bf16 %v1171, %v1171
        %v1976 = vpack.c.bf16 %v1174, %v1174
        %v1977 = vpack.c.bf16 %v1176, %v1176
        %v1978 = vpack.c.bf16 %v1324, %v1324
        %v1979 = vpack.c.bf16 %v1326, %v1326
        %v1980 = vpack.c.bf16 %v1329, %v1329
        %v1981 = vpack.c.bf16 %v1331, %v1331
        %v1982 = vpack.c.bf16 %v1334, %v1334
        %v1983 = vpack.c.bf16 %v1336, %v1336
        %v1984 = vpack.c.bf16 %v1339, %v1339
        %v1985 = vpack.c.bf16 %v1341, %v1341
        %v1986 = vpack.c.bf16 %v1401, %v1401
        %v1987 = vpack.c.bf16 %v1403, %v1403
        %v1988 = vpack.c.bf16 %v1406, %v1406
        %v1989 = vpack.c.bf16 %v1408, %v1408
        %v1990 = vpack.c.bf16 %v1411, %v1411
        %v1991 = vpack.c.bf16 %v1413, %v1413
        %v1992 = vpack.c.bf16 %v1416, %v1416
        %v1993 = vpack.c.bf16 %v1418, %v1418
        %v1994 = vpack.c.bf16 %v1478, %v1478
        %v1995 = vpack.c.bf16 %v1480, %v1480
        %v1996 = vpack.c.bf16 %v1483, %v1483
        %v1997 = vpack.c.bf16 %v1485, %v1485
        %v1998 = vpack.c.bf16 %v1488, %v1488
        %v1999 = vpack.c.bf16 %v1490, %v1490
        %v2000 = vpack.c.bf16 %v1493, %v1493
        %v2001 = vpack.c.bf16 %v1495, %v1495
        %v2002 = vpack.c.bf16 %v1555, %v1555
        %v2003 = vpack.c.bf16 %v1557, %v1557
        %v2004 = vpack.c.bf16 %v1560, %v1560
        %v2005 = vpack.c.bf16 %v1562, %v1562
        %v2006 = vpack.c.bf16 %v1565, %v1565
        %v2007 = vpack.c.bf16 %v1567, %v1567
        %v2008 = vpack.c.bf16 %v1570, %v1570
        %v2009 = vpack.c.bf16 %v1572, %v1572
        %v2018 = vunpack.c.l.b16 %v1946
        %v2019 = vunpack.c.l.b16 %v1947
        %v2020 = vunpack.c.l.b16 %v1948
        %v2021 = vunpack.c.l.b16 %v1949
        %v2022 = vunpack.c.l.b16 %v1950
        %v2023 = vunpack.c.l.b16 %v1951
        %v2024 = vunpack.c.l.b16 %v1952
        %v2025 = vunpack.c.l.b16 %v1953
        %v2026 = vpack.c.b16 %v2019, %v2018
        %v2027 = vpack.c.b16 %v2021, %v2020
        %v2028 = vpack.c.b16 %v2023, %v2022
        %v2029 = vpack.c.b16 %v2025, %v2024
        %v2038 = vunpack.c.l.b16 %v1978
        %v2039 = vunpack.c.l.b16 %v1979
        %v2040 = vunpack.c.l.b16 %v1980
        %v2041 = vunpack.c.l.b16 %v1981
        %v2042 = vunpack.c.l.b16 %v1982
        %v2043 = vunpack.c.l.b16 %v1983
        %v2044 = vunpack.c.l.b16 %v1984
        %v2045 = vunpack.c.l.b16 %v1985
        %v2046 = vpack.c.b16 %v2039, %v2038
        %v2047 = vpack.c.b16 %v2041, %v2040
        %v2048 = vpack.c.b16 %v2043, %v2042
        %v2049 = vpack.c.b16 %v2045, %v2044
        %vm2050 = vcmask 523264
        %v2052 = vsel %vm2050, %v2026, 0
        %v2055 = vsel %vm2050, %v2027, 0
        %v2058 = vsel %vm2050, %v2028, 0
        %v2061 = vsel %vm2050, %v2029, 0
        %v2064 = vsel %vm2050, %v2046, 0
        %v2067 = vsel %vm2050, %v2047, 0
        %v2070 = vsel %vm2050, %v2048, 0
        %v2073 = vsel %vm2050, %v2049, 0
        %2075 = vmatpush.bf16.xpose.msra.mxu0 0
        %2076 = vmatpush.bf16.xpose.msra.mxu0 0
        %2077 = vmatpush.bf16.xpose.msra.mxu0 0
        %2078 = vmatpush.bf16.xpose.msra.mxu0 0
        %2079 = vmatpush.bf16.xpose.msra.mxu0 %v2073
        %2080 = vmatpush.bf16.xpose.msra.mxu0 %v2070
        %2081 = vmatpush.bf16.xpose.msra.mxu0 %v2067
        %2082 = vmatpush.bf16.xpose.msra.mxu0 %v2064
        %2083 = vmatmul.bf16.gmra.mxu0 %v2052
        %v2084 = vpop.f32.mrf.mxu0
        %v2085 = vadd.f32 0.0, %v2084
        %v2086 = vpop.f32.mrf.mxu0
        %v2087 = vadd.f32 0.0, %v2086
        %2088 = vmatmul.bf16.gmra.mxu0 %v2055
        %v2089 = vpop.f32.mrf.mxu0
        %v2090 = vadd.f32 0.0, %v2089
        %v2091 = vpop.f32.mrf.mxu0
        %v2092 = vadd.f32 0.0, %v2091
        %2093 = vmatmul.bf16.gmra.mxu0 %v2058
        %v2094 = vpop.f32.mrf.mxu0
        %v2095 = vadd.f32 0.0, %v2094
        %v2096 = vpop.f32.mrf.mxu0
        %v2097 = vadd.f32 0.0, %v2096
        %2098 = vmatmul.bf16.gmra.mxu0 %v2061
        %v2099 = vpop.f32.mrf.mxu0
        %v2100 = vadd.f32 0.0, %v2099
        %v2101 = vpop.f32.mrf.mxu0
        %v2102 = vadd.f32 0.0, %v2101
        %2103 = vdwg.mxu0
        %v2112 = vunpack.c.l.b16 %v1954
        %v2113 = vunpack.c.l.b16 %v1955
        %v2114 = vunpack.c.l.b16 %v1956
        %v2115 = vunpack.c.l.b16 %v1957
        %v2116 = vunpack.c.l.b16 %v1958
        %v2117 = vunpack.c.l.b16 %v1959
        %v2118 = vunpack.c.l.b16 %v1960
        %v2119 = vunpack.c.l.b16 %v1961
        %v2120 = vpack.c.b16 %v2113, %v2112
        %v2121 = vpack.c.b16 %v2115, %v2114
        %v2122 = vpack.c.b16 %v2117, %v2116
        %v2123 = vpack.c.b16 %v2119, %v2118
        %v2132 = vunpack.c.l.b16 %v1986
        %v2133 = vunpack.c.l.b16 %v1987
        %v2134 = vunpack.c.l.b16 %v1988
        %v2135 = vunpack.c.l.b16 %v1989
        %v2136 = vunpack.c.l.b16 %v1990
        %v2137 = vunpack.c.l.b16 %v1991
        %v2138 = vunpack.c.l.b16 %v1992
        %v2139 = vunpack.c.l.b16 %v1993
        %v2140 = vpack.c.b16 %v2133, %v2132
        %v2141 = vpack.c.b16 %v2135, %v2134
        %v2142 = vpack.c.b16 %v2137, %v2136
        %v2143 = vpack.c.b16 %v2139, %v2138
        %v2145 = vsel %vm2050, %v2120, 0
        %v2148 = vsel %vm2050, %v2121, 0
        %v2151 = vsel %vm2050, %v2122, 0
        %v2154 = vsel %vm2050, %v2123, 0
        %v2157 = vsel %vm2050, %v2140, 0
        %v2160 = vsel %vm2050, %v2141, 0
        %v2163 = vsel %vm2050, %v2142, 0
        %v2166 = vsel %vm2050, %v2143, 0
        %2168 = vmatpush.bf16.xpose.msra.mxu0 0
        %2169 = vmatpush.bf16.xpose.msra.mxu0 0
        %2170 = vmatpush.bf16.xpose.msra.mxu0 0
        %2171 = vmatpush.bf16.xpose.msra.mxu0 0
        %2172 = vmatpush.bf16.xpose.msra.mxu0 %v2166
        %2173 = vmatpush.bf16.xpose.msra.mxu0 %v2163
        %2174 = vmatpush.bf16.xpose.msra.mxu0 %v2160
        %2175 = vmatpush.bf16.xpose.msra.mxu0 %v2157
        %2176 = vmatmul.bf16.gmra.mxu0 %v2145
        %v2177 = vpop.f32.mrf.mxu0
        %v2178 = vadd.f32 0.0, %v2177
        %v2179 = vpop.f32.mrf.mxu0
        %v2180 = vadd.f32 0.0, %v2179
        %2181 = vmatmul.bf16.gmra.mxu0 %v2148
        %v2182 = vpop.f32.mrf.mxu0
        %v2183 = vadd.f32 0.0, %v2182
        %v2184 = vpop.f32.mrf.mxu0
        %v2185 = vadd.f32 0.0, %v2184
        %2186 = vmatmul.bf16.gmra.mxu0 %v2151
        %v2187 = vpop.f32.mrf.mxu0
        %v2188 = vadd.f32 0.0, %v2187
        %v2189 = vpop.f32.mrf.mxu0
        %v2190 = vadd.f32 0.0, %v2189
        %2191 = vmatmul.bf16.gmra.mxu0 %v2154
        %v2192 = vpop.f32.mrf.mxu0
        %v2193 = vadd.f32 0.0, %v2192
        %v2194 = vpop.f32.mrf.mxu0
        %v2195 = vadd.f32 0.0, %v2194
        %2196 = vdwg.mxu0
        %v2205 = vunpack.c.l.b16 %v1962
        %v2206 = vunpack.c.l.b16 %v1963
        %v2207 = vunpack.c.l.b16 %v1964
        %v2208 = vunpack.c.l.b16 %v1965
        %v2209 = vunpack.c.l.b16 %v1966
        %v2210 = vunpack.c.l.b16 %v1967
        %v2211 = vunpack.c.l.b16 %v1968
        %v2212 = vunpack.c.l.b16 %v1969
        %v2213 = vpack.c.b16 %v2206, %v2205
        %v2214 = vpack.c.b16 %v2208, %v2207
        %v2215 = vpack.c.b16 %v2210, %v2209
        %v2216 = vpack.c.b16 %v2212, %v2211
        %v2225 = vunpack.c.l.b16 %v1994
        %v2226 = vunpack.c.l.b16 %v1995
        %v2227 = vunpack.c.l.b16 %v1996
        %v2228 = vunpack.c.l.b16 %v1997
        %v2229 = vunpack.c.l.b16 %v1998
        %v2230 = vunpack.c.l.b16 %v1999
        %v2231 = vunpack.c.l.b16 %v2000
        %v2232 = vunpack.c.l.b16 %v2001
        %v2233 = vpack.c.b16 %v2226, %v2225
        %v2234 = vpack.c.b16 %v2228, %v2227
        %v2235 = vpack.c.b16 %v2230, %v2229
        %v2236 = vpack.c.b16 %v2232, %v2231
        %v2238 = vsel %vm2050, %v2213, 0
        %v2241 = vsel %vm2050, %v2214, 0
        %v2244 = vsel %vm2050, %v2215, 0
        %v2247 = vsel %vm2050, %v2216, 0
        %v2250 = vsel %vm2050, %v2233, 0
        %v2253 = vsel %vm2050, %v2234, 0
        %v2256 = vsel %vm2050, %v2235, 0
        %v2259 = vsel %vm2050, %v2236, 0
        %2261 = vmatpush.bf16.xpose.msra.mxu0 0
        %2262 = vmatpush.bf16.xpose.msra.mxu0 0
        %2263 = vmatpush.bf16.xpose.msra.mxu0 0
        %2264 = vmatpush.bf16.xpose.msra.mxu0 0
        %2265 = vmatpush.bf16.xpose.msra.mxu0 %v2259
        %2266 = vmatpush.bf16.xpose.msra.mxu0 %v2256
        %2267 = vmatpush.bf16.xpose.msra.mxu0 %v2253
        %2268 = vmatpush.bf16.xpose.msra.mxu0 %v2250
        %2269 = vmatmul.bf16.gmra.mxu0 %v2238
        %v2270 = vpop.f32.mrf.mxu0
        %v2271 = vadd.f32 0.0, %v2270
        %v2272 = vpop.f32.mrf.mxu0
        %v2273 = vadd.f32 0.0, %v2272
        %2274 = vmatmul.bf16.gmra.mxu0 %v2241
        %v2275 = vpop.f32.mrf.mxu0
        %v2276 = vadd.f32 0.0, %v2275
        %v2277 = vpop.f32.mrf.mxu0
        %v2278 = vadd.f32 0.0, %v2277
        %2279 = vmatmul.bf16.gmra.mxu0 %v2244
        %v2280 = vpop.f32.mrf.mxu0
        %v2281 = vadd.f32 0.0, %v2280
        %v2282 = vpop.f32.mrf.mxu0
        %v2283 = vadd.f32 0.0, %v2282
        %2284 = vmatmul.bf16.gmra.mxu0 %v2247
        %v2285 = vpop.f32.mrf.mxu0
        %v2286 = vadd.f32 0.0, %v2285
        %v2287 = vpop.f32.mrf.mxu0
        %v2288 = vadd.f32 0.0, %v2287
        %2289 = vdwg.mxu0
        %v2298 = vunpack.c.l.b16 %v1970
        %v2299 = vunpack.c.l.b16 %v1971
        %v2300 = vunpack.c.l.b16 %v1972
        %v2301 = vunpack.c.l.b16 %v1973
        %v2302 = vunpack.c.l.b16 %v1974
        %v2303 = vunpack.c.l.b16 %v1975
        %v2304 = vunpack.c.l.b16 %v1976
        %v2305 = vunpack.c.l.b16 %v1977
        %v2306 = vpack.c.b16 %v2299, %v2298
        %v2307 = vpack.c.b16 %v2301, %v2300
        %v2308 = vpack.c.b16 %v2303, %v2302
        %v2309 = vpack.c.b16 %v2305, %v2304
        %v2318 = vunpack.c.l.b16 %v2002
        %v2319 = vunpack.c.l.b16 %v2003
        %v2320 = vunpack.c.l.b16 %v2004
        %v2321 = vunpack.c.l.b16 %v2005
        %v2322 = vunpack.c.l.b16 %v2006
        %v2323 = vunpack.c.l.b16 %v2007
        %v2324 = vunpack.c.l.b16 %v2008
        %v2325 = vunpack.c.l.b16 %v2009
        %v2326 = vpack.c.b16 %v2319, %v2318
        %v2327 = vpack.c.b16 %v2321, %v2320
        %v2328 = vpack.c.b16 %v2323, %v2322
        %v2329 = vpack.c.b16 %v2325, %v2324
        %v2331 = vsel %vm2050, %v2306, 0
        %v2334 = vsel %vm2050, %v2307, 0
        %v2337 = vsel %vm2050, %v2308, 0
        %v2340 = vsel %vm2050, %v2309, 0
        %v2343 = vsel %vm2050, %v2326, 0
        %v2346 = vsel %vm2050, %v2327, 0
        %v2349 = vsel %vm2050, %v2328, 0
        %v2352 = vsel %vm2050, %v2329, 0
        %2354 = vmatpush.bf16.xpose.msra.mxu0 0
        %2355 = vmatpush.bf16.xpose.msra.mxu0 0
        %2356 = vmatpush.bf16.xpose.msra.mxu0 0
        %2357 = vmatpush.bf16.xpose.msra.mxu0 0
        %2358 = vmatpush.bf16.xpose.msra.mxu0 %v2352
        %2359 = vmatpush.bf16.xpose.msra.mxu0 %v2349
        %2360 = vmatpush.bf16.xpose.msra.mxu0 %v2346
        %2361 = vmatpush.bf16.xpose.msra.mxu0 %v2343
        %2362 = vmatmul.bf16.gmra.mxu0 %v2331
        %v2363 = vpop.f32.mrf.mxu0
        %v2364 = vadd.f32 0.0, %v2363
        %v2365 = vpop.f32.mrf.mxu0
        %v2366 = vadd.f32 0.0, %v2365
        %2367 = vmatmul.bf16.gmra.mxu0 %v2334
        %v2368 = vpop.f32.mrf.mxu0
        %v2369 = vadd.f32 0.0, %v2368
        %v2370 = vpop.f32.mrf.mxu0
        %v2371 = vadd.f32 0.0, %v2370
        %2372 = vmatmul.bf16.gmra.mxu0 %v2337
        %v2373 = vpop.f32.mrf.mxu0
        %v2374 = vadd.f32 0.0, %v2373
        %v2375 = vpop.f32.mrf.mxu0
        %v2376 = vadd.f32 0.0, %v2375
        %2377 = vmatmul.bf16.gmra.mxu0 %v2340
        %v2378 = vpop.f32.mrf.mxu0
        %v2379 = vadd.f32 0.0, %v2378
        %v2380 = vpop.f32.mrf.mxu0
        %v2381 = vadd.f32 0.0, %v2380
        %2382 = vdwg.mxu0
        %v2383 = vsel %vm2050, %v2085, -inf
        %2384 = vmax.xlane.f32.xlu0 %v2383
        %v2385 = vpop.xlane.xlu0 %2384
        %v2386 = vsel %vm2050, %v2087, -inf
        %2387 = vmax.xlane.f32.xlu0 %v2386
        %v2388 = vpop.xlane.xlu0 %2387
        %v2389 = vsel %vm2050, %v2090, -inf
        %2390 = vmax.xlane.f32.xlu0 %v2389
        %v2391 = vpop.xlane.xlu0 %2390
        %v2392 = vsel %vm2050, %v2092, -inf
        %2393 = vmax.xlane.f32.xlu0 %v2392
        %v2394 = vpop.xlane.xlu0 %2393
        %v2395 = vsel %vm2050, %v2095, -inf
        %2396 = vmax.xlane.f32.xlu0 %v2395
        %v2397 = vpop.xlane.xlu0 %2396
        %v2398 = vsel %vm2050, %v2097, -inf
        %2399 = vmax.xlane.f32.xlu0 %v2398
        %v2400 = vpop.xlane.xlu0 %2399
        %v2401 = vsel %vm2050, %v2100, -inf
        %2402 = vmax.xlane.f32.xlu0 %v2401
        %v2403 = vpop.xlane.xlu0 %2402
        %v2404 = vsel %vm2050, %v2102, -inf
        %2405 = vmax.xlane.f32.xlu0 %v2404
        %v2406 = vpop.xlane.xlu0 %2405
        %v2407 = vsel %vm2050, %v2178, -inf
        %2408 = vmax.xlane.f32.xlu0 %v2407
        %v2409 = vpop.xlane.xlu0 %2408
        %v2410 = vsel %vm2050, %v2180, -inf
        %2411 = vmax.xlane.f32.xlu0 %v2410
        %v2412 = vpop.xlane.xlu0 %2411
        %v2413 = vsel %vm2050, %v2183, -inf
        %2414 = vmax.xlane.f32.xlu0 %v2413
        %v2415 = vpop.xlane.xlu0 %2414
        %v2416 = vsel %vm2050, %v2185, -inf
        %2417 = vmax.xlane.f32.xlu0 %v2416
        %v2418 = vpop.xlane.xlu0 %2417
        %v2419 = vsel %vm2050, %v2188, -inf
        %2420 = vmax.xlane.f32.xlu0 %v2419
        %v2421 = vpop.xlane.xlu0 %2420
        %v2422 = vsel %vm2050, %v2190, -inf
        %2423 = vmax.xlane.f32.xlu0 %v2422
        %v2424 = vpop.xlane.xlu0 %2423
        %v2425 = vsel %vm2050, %v2193, -inf
        %2426 = vmax.xlane.f32.xlu0 %v2425
        %v2427 = vpop.xlane.xlu0 %2426
        %v2428 = vsel %vm2050, %v2195, -inf
        %2429 = vmax.xlane.f32.xlu0 %v2428
        %v2430 = vpop.xlane.xlu0 %2429
        %v2431 = vsel %vm2050, %v2271, -inf
        %2432 = vmax.xlane.f32.xlu0 %v2431
        %v2433 = vpop.xlane.xlu0 %2432
        %v2434 = vsel %vm2050, %v2273, -inf
        %2435 = vmax.xlane.f32.xlu0 %v2434
        %v2436 = vpop.xlane.xlu0 %2435
        %v2437 = vsel %vm2050, %v2276, -inf
        %2438 = vmax.xlane.f32.xlu0 %v2437
        %v2439 = vpop.xlane.xlu0 %2438
        %v2440 = vsel %vm2050, %v2278, -inf
        %2441 = vmax.xlane.f32.xlu0 %v2440
        %v2442 = vpop.xlane.xlu0 %2441
        %v2443 = vsel %vm2050, %v2281, -inf
        %2444 = vmax.xlane.f32.xlu0 %v2443
        %v2445 = vpop.xlane.xlu0 %2444
        %v2446 = vsel %vm2050, %v2283, -inf
        %2447 = vmax.xlane.f32.xlu0 %v2446
        %v2448 = vpop.xlane.xlu0 %2447
        %v2449 = vsel %vm2050, %v2286, -inf
        %2450 = vmax.xlane.f32.xlu0 %v2449
        %v2451 = vpop.xlane.xlu0 %2450
        %v2452 = vsel %vm2050, %v2288, -inf
        %2453 = vmax.xlane.f32.xlu0 %v2452
        %v2454 = vpop.xlane.xlu0 %2453
        %v2455 = vsel %vm2050, %v2364, -inf
        %2456 = vmax.xlane.f32.xlu0 %v2455
        %v2457 = vpop.xlane.xlu0 %2456
        %v2458 = vsel %vm2050, %v2366, -inf
        %2459 = vmax.xlane.f32.xlu0 %v2458
        %v2460 = vpop.xlane.xlu0 %2459
        %v2461 = vsel %vm2050, %v2369, -inf
        %2462 = vmax.xlane.f32.xlu0 %v2461
        %v2463 = vpop.xlane.xlu0 %2462
        %v2464 = vsel %vm2050, %v2371, -inf
        %2465 = vmax.xlane.f32.xlu0 %v2464
        %v2466 = vpop.xlane.xlu0 %2465
        %v2467 = vsel %vm2050, %v2374, -inf
        %2468 = vmax.xlane.f32.xlu0 %v2467
        %v2469 = vpop.xlane.xlu0 %2468
        %v2470 = vsel %vm2050, %v2376, -inf
        %2471 = vmax.xlane.f32.xlu0 %v2470
        %v2472 = vpop.xlane.xlu0 %2471
        %v2473 = vsel %vm2050, %v2379, -inf
        %2474 = vmax.xlane.f32.xlu0 %v2473
        %v2475 = vpop.xlane.xlu0 %2474
        %v2476 = vsel %vm2050, %v2381, -inf
        %2477 = vmax.xlane.f32.xlu0 %v2476
        %v2478 = vpop.xlane.xlu0 %2477
        %v2479 = vsub.f32 %v2085, %v2385
        %v2480 = vsub.f32 %v2087, %v2388
        %v2481 = vsub.f32 %v2090, %v2391
        %v2482 = vsub.f32 %v2092, %v2394
        %v2483 = vsub.f32 %v2095, %v2397
        %v2484 = vsub.f32 %v2097, %v2400
        %v2485 = vsub.f32 %v2100, %v2403
        %v2486 = vsub.f32 %v2102, %v2406
        %v2487 = vsub.f32 %v2178, %v2409
        %v2488 = vsub.f32 %v2180, %v2412
        %v2489 = vsub.f32 %v2183, %v2415
        %v2490 = vsub.f32 %v2185, %v2418
        %v2491 = vsub.f32 %v2188, %v2421
        %v2492 = vsub.f32 %v2190, %v2424
        %v2493 = vsub.f32 %v2193, %v2427
        %v2494 = vsub.f32 %v2195, %v2430
        %v2495 = vsub.f32 %v2271, %v2433
        %v2496 = vsub.f32 %v2273, %v2436
        %v2497 = vsub.f32 %v2276, %v2439
        %v2498 = vsub.f32 %v2278, %v2442
        %v2499 = vsub.f32 %v2281, %v2445
        %v2500 = vsub.f32 %v2283, %v2448
        %v2501 = vsub.f32 %v2286, %v2451
        %v2502 = vsub.f32 %v2288, %v2454
        %v2503 = vsub.f32 %v2364, %v2457
        %v2504 = vsub.f32 %v2366, %v2460
        %v2505 = vsub.f32 %v2369, %v2463
        %v2506 = vsub.f32 %v2371, %v2466
        %v2507 = vsub.f32 %v2374, %v2469
        %v2508 = vsub.f32 %v2376, %v2472
        %v2509 = vsub.f32 %v2379, %v2475
        %v2510 = vsub.f32 %v2381, %v2478
        %v2511 = vmul.f32 %v2479, 1.442695
        %v2512 = vpow.pop %v2511
        %v2513 = vmul.f32 %v2480, 1.442695
        %v2514 = vpow.pop %v2513
        %v2515 = vmul.f32 %v2481, 1.442695
        %v2516 = vpow.pop %v2515
        %v2517 = vmul.f32 %v2482, 1.442695
        %v2518 = vpow.pop %v2517
        %v2519 = vmul.f32 %v2483, 1.442695
        %v2520 = vpow.pop %v2519
        %v2521 = vmul.f32 %v2484, 1.442695
        %v2522 = vpow.pop %v2521
        %v2523 = vmul.f32 %v2485, 1.442695
        %v2524 = vpow.pop %v2523
        %v2525 = vmul.f32 %v2486, 1.442695
        %v2526 = vpow.pop %v2525
        %v2527 = vmul.f32 %v2487, 1.442695
        %v2528 = vpow.pop %v2527
        %v2529 = vmul.f32 %v2488, 1.442695
        %v2530 = vpow.pop %v2529
        %v2531 = vmul.f32 %v2489, 1.442695
        %v2532 = vpow.pop %v2531
        %v2533 = vmul.f32 %v2490, 1.442695
        %v2534 = vpow.pop %v2533
        %v2535 = vmul.f32 %v2491, 1.442695
        %v2536 = vpow.pop %v2535
        %v2537 = vmul.f32 %v2492, 1.442695
        %v2538 = vpow.pop %v2537
        %v2539 = vmul.f32 %v2493, 1.442695
        %v2540 = vpow.pop %v2539
        %v2541 = vmul.f32 %v2494, 1.442695
        %v2542 = vpow.pop %v2541
        %v2543 = vmul.f32 %v2495, 1.442695
        %v2544 = vpow.pop %v2543
        %v2545 = vmul.f32 %v2496, 1.442695
        %v2546 = vpow.pop %v2545
        %v2547 = vmul.f32 %v2497, 1.442695
        %v2548 = vpow.pop %v2547
        %v2549 = vmul.f32 %v2498, 1.442695
        %v2550 = vpow.pop %v2549
        %v2551 = vmul.f32 %v2499, 1.442695
        %v2552 = vpow.pop %v2551
        %v2553 = vmul.f32 %v2500, 1.442695
        %v2554 = vpow.pop %v2553
        %v2555 = vmul.f32 %v2501, 1.442695
        %v2556 = vpow.pop %v2555
        %v2557 = vmul.f32 %v2502, 1.442695
        %v2558 = vpow.pop %v2557
        %v2559 = vmul.f32 %v2503, 1.442695
        %v2560 = vpow.pop %v2559
        %v2561 = vmul.f32 %v2504, 1.442695
        %v2562 = vpow.pop %v2561
        %v2563 = vmul.f32 %v2505, 1.442695
        %v2564 = vpow.pop %v2563
        %v2565 = vmul.f32 %v2506, 1.442695
        %v2566 = vpow.pop %v2565
        %v2567 = vmul.f32 %v2507, 1.442695
        %v2568 = vpow.pop %v2567
        %v2569 = vmul.f32 %v2508, 1.442695
        %v2570 = vpow.pop %v2569
        %v2571 = vmul.f32 %v2509, 1.442695
        %v2572 = vpow.pop %v2571
        %v2573 = vmul.f32 %v2510, 1.442695
        %v2574 = vpow.pop %v2573
        %v2575 = vsel %vm2050, %v2512, 0.0
        %2576 = vadd.xlane.f32.xlu0 %v2575
        %v2577 = vpop.xlane.xlu0 %2576
        %v2578 = vsel %vm2050, %v2514, 0.0
        %2579 = vadd.xlane.f32.xlu0 %v2578
        %v2580 = vpop.xlane.xlu0 %2579
        %v2581 = vsel %vm2050, %v2516, 0.0
        %2582 = vadd.xlane.f32.xlu0 %v2581
        %v2583 = vpop.xlane.xlu0 %2582
        %v2584 = vsel %vm2050, %v2518, 0.0
        %2585 = vadd.xlane.f32.xlu0 %v2584
        %v2586 = vpop.xlane.xlu0 %2585
        %v2587 = vsel %vm2050, %v2520, 0.0
        %2588 = vadd.xlane.f32.xlu0 %v2587
        %v2589 = vpop.xlane.xlu0 %2588
        %v2590 = vsel %vm2050, %v2522, 0.0
        %2591 = vadd.xlane.f32.xlu0 %v2590
        %v2592 = vpop.xlane.xlu0 %2591
        %v2593 = vsel %vm2050, %v2524, 0.0
        %2594 = vadd.xlane.f32.xlu0 %v2593
        %v2595 = vpop.xlane.xlu0 %2594
        %v2596 = vsel %vm2050, %v2526, 0.0
        %2597 = vadd.xlane.f32.xlu0 %v2596
        %v2598 = vpop.xlane.xlu0 %2597
        %v2599 = vsel %vm2050, %v2528, 0.0
        %2600 = vadd.xlane.f32.xlu0 %v2599
        %v2601 = vpop.xlane.xlu0 %2600
        %v2602 = vsel %vm2050, %v2530, 0.0
        %2603 = vadd.xlane.f32.xlu0 %v2602
        %v2604 = vpop.xlane.xlu0 %2603
        %v2605 = vsel %vm2050, %v2532, 0.0
        %2606 = vadd.xlane.f32.xlu0 %v2605
        %v2607 = vpop.xlane.xlu0 %2606
        %v2608 = vsel %vm2050, %v2534, 0.0
        %2609 = vadd.xlane.f32.xlu0 %v2608
        %v2610 = vpop.xlane.xlu0 %2609
        %v2611 = vsel %vm2050, %v2536, 0.0
        %2612 = vadd.xlane.f32.xlu0 %v2611
        %v2613 = vpop.xlane.xlu0 %2612
        %v2614 = vsel %vm2050, %v2538, 0.0
        %2615 = vadd.xlane.f32.xlu0 %v2614
        %v2616 = vpop.xlane.xlu0 %2615
        %v2617 = vsel %vm2050, %v2540, 0.0
        %2618 = vadd.xlane.f32.xlu0 %v2617
        %v2619 = vpop.xlane.xlu0 %2618
        %v2620 = vsel %vm2050, %v2542, 0.0
        %2621 = vadd.xlane.f32.xlu0 %v2620
        %v2622 = vpop.xlane.xlu0 %2621
        %v2623 = vsel %vm2050, %v2544, 0.0
        %2624 = vadd.xlane.f32.xlu0 %v2623
        %v2625 = vpop.xlane.xlu0 %2624
        %v2626 = vsel %vm2050, %v2546, 0.0
        %2627 = vadd.xlane.f32.xlu0 %v2626
        %v2628 = vpop.xlane.xlu0 %2627
        %v2629 = vsel %vm2050, %v2548, 0.0
        %2630 = vadd.xlane.f32.xlu0 %v2629
        %v2631 = vpop.xlane.xlu0 %2630
        %v2632 = vsel %vm2050, %v2550, 0.0
        %2633 = vadd.xlane.f32.xlu0 %v2632
        %v2634 = vpop.xlane.xlu0 %2633
        %v2635 = vsel %vm2050, %v2552, 0.0
        %2636 = vadd.xlane.f32.xlu0 %v2635
        %v2637 = vpop.xlane.xlu0 %2636
        %v2638 = vsel %vm2050, %v2554, 0.0
        %2639 = vadd.xlane.f32.xlu0 %v2638
        %v2640 = vpop.xlane.xlu0 %2639
        %v2641 = vsel %vm2050, %v2556, 0.0
        %2642 = vadd.xlane.f32.xlu0 %v2641
        %v2643 = vpop.xlane.xlu0 %2642
        %v2644 = vsel %vm2050, %v2558, 0.0
        %2645 = vadd.xlane.f32.xlu0 %v2644
        %v2646 = vpop.xlane.xlu0 %2645
        %v2647 = vsel %vm2050, %v2560, 0.0
        %2648 = vadd.xlane.f32.xlu0 %v2647
        %v2649 = vpop.xlane.xlu0 %2648
        %v2650 = vsel %vm2050, %v2562, 0.0
        %2651 = vadd.xlane.f32.xlu0 %v2650
        %v2652 = vpop.xlane.xlu0 %2651
        %v2653 = vsel %vm2050, %v2564, 0.0
        %2654 = vadd.xlane.f32.xlu0 %v2653
        %v2655 = vpop.xlane.xlu0 %2654
        %v2656 = vsel %vm2050, %v2566, 0.0
        %2657 = vadd.xlane.f32.xlu0 %v2656
        %v2658 = vpop.xlane.xlu0 %2657
        %v2659 = vsel %vm2050, %v2568, 0.0
        %2660 = vadd.xlane.f32.xlu0 %v2659
        %v2661 = vpop.xlane.xlu0 %2660
        %v2662 = vsel %vm2050, %v2570, 0.0
        %2663 = vadd.xlane.f32.xlu0 %v2662
        %v2664 = vpop.xlane.xlu0 %2663
        %v2665 = vsel %vm2050, %v2572, 0.0
        %2666 = vadd.xlane.f32.xlu0 %v2665
        %v2667 = vpop.xlane.xlu0 %2666
        %v2668 = vsel %vm2050, %v2574, 0.0
        %2669 = vadd.xlane.f32.xlu0 %v2668
        %v2670 = vpop.xlane.xlu0 %2669
        %v2671 = vrcp.pop %v2577
        %v2672 = vrcp.pop %v2580
        %v2673 = vrcp.pop %v2583
        %v2674 = vrcp.pop %v2586
        %v2675 = vrcp.pop %v2589
        %v2676 = vrcp.pop %v2592
        %v2677 = vrcp.pop %v2595
        %v2678 = vrcp.pop %v2598
        %v2679 = vrcp.pop %v2601
        %v2680 = vrcp.pop %v2604
        %v2681 = vrcp.pop %v2607
        %v2682 = vrcp.pop %v2610
        %v2683 = vrcp.pop %v2613
        %v2684 = vrcp.pop %v2616
        %v2685 = vrcp.pop %v2619
        %v2686 = vrcp.pop %v2622
        %v2687 = vrcp.pop %v2625
        %v2688 = vrcp.pop %v2628
        %v2689 = vrcp.pop %v2631
        %v2690 = vrcp.pop %v2634
        %v2691 = vrcp.pop %v2637
        %v2692 = vrcp.pop %v2640
        %v2693 = vrcp.pop %v2643
        %v2694 = vrcp.pop %v2646
        %v2695 = vrcp.pop %v2649
        %v2696 = vrcp.pop %v2652
        %v2697 = vrcp.pop %v2655
        %v2698 = vrcp.pop %v2658
        %v2699 = vrcp.pop %v2661
        %v2700 = vrcp.pop %v2664
        %v2701 = vrcp.pop %v2667
        %v2702 = vrcp.pop %v2670
        %v2703 = vmul.f32 %v2512, %v2671
        %v2704 = vmul.f32 %v2514, %v2672
        %v2705 = vmul.f32 %v2516, %v2673
        %v2706 = vmul.f32 %v2518, %v2674
        %v2707 = vmul.f32 %v2520, %v2675
        %v2708 = vmul.f32 %v2522, %v2676
        %v2709 = vmul.f32 %v2524, %v2677
        %v2710 = vmul.f32 %v2526, %v2678
        %v2711 = vmul.f32 %v2528, %v2679
        %v2712 = vmul.f32 %v2530, %v2680
        %v2713 = vmul.f32 %v2532, %v2681
        %v2714 = vmul.f32 %v2534, %v2682
        %v2715 = vmul.f32 %v2536, %v2683
        %v2716 = vmul.f32 %v2538, %v2684
        %v2717 = vmul.f32 %v2540, %v2685
        %v2718 = vmul.f32 %v2542, %v2686
        %v2719 = vmul.f32 %v2544, %v2687
        %v2720 = vmul.f32 %v2546, %v2688
        %v2721 = vmul.f32 %v2548, %v2689
        %v2722 = vmul.f32 %v2550, %v2690
        %v2723 = vmul.f32 %v2552, %v2691
        %v2724 = vmul.f32 %v2554, %v2692
        %v2725 = vmul.f32 %v2556, %v2693
        %v2726 = vmul.f32 %v2558, %v2694
        %v2727 = vmul.f32 %v2560, %v2695
        %v2728 = vmul.f32 %v2562, %v2696
        %v2729 = vmul.f32 %v2564, %v2697
        %v2730 = vmul.f32 %v2566, %v2698
        %v2731 = vmul.f32 %v2568, %v2699
        %v2732 = vmul.f32 %v2570, %v2700
        %v2733 = vmul.f32 %v2572, %v2701
        %v2734 = vmul.f32 %v2574, %v2702
        %v2735 = vpack.c.bf16 %v2703, %v2703
        %v2736 = vpack.c.bf16 %v2704, %v2704
        %v2737 = vpack.c.bf16 %v2705, %v2705
        %v2738 = vpack.c.bf16 %v2706, %v2706
        %v2739 = vpack.c.bf16 %v2707, %v2707
        %v2740 = vpack.c.bf16 %v2708, %v2708
        %v2741 = vpack.c.bf16 %v2709, %v2709
        %v2742 = vpack.c.bf16 %v2710, %v2710
        %v2743 = vpack.c.bf16 %v2711, %v2711
        %v2744 = vpack.c.bf16 %v2712, %v2712
        %v2745 = vpack.c.bf16 %v2713, %v2713
        %v2746 = vpack.c.bf16 %v2714, %v2714
        %v2747 = vpack.c.bf16 %v2715, %v2715
        %v2748 = vpack.c.bf16 %v2716, %v2716
        %v2749 = vpack.c.bf16 %v2717, %v2717
        %v2750 = vpack.c.bf16 %v2718, %v2718
        %v2751 = vpack.c.bf16 %v2719, %v2719
        %v2752 = vpack.c.bf16 %v2720, %v2720
        %v2753 = vpack.c.bf16 %v2721, %v2721
        %v2754 = vpack.c.bf16 %v2722, %v2722
        %v2755 = vpack.c.bf16 %v2723, %v2723
        %v2756 = vpack.c.bf16 %v2724, %v2724
        %v2757 = vpack.c.bf16 %v2725, %v2725
        %v2758 = vpack.c.bf16 %v2726, %v2726
        %v2759 = vpack.c.bf16 %v2727, %v2727
        %v2760 = vpack.c.bf16 %v2728, %v2728
        %v2761 = vpack.c.bf16 %v2729, %v2729
        %v2762 = vpack.c.bf16 %v2730, %v2730
        %v2763 = vpack.c.bf16 %v2731, %v2731
        %v2764 = vpack.c.bf16 %v2732, %v2732
        %v2765 = vpack.c.bf16 %v2733, %v2733
        %v2766 = vpack.c.bf16 %v2734, %v2734
        %v2767 = vpack.c.bf16 %v1696, %v1696
        %v2768 = vpack.c.bf16 %v1698, %v1698
        %v2769 = vpack.c.bf16 %v1701, %v1701
        %v2770 = vpack.c.bf16 %v1703, %v1703
        %v2771 = vpack.c.bf16 %v1706, %v1706
        %v2772 = vpack.c.bf16 %v1708, %v1708
        %v2773 = vpack.c.bf16 %v1711, %v1711
        %v2774 = vpack.c.bf16 %v1713, %v1713
        %v2775 = vpack.c.bf16 %v1773, %v1773
        %v2776 = vpack.c.bf16 %v1775, %v1775
        %v2777 = vpack.c.bf16 %v1778, %v1778
        %v2778 = vpack.c.bf16 %v1780, %v1780
        %v2779 = vpack.c.bf16 %v1783, %v1783
        %v2780 = vpack.c.bf16 %v1785, %v1785
        %v2781 = vpack.c.bf16 %v1788, %v1788
        %v2782 = vpack.c.bf16 %v1790, %v1790
        %v2783 = vpack.c.bf16 %v1850, %v1850
        %v2784 = vpack.c.bf16 %v1852, %v1852
        %v2785 = vpack.c.bf16 %v1855, %v1855
        %v2786 = vpack.c.bf16 %v1857, %v1857
        %v2787 = vpack.c.bf16 %v1860, %v1860
        %v2788 = vpack.c.bf16 %v1862, %v1862
        %v2789 = vpack.c.bf16 %v1865, %v1865
        %v2790 = vpack.c.bf16 %v1867, %v1867
        %v2791 = vpack.c.bf16 %v1927, %v1927
        %v2792 = vpack.c.bf16 %v1929, %v1929
        %v2793 = vpack.c.bf16 %v1932, %v1932
        %v2794 = vpack.c.bf16 %v1934, %v1934
        %v2795 = vpack.c.bf16 %v1937, %v1937
        %v2796 = vpack.c.bf16 %v1939, %v1939
        %v2797 = vpack.c.bf16 %v1942, %v1942
        %v2798 = vpack.c.bf16 %v1944, %v1944
        %v2807 = vunpack.c.l.b16 %v2735
        %v2808 = vunpack.c.l.b16 %v2736
        %v2809 = vunpack.c.l.b16 %v2737
        %v2810 = vunpack.c.l.b16 %v2738
        %v2811 = vunpack.c.l.b16 %v2739
        %v2812 = vunpack.c.l.b16 %v2740
        %v2813 = vunpack.c.l.b16 %v2741
        %v2814 = vunpack.c.l.b16 %v2742
        %v2815 = vpack.c.b16 %v2808, %v2807
        %v2816 = vpack.c.b16 %v2810, %v2809
        %v2817 = vpack.c.b16 %v2812, %v2811
        %v2818 = vpack.c.b16 %v2814, %v2813
        %v2827 = vunpack.c.l.b16 %v2767
        %v2828 = vunpack.c.l.b16 %v2768
        %v2829 = vunpack.c.l.b16 %v2769
        %v2830 = vunpack.c.l.b16 %v2770
        %v2831 = vunpack.c.l.b16 %v2771
        %v2832 = vunpack.c.l.b16 %v2772
        %v2833 = vunpack.c.l.b16 %v2773
        %v2834 = vunpack.c.l.b16 %v2774
        %v2835 = vpack.c.b16 %v2828, %v2827
        %v2836 = vpack.c.b16 %v2830, %v2829
        %v2837 = vpack.c.b16 %v2832, %v2831
        %v2838 = vpack.c.b16 %v2834, %v2833
        %v2844 = vsel %vm2050, %v2815, 0
        %v2847 = vsel %vm2050, %v2816, 0
        %v2850 = vsel %vm2050, %v2817, 0
        %v2853 = vsel %vm2050, %v2818, 0
        %2855 = vmatpush.bf16.msra.mxu0 0
        %2856 = vmatpush.bf16.msra.mxu0 0
        %2857 = vmatpush.bf16.msra.mxu0 0
        %2858 = vmatpush.bf16.msra.mxu0 0
        %2859 = vmatpush.bf16.msra.mxu0 %v2838
        %2860 = vmatpush.bf16.msra.mxu0 %v2837
        %2861 = vmatpush.bf16.msra.mxu0 %v2836
        %2862 = vmatpush.bf16.msra.mxu0 %v2835
        %2863 = vmatmul.bf16.gmra.mxu0 %v2844
        %v2864 = vpop.f32.mrf.mxu0
        %v2865 = vadd.f32 0.0, %v2864
        %v2866 = vpop.f32.mrf.mxu0
        %v2867 = vadd.f32 0.0, %v2866
        %2868 = vmatmul.bf16.gmra.mxu0 %v2847
        %v2869 = vpop.f32.mrf.mxu0
        %v2870 = vadd.f32 0.0, %v2869
        %v2871 = vpop.f32.mrf.mxu0
        %v2872 = vadd.f32 0.0, %v2871
        %2873 = vmatmul.bf16.gmra.mxu0 %v2850
        %v2874 = vpop.f32.mrf.mxu0
        %v2875 = vadd.f32 0.0, %v2874
        %v2876 = vpop.f32.mrf.mxu0
        %v2877 = vadd.f32 0.0, %v2876
        %2878 = vmatmul.bf16.gmra.mxu0 %v2853
        %v2879 = vpop.f32.mrf.mxu0
        %v2880 = vadd.f32 0.0, %v2879
        %v2881 = vpop.f32.mrf.mxu0
        %v2882 = vadd.f32 0.0, %v2881
        %2883 = vdwg.mxu0
        %v2892 = vunpack.c.l.b16 %v2743
        %v2893 = vunpack.c.l.b16 %v2744
        %v2894 = vunpack.c.l.b16 %v2745
        %v2895 = vunpack.c.l.b16 %v2746
        %v2896 = vunpack.c.l.b16 %v2747
        %v2897 = vunpack.c.l.b16 %v2748
        %v2898 = vunpack.c.l.b16 %v2749
        %v2899 = vunpack.c.l.b16 %v2750
        %v2900 = vpack.c.b16 %v2893, %v2892
        %v2901 = vpack.c.b16 %v2895, %v2894
        %v2902 = vpack.c.b16 %v2897, %v2896
        %v2903 = vpack.c.b16 %v2899, %v2898
        %v2912 = vunpack.c.l.b16 %v2775
        %v2913 = vunpack.c.l.b16 %v2776
        %v2914 = vunpack.c.l.b16 %v2777
        %v2915 = vunpack.c.l.b16 %v2778
        %v2916 = vunpack.c.l.b16 %v2779
        %v2917 = vunpack.c.l.b16 %v2780
        %v2918 = vunpack.c.l.b16 %v2781
        %v2919 = vunpack.c.l.b16 %v2782
        %v2920 = vpack.c.b16 %v2913, %v2912
        %v2921 = vpack.c.b16 %v2915, %v2914
        %v2922 = vpack.c.b16 %v2917, %v2916
        %v2923 = vpack.c.b16 %v2919, %v2918
        %v2929 = vsel %vm2050, %v2900, 0
        %v2932 = vsel %vm2050, %v2901, 0
        %v2935 = vsel %vm2050, %v2902, 0
        %v2938 = vsel %vm2050, %v2903, 0
        %2940 = vmatpush.bf16.msra.mxu0 0
        %2941 = vmatpush.bf16.msra.mxu0 0
        %2942 = vmatpush.bf16.msra.mxu0 0
        %2943 = vmatpush.bf16.msra.mxu0 0
        %2944 = vmatpush.bf16.msra.mxu0 %v2923
        %2945 = vmatpush.bf16.msra.mxu0 %v2922
        %2946 = vmatpush.bf16.msra.mxu0 %v2921
        %2947 = vmatpush.bf16.msra.mxu0 %v2920
        %2948 = vmatmul.bf16.gmra.mxu0 %v2929
        %v2949 = vpop.f32.mrf.mxu0
        %v2950 = vadd.f32 0.0, %v2949
        %v2951 = vpop.f32.mrf.mxu0
        %v2952 = vadd.f32 0.0, %v2951
        %2953 = vmatmul.bf16.gmra.mxu0 %v2932
        %v2954 = vpop.f32.mrf.mxu0
        %v2955 = vadd.f32 0.0, %v2954
        %v2956 = vpop.f32.mrf.mxu0
        %v2957 = vadd.f32 0.0, %v2956
        %2958 = vmatmul.bf16.gmra.mxu0 %v2935
        %v2959 = vpop.f32.mrf.mxu0
        %v2960 = vadd.f32 0.0, %v2959
        %v2961 = vpop.f32.mrf.mxu0
        %v2962 = vadd.f32 0.0, %v2961
        %2963 = vmatmul.bf16.gmra.mxu0 %v2938
        %v2964 = vpop.f32.mrf.mxu0
        %v2965 = vadd.f32 0.0, %v2964
        %v2966 = vpop.f32.mrf.mxu0
        %v2967 = vadd.f32 0.0, %v2966
        %2968 = vdwg.mxu0
        %v2977 = vunpack.c.l.b16 %v2751
        %v2978 = vunpack.c.l.b16 %v2752
        %v2979 = vunpack.c.l.b16 %v2753
        %v2980 = vunpack.c.l.b16 %v2754
        %v2981 = vunpack.c.l.b16 %v2755
        %v2982 = vunpack.c.l.b16 %v2756
        %v2983 = vunpack.c.l.b16 %v2757
        %v2984 = vunpack.c.l.b16 %v2758
        %v2985 = vpack.c.b16 %v2978, %v2977
        %v2986 = vpack.c.b16 %v2980, %v2979
        %v2987 = vpack.c.b16 %v2982, %v2981
        %v2988 = vpack.c.b16 %v2984, %v2983
        %v2997 = vunpack.c.l.b16 %v2783
        %v2998 = vunpack.c.l.b16 %v2784
        %v2999 = vunpack.c.l.b16 %v2785
        %v3000 = vunpack.c.l.b16 %v2786
        %v3001 = vunpack.c.l.b16 %v2787
        %v3002 = vunpack.c.l.b16 %v2788
        %v3003 = vunpack.c.l.b16 %v2789
        %v3004 = vunpack.c.l.b16 %v2790
        %v3005 = vpack.c.b16 %v2998, %v2997
        %v3006 = vpack.c.b16 %v3000, %v2999
        %v3007 = vpack.c.b16 %v3002, %v3001
        %v3008 = vpack.c.b16 %v3004, %v3003
        %v3014 = vsel %vm2050, %v2985, 0
        %v3017 = vsel %vm2050, %v2986, 0
        %v3020 = vsel %vm2050, %v2987, 0
        %v3023 = vsel %vm2050, %v2988, 0
        %3025 = vmatpush.bf16.msra.mxu0 0
        %3026 = vmatpush.bf16.msra.mxu0 0
        %3027 = vmatpush.bf16.msra.mxu0 0
        %3028 = vmatpush.bf16.msra.mxu0 0
        %3029 = vmatpush.bf16.msra.mxu0 %v3008
        %3030 = vmatpush.bf16.msra.mxu0 %v3007
        %3031 = vmatpush.bf16.msra.mxu0 %v3006
        %3032 = vmatpush.bf16.msra.mxu0 %v3005
        %3033 = vmatmul.bf16.gmra.mxu0 %v3014
        %v3034 = vpop.f32.mrf.mxu0
        %v3035 = vadd.f32 0.0, %v3034
        %v3036 = vpop.f32.mrf.mxu0
        %v3037 = vadd.f32 0.0, %v3036
        %3038 = vmatmul.bf16.gmra.mxu0 %v3017
        %v3039 = vpop.f32.mrf.mxu0
        %v3040 = vadd.f32 0.0, %v3039
        %v3041 = vpop.f32.mrf.mxu0
        %v3042 = vadd.f32 0.0, %v3041
        %3043 = vmatmul.bf16.gmra.mxu0 %v3020
        %v3044 = vpop.f32.mrf.mxu0
        %v3045 = vadd.f32 0.0, %v3044
        %v3046 = vpop.f32.mrf.mxu0
        %v3047 = vadd.f32 0.0, %v3046
        %3048 = vmatmul.bf16.gmra.mxu0 %v3023
        %v3049 = vpop.f32.mrf.mxu0
        %v3050 = vadd.f32 0.0, %v3049
        %v3051 = vpop.f32.mrf.mxu0
        %v3052 = vadd.f32 0.0, %v3051
        %3053 = vdwg.mxu0
        %v3062 = vunpack.c.l.b16 %v2759
        %v3063 = vunpack.c.l.b16 %v2760
        %v3064 = vunpack.c.l.b16 %v2761
        %v3065 = vunpack.c.l.b16 %v2762
        %v3066 = vunpack.c.l.b16 %v2763
        %v3067 = vunpack.c.l.b16 %v2764
        %v3068 = vunpack.c.l.b16 %v2765
        %v3069 = vunpack.c.l.b16 %v2766
        %v3070 = vpack.c.b16 %v3063, %v3062
        %v3071 = vpack.c.b16 %v3065, %v3064
        %v3072 = vpack.c.b16 %v3067, %v3066
        %v3073 = vpack.c.b16 %v3069, %v3068
        %v3082 = vunpack.c.l.b16 %v2791
        %v3083 = vunpack.c.l.b16 %v2792
        %v3084 = vunpack.c.l.b16 %v2793
        %v3085 = vunpack.c.l.b16 %v2794
        %v3086 = vunpack.c.l.b16 %v2795
        %v3087 = vunpack.c.l.b16 %v2796
        %v3088 = vunpack.c.l.b16 %v2797
        %v3089 = vunpack.c.l.b16 %v2798
        %v3090 = vpack.c.b16 %v3083, %v3082
        %v3091 = vpack.c.b16 %v3085, %v3084
        %v3092 = vpack.c.b16 %v3087, %v3086
        %v3093 = vpack.c.b16 %v3089, %v3088
        %v3099 = vsel %vm2050, %v3070, 0
        %v3102 = vsel %vm2050, %v3071, 0
        %v3105 = vsel %vm2050, %v3072, 0
        %v3108 = vsel %vm2050, %v3073, 0
        %3110 = vmatpush.bf16.msra.mxu0 0
        %3111 = vmatpush.bf16.msra.mxu0 0
        %3112 = vmatpush.bf16.msra.mxu0 0
        %3113 = vmatpush.bf16.msra.mxu0 0
        %3114 = vmatpush.bf16.msra.mxu0 %v3093
        %3115 = vmatpush.bf16.msra.mxu0 %v3092
        %3116 = vmatpush.bf16.msra.mxu0 %v3091
        %3117 = vmatpush.bf16.msra.mxu0 %v3090
        %3118 = vmatmul.bf16.gmra.mxu0 %v3099
        %v3119 = vpop.f32.mrf.mxu0
        %v3120 = vadd.f32 0.0, %v3119
        %v3121 = vpop.f32.mrf.mxu0
        %v3122 = vadd.f32 0.0, %v3121
        %3123 = vmatmul.bf16.gmra.mxu0 %v3102
        %v3124 = vpop.f32.mrf.mxu0
        %v3125 = vadd.f32 0.0, %v3124
        %v3126 = vpop.f32.mrf.mxu0
        %v3127 = vadd.f32 0.0, %v3126
        %3128 = vmatmul.bf16.gmra.mxu0 %v3105
        %v3129 = vpop.f32.mrf.mxu0
        %v3130 = vadd.f32 0.0, %v3129
        %v3131 = vpop.f32.mrf.mxu0
        %v3132 = vadd.f32 0.0, %v3131
        %3133 = vmatmul.bf16.gmra.mxu0 %v3108
        %v3134 = vpop.f32.mrf.mxu0
        %v3135 = vadd.f32 0.0, %v3134
        %v3136 = vpop.f32.mrf.mxu0
        %v3137 = vadd.f32 0.0, %v3136
        %3138 = vdwg.mxu0
        %v3139 = vpack.c.bf16 %v2865, %v2865
        %v3140 = vpack.c.bf16 %v2867, %v2867
        %v3141 = vpack.c.bf16 %v2870, %v2870
        %v3142 = vpack.c.bf16 %v2872, %v2872
        %v3143 = vpack.c.bf16 %v2875, %v2875
        %v3144 = vpack.c.bf16 %v2877, %v2877
        %v3145 = vpack.c.bf16 %v2880, %v2880
        %v3146 = vpack.c.bf16 %v2882, %v2882
        %v3147 = vpack.c.bf16 %v2950, %v2950
        %v3148 = vpack.c.bf16 %v2952, %v2952
        %v3149 = vpack.c.bf16 %v2955, %v2955
        %v3150 = vpack.c.bf16 %v2957, %v2957
        %v3151 = vpack.c.bf16 %v2960, %v2960
        %v3152 = vpack.c.bf16 %v2962, %v2962
        %v3153 = vpack.c.bf16 %v2965, %v2965
        %v3154 = vpack.c.bf16 %v2967, %v2967
        %v3155 = vpack.c.bf16 %v3035, %v3035
        %v3156 = vpack.c.bf16 %v3037, %v3037
        %v3157 = vpack.c.bf16 %v3040, %v3040
        %v3158 = vpack.c.bf16 %v3042, %v3042
        %v3159 = vpack.c.bf16 %v3045, %v3045
        %v3160 = vpack.c.bf16 %v3047, %v3047
        %v3161 = vpack.c.bf16 %v3050, %v3050
        %v3162 = vpack.c.bf16 %v3052, %v3052
        %v3163 = vpack.c.bf16 %v3120, %v3120
        %v3164 = vpack.c.bf16 %v3122, %v3122
        %v3165 = vpack.c.bf16 %v3125, %v3125
        %v3166 = vpack.c.bf16 %v3127, %v3127
        %v3167 = vpack.c.bf16 %v3130, %v3130
        %v3168 = vpack.c.bf16 %v3132, %v3132
        %v3169 = vpack.c.bf16 %v3135, %v3135
        %v3170 = vpack.c.bf16 %v3137, %v3137
        %v3171 = vld [vmem:[%s7] sm:$0xf]
        %v3172 = vld [vmem:[%s7 + $0x4] sm:$0xf]
        %v3173 = vld [vmem:[%s7 + $0x8] sm:$0xf]
        %v3174 = vld [vmem:[%s7 + $0xc] sm:$0xf]
        %v3175 = vld [vmem:[%s7 + $0x10] sm:$0xf]
        %v3176 = vld [vmem:[%s7 + $0x14] sm:$0xf]
        %v3177 = vld [vmem:[%s7 + $0x18] sm:$0xf]
        %v3178 = vld [vmem:[%s7 + $0x1c] sm:$0xf]
        %v3179 = vld [vmem:[%s7 + $0x20] sm:$0xf]
        %v3180 = vld [vmem:[%s7 + $0x24] sm:$0xf]
        %v3181 = vld [vmem:[%s7 + $0x28] sm:$0xf]
        %v3182 = vld [vmem:[%s7 + $0x2c] sm:$0xf]
        %v3183 = vld [vmem:[%s7 + $0x30] sm:$0xf]
        %v3184 = vld [vmem:[%s7 + $0x34] sm:$0xf]
        %v3185 = vld [vmem:[%s7 + $0x38] sm:$0xf]
        %v3186 = vld [vmem:[%s7 + $0x3c] sm:$0xf]
        %v3187 = vld [vmem:[%s7 + $0x40] sm:$0xf]
        %v3188 = vld [vmem:[%s7 + $0x44] sm:$0xf]
        %v3189 = vld [vmem:[%s7 + $0x48] sm:$0xf]
        %v3190 = vld [vmem:[%s7 + $0x4c] sm:$0xf]
        %v3191 = vld [vmem:[%s7 + $0x50] sm:$0xf]
        %v3192 = vld [vmem:[%s7 + $0x54] sm:$0xf]
        %v3193 = vld [vmem:[%s7 + $0x58] sm:$0xf]
        %v3194 = vld [vmem:[%s7 + $0x5c] sm:$0xf]
        %v3195 = vld [vmem:[%s7 + $0x60] sm:$0xf]
        %v3196 = vld [vmem:[%s7 + $0x64] sm:$0xf]
        %v3197 = vld [vmem:[%s7 + $0x68] sm:$0xf]
        %v3198 = vld [vmem:[%s7 + $0x6c] sm:$0xf]
        %v3199 = vld [vmem:[%s7 + $0x70] sm:$0xf]
        %v3200 = vld [vmem:[%s7 + $0x74] sm:$0xf]
        %v3201 = vld [vmem:[%s7 + $0x78] sm:$0xf]
        %v3202 = vld [vmem:[%s7 + $0x7c] sm:$0xf]
        %v3211 = vunpack.c.l.b16 %v3139
        %v3212 = vunpack.c.l.b16 %v3140
        %v3213 = vunpack.c.l.b16 %v3141
        %v3214 = vunpack.c.l.b16 %v3142
        %v3215 = vunpack.c.l.b16 %v3143
        %v3216 = vunpack.c.l.b16 %v3144
        %v3217 = vunpack.c.l.b16 %v3145
        %v3218 = vunpack.c.l.b16 %v3146
        %v3219 = vpack.c.b16 %v3212, %v3211
        %v3220 = vpack.c.b16 %v3214, %v3213
        %v3221 = vpack.c.b16 %v3216, %v3215
        %v3222 = vpack.c.b16 %v3218, %v3217
        %v3231 = vunpack.c.l.b16 %v3171
        %v3232 = vunpack.c.l.b16 %v3172
        %v3233 = vunpack.c.l.b16 %v3173
        %v3234 = vunpack.c.l.b16 %v3174
        %v3235 = vunpack.c.l.b16 %v3175
        %v3236 = vunpack.c.l.b16 %v3176
        %v3237 = vunpack.c.l.b16 %v3177
        %v3238 = vunpack.c.l.b16 %v3178
        %v3239 = vpack.c.b16 %v3232, %v3231
        %v3240 = vpack.c.b16 %v3234, %v3233
        %v3241 = vpack.c.b16 %v3236, %v3235
        %v3242 = vpack.c.b16 %v3238, %v3237
        %v3248 = vsel %vm2050, %v3219, 0
        %v3251 = vsel %vm2050, %v3220, 0
        %v3254 = vsel %vm2050, %v3221, 0
        %v3257 = vsel %vm2050, %v3222, 0
        %3259 = vmatpush.bf16.msra.mxu0 0
        %3260 = vmatpush.bf16.msra.mxu0 0
        %3261 = vmatpush.bf16.msra.mxu0 0
        %3262 = vmatpush.bf16.msra.mxu0 0
        %3263 = vmatpush.bf16.msra.mxu0 %v3242
        %3264 = vmatpush.bf16.msra.mxu0 %v3241
        %3265 = vmatpush.bf16.msra.mxu0 %v3240
        %3266 = vmatpush.bf16.msra.mxu0 %v3239
        %3267 = vmatmul.bf16.gmra.mxu0 %v3248
        %v3268 = vpop.f32.mrf.mxu0
        %v3269 = vadd.f32 0.0, %v3268
        %v3270 = vpop.f32.mrf.mxu0
        %v3271 = vadd.f32 0.0, %v3270
        %3272 = vmatmul.bf16.gmra.mxu0 %v3251
        %v3273 = vpop.f32.mrf.mxu0
        %v3274 = vadd.f32 0.0, %v3273
        %v3275 = vpop.f32.mrf.mxu0
        %v3276 = vadd.f32 0.0, %v3275
        %3277 = vmatmul.bf16.gmra.mxu0 %v3254
        %v3278 = vpop.f32.mrf.mxu0
        %v3279 = vadd.f32 0.0, %v3278
        %v3280 = vpop.f32.mrf.mxu0
        %v3281 = vadd.f32 0.0, %v3280
        %3282 = vmatmul.bf16.gmra.mxu0 %v3257
        %v3283 = vpop.f32.mrf.mxu0
        %v3284 = vadd.f32 0.0, %v3283
        %v3285 = vpop.f32.mrf.mxu0
        %v3286 = vadd.f32 0.0, %v3285
        %3287 = vdwg.mxu0
        %v3296 = vunpack.c.l.b16 %v3147
        %v3297 = vunpack.c.l.b16 %v3148
        %v3298 = vunpack.c.l.b16 %v3149
        %v3299 = vunpack.c.l.b16 %v3150
        %v3300 = vunpack.c.l.b16 %v3151
        %v3301 = vunpack.c.l.b16 %v3152
        %v3302 = vunpack.c.l.b16 %v3153
        %v3303 = vunpack.c.l.b16 %v3154
        %v3304 = vpack.c.b16 %v3297, %v3296
        %v3305 = vpack.c.b16 %v3299, %v3298
        %v3306 = vpack.c.b16 %v3301, %v3300
        %v3307 = vpack.c.b16 %v3303, %v3302
        %v3316 = vunpack.c.l.b16 %v3179
        %v3317 = vunpack.c.l.b16 %v3180
        %v3318 = vunpack.c.l.b16 %v3181
        %v3319 = vunpack.c.l.b16 %v3182
        %v3320 = vunpack.c.l.b16 %v3183
        %v3321 = vunpack.c.l.b16 %v3184
        %v3322 = vunpack.c.l.b16 %v3185
        %v3323 = vunpack.c.l.b16 %v3186
        %v3324 = vpack.c.b16 %v3317, %v3316
        %v3325 = vpack.c.b16 %v3319, %v3318
        %v3326 = vpack.c.b16 %v3321, %v3320
        %v3327 = vpack.c.b16 %v3323, %v3322
        %v3333 = vsel %vm2050, %v3304, 0
        %v3336 = vsel %vm2050, %v3305, 0
        %v3339 = vsel %vm2050, %v3306, 0
        %v3342 = vsel %vm2050, %v3307, 0
        %3344 = vmatpush.bf16.msra.mxu0 0
        %3345 = vmatpush.bf16.msra.mxu0 0
        %3346 = vmatpush.bf16.msra.mxu0 0
        %3347 = vmatpush.bf16.msra.mxu0 0
        %3348 = vmatpush.bf16.msra.mxu0 %v3327
        %3349 = vmatpush.bf16.msra.mxu0 %v3326
        %3350 = vmatpush.bf16.msra.mxu0 %v3325
        %3351 = vmatpush.bf16.msra.mxu0 %v3324
        %3352 = vmatmul.bf16.gmra.mxu0 %v3333
        %v3353 = vpop.f32.mrf.mxu0
        %v3354 = vadd.f32 0.0, %v3353
        %v3355 = vpop.f32.mrf.mxu0
        %v3356 = vadd.f32 0.0, %v3355
        %3357 = vmatmul.bf16.gmra.mxu0 %v3336
        %v3358 = vpop.f32.mrf.mxu0
        %v3359 = vadd.f32 0.0, %v3358
        %v3360 = vpop.f32.mrf.mxu0
        %v3361 = vadd.f32 0.0, %v3360
        %3362 = vmatmul.bf16.gmra.mxu0 %v3339
        %v3363 = vpop.f32.mrf.mxu0
        %v3364 = vadd.f32 0.0, %v3363
        %v3365 = vpop.f32.mrf.mxu0
        %v3366 = vadd.f32 0.0, %v3365
        %3367 = vmatmul.bf16.gmra.mxu0 %v3342
        %v3368 = vpop.f32.mrf.mxu0
        %v3369 = vadd.f32 0.0, %v3368
        %v3370 = vpop.f32.mrf.mxu0
        %v3371 = vadd.f32 0.0, %v3370
        %3372 = vdwg.mxu0
        %v3381 = vunpack.c.l.b16 %v3155
        %v3382 = vunpack.c.l.b16 %v3156
        %v3383 = vunpack.c.l.b16 %v3157
        %v3384 = vunpack.c.l.b16 %v3158
        %v3385 = vunpack.c.l.b16 %v3159
        %v3386 = vunpack.c.l.b16 %v3160
        %v3387 = vunpack.c.l.b16 %v3161
        %v3388 = vunpack.c.l.b16 %v3162
        %v3389 = vpack.c.b16 %v3382, %v3381
        %v3390 = vpack.c.b16 %v3384, %v3383
        %v3391 = vpack.c.b16 %v3386, %v3385
        %v3392 = vpack.c.b16 %v3388, %v3387
        %v3401 = vunpack.c.l.b16 %v3187
        %v3402 = vunpack.c.l.b16 %v3188
        %v3403 = vunpack.c.l.b16 %v3189
        %v3404 = vunpack.c.l.b16 %v3190
        %v3405 = vunpack.c.l.b16 %v3191
        %v3406 = vunpack.c.l.b16 %v3192
        %v3407 = vunpack.c.l.b16 %v3193
        %v3408 = vunpack.c.l.b16 %v3194
        %v3409 = vpack.c.b16 %v3402, %v3401
        %v3410 = vpack.c.b16 %v3404, %v3403
        %v3411 = vpack.c.b16 %v3406, %v3405
        %v3412 = vpack.c.b16 %v3408, %v3407
        %v3418 = vsel %vm2050, %v3389, 0
        %v3421 = vsel %vm2050, %v3390, 0
        %v3424 = vsel %vm2050, %v3391, 0
        %v3427 = vsel %vm2050, %v3392, 0
        %3429 = vmatpush.bf16.msra.mxu0 0
        %3430 = vmatpush.bf16.msra.mxu0 0
        %3431 = vmatpush.bf16.msra.mxu0 0
        %3432 = vmatpush.bf16.msra.mxu0 0
        %3433 = vmatpush.bf16.msra.mxu0 %v3412
        %3434 = vmatpush.bf16.msra.mxu0 %v3411
        %3435 = vmatpush.bf16.msra.mxu0 %v3410
        %3436 = vmatpush.bf16.msra.mxu0 %v3409
        %3437 = vmatmul.bf16.gmra.mxu0 %v3418
        %v3438 = vpop.f32.mrf.mxu0
        %v3439 = vadd.f32 0.0, %v3438
        %v3440 = vpop.f32.mrf.mxu0
        %v3441 = vadd.f32 0.0, %v3440
        %3442 = vmatmul.bf16.gmra.mxu0 %v3421
        %v3443 = vpop.f32.mrf.mxu0
        %v3444 = vadd.f32 0.0, %v3443
        %v3445 = vpop.f32.mrf.mxu0
        %v3446 = vadd.f32 0.0, %v3445
        %3447 = vmatmul.bf16.gmra.mxu0 %v3424
        %v3448 = vpop.f32.mrf.mxu0
        %v3449 = vadd.f32 0.0, %v3448
        %v3450 = vpop.f32.mrf.mxu0
        %v3451 = vadd.f32 0.0, %v3450
        %3452 = vmatmul.bf16.gmra.mxu0 %v3427
        %v3453 = vpop.f32.mrf.mxu0
        %v3454 = vadd.f32 0.0, %v3453
        %v3455 = vpop.f32.mrf.mxu0
        %v3456 = vadd.f32 0.0, %v3455
        %3457 = vdwg.mxu0
        %v3466 = vunpack.c.l.b16 %v3163
        %v3467 = vunpack.c.l.b16 %v3164
        %v3468 = vunpack.c.l.b16 %v3165
        %v3469 = vunpack.c.l.b16 %v3166
        %v3470 = vunpack.c.l.b16 %v3167
        %v3471 = vunpack.c.l.b16 %v3168
        %v3472 = vunpack.c.l.b16 %v3169
        %v3473 = vunpack.c.l.b16 %v3170
        %v3474 = vpack.c.b16 %v3467, %v3466
        %v3475 = vpack.c.b16 %v3469, %v3468
        %v3476 = vpack.c.b16 %v3471, %v3470
        %v3477 = vpack.c.b16 %v3473, %v3472
        %v3486 = vunpack.c.l.b16 %v3195
        %v3487 = vunpack.c.l.b16 %v3196
        %v3488 = vunpack.c.l.b16 %v3197
        %v3489 = vunpack.c.l.b16 %v3198
        %v3490 = vunpack.c.l.b16 %v3199
        %v3491 = vunpack.c.l.b16 %v3200
        %v3492 = vunpack.c.l.b16 %v3201
        %v3493 = vunpack.c.l.b16 %v3202
        %v3494 = vpack.c.b16 %v3487, %v3486
        %v3495 = vpack.c.b16 %v3489, %v3488
        %v3496 = vpack.c.b16 %v3491, %v3490
        %v3497 = vpack.c.b16 %v3493, %v3492
        %v3503 = vsel %vm2050, %v3474, 0
        %v3506 = vsel %vm2050, %v3475, 0
        %v3509 = vsel %vm2050, %v3476, 0
        %v3512 = vsel %vm2050, %v3477, 0
        %3514 = vmatpush.bf16.msra.mxu0 0
        %3515 = vmatpush.bf16.msra.mxu0 0
        %3516 = vmatpush.bf16.msra.mxu0 0
        %3517 = vmatpush.bf16.msra.mxu0 0
        %3518 = vmatpush.bf16.msra.mxu0 %v3497
        %3519 = vmatpush.bf16.msra.mxu0 %v3496
        %3520 = vmatpush.bf16.msra.mxu0 %v3495
        %3521 = vmatpush.bf16.msra.mxu0 %v3494
        %3522 = vmatmul.bf16.gmra.mxu0 %v3503
        %v3523 = vpop.f32.mrf.mxu0
        %v3524 = vadd.f32 0.0, %v3523
        %v3525 = vpop.f32.mrf.mxu0
        %v3526 = vadd.f32 0.0, %v3525
        %3527 = vmatmul.bf16.gmra.mxu0 %v3506
        %v3528 = vpop.f32.mrf.mxu0
        %v3529 = vadd.f32 0.0, %v3528
        %v3530 = vpop.f32.mrf.mxu0
        %v3531 = vadd.f32 0.0, %v3530
        %3532 = vmatmul.bf16.gmra.mxu0 %v3509
        %v3533 = vpop.f32.mrf.mxu0
        %v3534 = vadd.f32 0.0, %v3533
        %v3535 = vpop.f32.mrf.mxu0
        %v3536 = vadd.f32 0.0, %v3535
        %3537 = vmatmul.bf16.gmra.mxu0 %v3512
        %v3538 = vpop.f32.mrf.mxu0
        %v3539 = vadd.f32 0.0, %v3538
        %v3540 = vpop.f32.mrf.mxu0
        %v3541 = vadd.f32 0.0, %v3540
        %3542 = vdwg.mxu0
        %v3543 = vadd.f32 %v3269, %v3354
        %v3544 = vadd.f32 %v3543, %v3439
        %v3545 = vadd.f32 %v3544, %v3524
        %v3546 = vadd.f32 %v3271, %v3356
        %v3547 = vadd.f32 %v3546, %v3441
        %v3548 = vadd.f32 %v3547, %v3526
        %v3549 = vadd.f32 %v3274, %v3359
        %v3550 = vadd.f32 %v3549, %v3444
        %v3551 = vadd.f32 %v3550, %v3529
        %v3552 = vadd.f32 %v3276, %v3361
        %v3553 = vadd.f32 %v3552, %v3446
        %v3554 = vadd.f32 %v3553, %v3531
        %v3555 = vadd.f32 %v3279, %v3364
        %v3556 = vadd.f32 %v3555, %v3449
        %v3557 = vadd.f32 %v3556, %v3534
        %v3558 = vadd.f32 %v3281, %v3366
        %v3559 = vadd.f32 %v3558, %v3451
        %v3560 = vadd.f32 %v3559, %v3536
        %v3561 = vadd.f32 %v3284, %v3369
        %v3562 = vadd.f32 %v3561, %v3454
        %v3563 = vadd.f32 %v3562, %v3539
        %v3564 = vadd.f32 %v3286, %v3371
        %v3565 = vadd.f32 %v3564, %v3456
        %v3566 = vadd.f32 %v3565, %v3541
        %v3567 = vld [vmem:[%s8] sm:$0x1]
        %v3569 = vperm.slane %v3567, 0
        %v3571 = vadd.f32 %v3545, %v3569
        %v3572 = vadd.f32 %v3548, %v3569
        %v3573 = vadd.f32 %v3551, %v3569
        %v3574 = vadd.f32 %v3554, %v3569
        %v3575 = vadd.f32 %v3557, %v3569
        %v3576 = vadd.f32 %v3560, %v3569
        %v3577 = vadd.f32 %v3563, %v3569
        %v3578 = vadd.f32 %v3566, %v3569
        %3579 = vst [vmem:[%s365] sm:$0xff] %v3571
        %3580 = vst [vmem:[%s365 + $0x8] sm:$0xff] %v3572
        %3581 = vst [vmem:[%s365 + $0x10] sm:$0xff] %v3573
        %3582 = vst [vmem:[%s365 + $0x18] sm:$0xff] %v3574
        %3583 = vst [vmem:[%s365 + $0x20] sm:$0xff] %v3575
        %3584 = vst [vmem:[%s365 + $0x28] sm:$0xff] %v3576
        %3585 = vst [vmem:[%s365 + $0x30] sm:$0xff] %v3577
        %3586 = vst [vmem:[%s365 + $0x38] sm:$0xff] %v3578
        %s3587 = sand.u32 %s246, 1
        %s3588 = scalar_lea.sflag [#allocation3], %s3587
        %s3589 = sand.u32 %s246, 1
        %s3590 = smul.addr %s3589, 64
        %s3591 = scalar_lea.vmem [#allocation2], %s3590
        // Predicated region
        $region57: #{tpu_custom_call.1} parent=55 // pred_check
          %p3592 = pneg %p256
        $region58: #{tpu_custom_call.1} parent=55 // pred_check_branch
          %3594 = sbr.rel (%p3592) target = $region60
        $region59: #{tpu_custom_call.1} parent=55 // pred_region
          %s3595 = smul.u32 8, %s28
          %3597 = vsyncadd %s3588, 0
          %s3598 = smul.addr %s27, 8
          %s3599 = sadd.s32 %s3595, %s3598
          %s3600 = smul.addr %s3599, 8
          %s3601 = scalar_lea.hbm %s9, %s3600
          %s3602 = sshll.u32 %s3591, 4
          %s3603 = int_to_ptr.vmem [resolvable:$true] %s3602
          %s3604 = sshll.u32 %s3601, 4
          %s3605 = int_to_ptr.hbm [resolvable:$true] %s3604
          %3610 = dma.vmem_to_hbm [thread:$0]  %s3603, 1024, %s3605, %s3588, 128, 128, 8
        $region60: #{tpu_custom_call.1} parent=55 // pred_fallthru
          _
      $region56: #{tpu_custom_call.1} parent=5 // pred_fallthru
        _
      %p3611 = scmp.le.s32.totalorder 2, %s18
      // Predicated region
      $region61: #{tpu_custom_call.1} parent=5 // pred_check
        %p3612 = pneg %p3611
      $region62: #{tpu_custom_call.1} parent=5 // pred_check_branch
        %3614 = sbr.rel (%p3612) target = $region64
      $region63: #{tpu_custom_call.1} parent=5 // pred_region
        %s3615 = ssub.s32 %s18, 2
        // Predicated region
        $region65: #{tpu_custom_call.1} parent=63 // pred_check
          %p3616 = pneg %p262
        $region66: #{tpu_custom_call.1} parent=63 // pred_check_branch
          %3618 = sbr.rel (%p3616) target = $region68
        $region67: #{tpu_custom_call.1} parent=63 // pred_region
          %s3619 = sand.u32 %s247, 1
          %s3620 = scalar_lea.sflag [#allocation3], %s3619
          %s3621 = sand.u32 %s247, 1
          %s3622 = smul.addr %s3621, 64
          %s3623 = scalar_lea.vmem [#allocation2], %s3622
          %3625 = dma.done %s3620, 1024
        $region68: #{tpu_custom_call.1} parent=63 // pred_fallthru
          _
      $region64: #{tpu_custom_call.1} parent=5 // pred_fallthru
        _
    $region6: #{tpu_custom_call.1} parent=1 // loop_footer
      %s22 = sadd.s32 1, %s18
    $region7: #{tpu_custom_call.1} parent=1 // loop_footer_branch
      %17 = sbr.rel target = $region3
    $region8: #{tpu_custom_call.1} parent=1 // loop_exit
      _
    %3626 = vsyncpa [#allocation3], 1
    %s3627 = scalar_lea.sflag [#allocation3], 1
    %3628 = vsyncpa %s3627, 1

</llo_original>
